<compile_context>
chip_gen: v7x
topology: tpu7x:2x2x1
jax: 0.10.0
libtpu: 0.0.40
codegen_flags: <defaults>
</compile_context>

<pallas_src>
import functools
import math

import jax
import jax.numpy as jnp
from jax.experimental import pallas as pl
from jax.experimental.pallas import tpu as pltpu

# ----------------------- model hyper-parameters (small ViT) ----------------------------
B, C, H, W = 2, 4, 16, 16          # input images, NCHW like PyTorch
PATCH = 4                          # patch size -> 4x4 = 16 patches
NP = (H // PATCH) * (W // PATCH)   # 16 patches
SEQ = NP + 1                       # +1 cls token -> 17
SP = 24                            # padded sequence length (multiple of 8 sublanes)
D = 32                             # embed dim
NH = 2                             # heads
HD = D // NH                       # head dim 16
MLP = 64                           # mlp hidden
DEPTH = 2                          # transformer blocks
NUM_CLASSES = 10
HEAD_PAD = 128                     # lane-dense padded classification-head width
CPP = C * PATCH * PATCH            # flattened patch length (conv K axis) = 64

EXTRACTED_LAYERS = ["blocks.0.norm2", "blocks.1.norm1"]  # layers whose *inputs* we hook

# ------------------------- packed-operand row-offset constants -------------------------
# `emb` blob rows (last dim D):
_E_PATCH = 0                    # [0, CPP)        : patch-embedding weight [CPP, D]
_E_POS = CPP                    # [CPP, CPP+SP)   : fused cls/pos/patch-bias rows [SP, D]
_E_LNFG = CPP + SP              # final LN gamma
_E_LNFB = CPP + SP + 1          # final LN beta
_E_ROWS = CPP + SP + 2          # 90

# `l32` per-layer blob rows (last dim D):
_R_PROJ = 0                     # [0, D)          : attention out-proj weight [D, D]
_R_FC2 = D                      # [D, D+MLP)      : mlp fc2 weight [MLP, D]
_R_LN1G = D + MLP               # single rows
_R_LN1B = D + MLP + 1
_R_LN2G = D + MLP + 2
_R_LN2B = D + MLP + 3
_R_PROJB = D + MLP + 4
_R_FC2B = D + MLP + 5
_R_ROWS = D + MLP + 6           # 102


# ----------------------------------- fused Pallas kernel -------------------------------
def _vit_fused_kernel(xp_ref, emb_ref, qkv_ref, l32_ref, m64_ref, head_ref,
                      hooks_ref, logits_ref, *, eps, scale):
    """Whole ViT forward for one batch element (grid axis = batch).

    Token layout (rows of the [SP, D] residual stream):
      row 0 = cls token, rows 1..NP = patch tokens, rows NP+1..SP-1 = padding.
    Padding rows start at zero but become non-zero after the first block (LN of a zero row
    returns the LN bias).  They never influence real tokens: padded key columns are masked
    out of every softmax, LN/MLP/residual are per-token, and the wrapper discards them.
    """

    def ln(x, g, b):
        mu = jnp.mean(x, axis=-1, keepdims=True)
        var = jnp.mean(jnp.square(x - mu), axis=-1, keepdims=True)
        return (x - mu) * jax.lax.rsqrt(var + eps) * g + b

    # Patch embedding; cls token, positional embedding and patch bias are pre-folded into
    # the `emb` blob rows on the host.
    h = jnp.dot(xp_ref[0], emb_ref[_E_PATCH:_E_PATCH + CPP, :],
                preferred_element_type=jnp.float32) + emb_ref[_E_POS:_E_POS + SP, :]

    # Key-validity mask (same for every layer/head) — hoisted once.
    kmask = jax.lax.broadcasted_iota(jnp.int32, (SP, SP), 1) < SEQ

    for li in range(DEPTH):
        hooks_ref[2 * li, 0] = h                       # hook: input of blocks.{li}.norm1

        # --- attention sub-block (per-head weight slabs, projection-side accumulation) ---
        hn = ln(h, l32_ref[li, _R_LN1G, :], l32_ref[li, _R_LN1B, :])
        attn = jnp.zeros((SP, D), jnp.float32)
        for hh in range(NH):
            q = jnp.dot(hn, qkv_ref[li, 0, hh, 0:D, :],
                        preferred_element_type=jnp.float32) + qkv_ref[li, 0, hh, D, :]
            k = jnp.dot(hn, qkv_ref[li, 1, hh, 0:D, :],
                        preferred_element_type=jnp.float32) + qkv_ref[li, 1, hh, D, :]
            v = jnp.dot(hn, qkv_ref[li, 2, hh, 0:D, :],
                        preferred_element_type=jnp.float32) + qkv_ref[li, 2, hh, D, :]
            # contract last dims -> no explicit transpose of k
            s = jax.lax.dot_general(q, k, (((1,), (1,)), ((), ())),
                                    preferred_element_type=jnp.float32) * scale
            s = jnp.where(kmask, s, -1e30)             # mask padded key positions
            s = s - jnp.max(s, axis=-1, keepdims=True)
            p = jnp.exp(s)
            inv = pl.reciprocal(jnp.sum(p, axis=-1, keepdims=True), approx=True)
            o = jnp.dot(p, v, preferred_element_type=jnp.float32) * inv        # [SP, HD]
            # distribute the output projection over heads (accumulate on the MXU):
            attn = attn + jnp.dot(
                o, l32_ref[li, _R_PROJ + hh * HD:_R_PROJ + (hh + 1) * HD, :],
                preferred_element_type=jnp.float32)
        h = h + attn + l32_ref[li, _R_PROJB, :]

        hooks_ref[2 * li + 1, 0] = h                   # hook: input of blocks.{li}.norm2

        # --- MLP sub-block ---
        hn2 = ln(h, l32_ref[li, _R_LN2G, :], l32_ref[li, _R_LN2B, :])
        m = jnp.dot(hn2, m64_ref[li, 0:D, :],
                    preferred_element_type=jnp.float32) + m64_ref[li, D, :]
        # TODO(synk): PyTorch nn.GELU default is exact erf-GELU; tanh approximation used here.
        m = jax.nn.gelu(m, approximate=True)
        m = jnp.dot(m, l32_ref[li, _R_FC2:_R_FC2 + MLP, :],
                    preferred_element_type=jnp.float32) + l32_ref[li, _R_FC2B, :]
        h = h + m

    # final LN + classification head: only the first 8 rows (cls token = row 0) go through
    # the head matmul; head weight is lane-padded to 128 -> unmasked, lane-dense store.
    hf = ln(h[0:8, :], emb_ref[_E_LNFG, :], emb_ref[_E_LNFB, :])
    logits_ref[0] = (jnp.dot(hf, head_ref[0:D, :], preferred_element_type=jnp.float32)
                     + head_ref[D, :]).astype(logits_ref.dtype)


# -------------------------------- parameter construction -------------------------------
def init_params(key):
    keys = jax.random.split(key, 64)
    it = iter(keys)

    def nrm(shape, std=0.02):
        return jax.random.normal(next(it), shape, dtype=jnp.float32) * std

    params = {
        # Conv2d(C, D, kernel=PATCH, stride=PATCH) weight flattened (c, ph, pw) -> K axis
        "patch_w": nrm((CPP, D)),
        "patch_b": jnp.zeros((D,), jnp.float32),
        "cls": nrm((1, 1, D)),
        "pos": nrm((1, SEQ, D)),
        "lnf_g": jnp.ones((D,), jnp.float32),
        "lnf_b": jnp.zeros((D,), jnp.float32),
        "head_w": nrm((D, NUM_CLASSES)),
        "head_b": jnp.zeros((NUM_CLASSES,), jnp.float32),
        "blocks": [],
    }
    for _ in range(DEPTH):
        params["blocks"].append({
            "ln1_g": jnp.ones((D,), jnp.float32), "ln1_b": jnp.zeros((D,), jnp.float32),
            "qkv_w": nrm((D, 3 * D)), "qkv_b": jnp.zeros((3 * D,), jnp.float32),
            "proj_w": nrm((D, D)), "proj_b": jnp.zeros((D,), jnp.float32),
            "ln2_g": jnp.ones((D,), jnp.float32), "ln2_b": jnp.zeros((D,), jnp.float32),
            "fc1_w": nrm((D, MLP)), "fc1_b": jnp.zeros((MLP,), jnp.float32),
            "fc2_w": nrm((MLP, D)), "fc2_b": jnp.zeros((D,), jnp.float32),
        })
    return params


# -------------------------------- host-side operand packing ----------------------------
def _pack_params(params):
    """Consolidate all weights/biases into 5 packed arrays (fewer prologue DMAs)."""
    blocks = params["blocks"]

    pos = params["pos"][0]                           # [SEQ, D], pos[0] is the cls position
    cls = params["cls"][0, 0]                        # [D]
    pos_rows = jnp.concatenate([
        pos[:1] + cls[None, :],                      # row 0      : cls token
        pos[1:] + params["patch_b"][None, :],        # rows 1..NP : patch tokens
        jnp.zeros((SP - SEQ, D), jnp.float32),       # rows NP+1..: padding (exactly zero)
    ], axis=0)                                       # [SP, D]
    emb = jnp.concatenate([
        params["patch_w"], pos_rows,
        params["lnf_g"][None, :], params["lnf_b"][None, :],
    ], axis=0)                                       # [_E_ROWS, D]

    qkv, l32, m64 = [], [], []
    for blk in blocks:
        # per-head q/k/v weight slabs + bias row: [3, NH, D+1, HD]
        w = blk["qkv_w"].reshape(D, 3, NH, HD).transpose(1, 2, 0, 3)     # [3, NH, D, HD]
        bb = blk["qkv_b"].reshape(3, NH, 1, HD)                          # [3, NH, 1, HD]
        qkv.append(jnp.concatenate([w, bb], axis=2))
        # all D-wide per-layer tensors stacked along sublanes: [_R_ROWS, D]
        l32.append(jnp.concatenate([
            blk["proj_w"], blk["fc2_w"],
            blk["ln1_g"][None, :], blk["ln1_b"][None, :],
            blk["ln2_g"][None, :], blk["ln2_b"][None, :],
            blk["proj_b"][None, :], blk["fc2_b"][None, :],
        ], axis=0))
        # MLP fc1 weight + bias row: [D+1, MLP]
        m64.append(jnp.concatenate([blk["fc1_w"], blk["fc1_b"][None, :]], axis=0))

    head = jnp.concatenate([
        jnp.pad(params["head_w"], ((0, 0), (0, HEAD_PAD - NUM_CLASSES))),
        jnp.pad(params["head_b"], (0, HEAD_PAD - NUM_CLASSES))[None, :],
    ], axis=0)                                       # [D+1, 128]

    return emb, jnp.stack(qkv), jnp.stack(l32), jnp.stack(m64), head


# ------------------------------ fused forward wrapper -----------------------------------
@jax.jit
def vit_forward_fused(x, params):
    """One pallas_call for the whole ViT forward (grid axis = batch).

    Returns (hook_stack, logits):
      hook_stack: [2*DEPTH, B, SEQ, D] residual-stream snapshots (cls-first), index 2*li =
                  input of blocks.{li}.norm1, 2*li+1 = input of blocks.{li}.norm2.
      logits:     [B, NUM_CLASSES]
    """
    b = x.shape[0]
    p = PATCH

    # Patchify (glue): NCHW -> [B, NP, C*p*p], flatten order (c, ph, pw) matches Conv2d.
    xp = x.reshape(b, C, H // p, p, W // p, p)
    xp = xp.transpose(0, 2, 4, 1, 3, 5).reshape(b, NP, CPP)
    # cls slot at row 0 (zero patch contribution), patches rows 1..NP, zero padding after.
    xp_pad = jnp.concatenate([
        jnp.zeros((b, 1, CPP), jnp.float32), xp,
        jnp.zeros((b, SP - SEQ, CPP), jnp.float32),
    ], axis=1)                                       # [B, SP, CPP]

    emb, qkv, l32, m64, head = _pack_params(params)

    kernel = functools.partial(_vit_fused_kernel, eps=1e-6, scale=1.0 / math.sqrt(HD))
    hooks, logits_full = pl.pallas_call(
        kernel,
        out_shape=(jax.ShapeDtypeStruct((2 * DEPTH, b, SP, D), jnp.float32),   # hooks
                   jax.ShapeDtypeStruct((b, 8, HEAD_PAD), jnp.float32)),       # logits rows
        grid=(b,),
        in_specs=[
            pl.BlockSpec((1, SP, CPP), lambda i: (i, 0, 0)),      # per-batch patches
            pl.BlockSpec(emb.shape, lambda i: (0, 0)),            # weights: resident
            pl.BlockSpec(qkv.shape, lambda i: (0, 0, 0, 0, 0)),
            pl.BlockSpec(l32.shape, lambda i: (0, 0, 0)),
            pl.BlockSpec(m64.shape, lambda i: (0, 0, 0)),
            pl.BlockSpec(head.shape, lambda i: (0, 0)),
        ],
        out_specs=(
            pl.BlockSpec((2 * DEPTH, 1, SP, D), lambda i: (0, i, 0, 0)),
            pl.BlockSpec((1, 8, HEAD_PAD), lambda i: (i, 0, 0)),
        ),
        compiler_params=pltpu.CompilerParams(dimension_semantics=("parallel",)),
    )(xp_pad, emb, qkv, l32, m64, head)

    hook_stack = hooks[:, :, :SEQ, :]                # already cls-first; drop padding rows
    logits = logits_full[:, 0, :NUM_CLASSES]         # cls row = row 0 per batch element
    return hook_stack, logits


# ---------------------- FeatureExtractor_VIT equivalent (hook API) ---------------------
class FeatureExtractorVIT:
    """JAX/Pallas mirror of the PyTorch FeatureExtractor_VIT hook wrapper."""

    def __init__(self, params, extracted_layers):
        self.params = params
        self.extracted_layers = extracted_layers
        self.features = []
        # Hooks fire in layer-execution order inside the submodule.
        self._hook_ids = []
        for li in range(DEPTH):
            for j, nm in enumerate(("norm1", "norm2")):
                if f"blocks.{li}.{nm}" in extracted_layers:
                    self._hook_ids.append(2 * li + j)

    def forward(self, x):
        hook_stack, _logits = vit_forward_fused(x, self.params)
        for idx in self._hook_ids:
            self.features.append(hook_stack[idx])    # forward() returns nothing, like PyTorch

    def output_and_clear(self):
        features = self.features
        self.features = []
        return features


# -------------------------------------- main -------------------------------------------
if __name__ == "__main__":
    key = jax.random.PRNGKey(0)
    kx, kp = jax.random.split(key)
    x = jax.random.normal(kx, (B, C, H, W), dtype=jnp.float32)   # NCHW, PyTorch-style
    params = init_params(kp)

    extractor = FeatureExtractorVIT(params, EXTRACTED_LAYERS)
    extractor.forward(x)
    feats = extractor.output_and_clear()

    for f in feats:
        jax.block_until_ready(f)
    assert len(feats) == len(EXTRACTED_LAYERS)
    assert all(f.shape == (B, SEQ, D) for f in feats)
    print("KERNEL_OK")
</pallas_src>

<mosaic_0001>
module attributes {stable_mosaic.version = 11 : i64} {
  func.func @_vit_fused_kernel(%arg0: i32, %arg1: memref<1x24x64xf32, #tpu.memory_space<vmem>>, %arg2: memref<90x32xf32, #tpu.memory_space<vmem>>, %arg3: memref<2x3x2x33x16xf32, #tpu.memory_space<vmem>>, %arg4: memref<2x102x32xf32, #tpu.memory_space<vmem>>, %arg5: memref<2x33x64xf32, #tpu.memory_space<vmem>>, %arg6: memref<33x128xf32, #tpu.memory_space<vmem>>, %arg7: memref<4x1x24x32xf32, #tpu.memory_space<vmem>>, %arg8: memref<1x8x128xf32, #tpu.memory_space<vmem>>) attributes {dimension_semantics = [#tpu.dimension_semantics<parallel>], iteration_bounds = array<i64: 2>, scalar_prefetch = 0 : i64, scratch_operands = 0 : i64, tpu.core_type = #tpu.core_type<tc>, window_params = [{transform_indices = @transform_0, window_bounds = array<i64: 1, 24, 64>}, {pipeline_mode = #tpu.pipeline_mode<synchronous>, transform_indices = @transform_1, window_bounds = array<i64: 90, 32>}, {pipeline_mode = #tpu.pipeline_mode<synchronous>, transform_indices = @transform_2, window_bounds = array<i64: 2, 3, 2, 33, 16>}, {pipeline_mode = #tpu.pipeline_mode<synchronous>, transform_indices = @transform_3, window_bounds = array<i64: 2, 102, 32>}, {pipeline_mode = #tpu.pipeline_mode<synchronous>, transform_indices = @transform_4, window_bounds = array<i64: 2, 33, 64>}, {pipeline_mode = #tpu.pipeline_mode<synchronous>, transform_indices = @transform_5, window_bounds = array<i64: 33, 128>}, {transform_indices = @transform_6, window_bounds = array<i64: 4, 1, 24, 32>}, {transform_indices = @transform_7, window_bounds = array<i64: 1, 8, 128>}]} {
    %c0 = arith.constant 0 : index
    %c0_0 = arith.constant 0 : index
    %c0_1 = arith.constant 0 : index
    %0 = vector.load %arg1[%c0, %c0_0, %c0_1] : memref<1x24x64xf32, #tpu.memory_space<vmem>>, vector<1x24x64xf32>
    %1 = vector.shape_cast %0 : vector<1x24x64xf32> to vector<24x64xf32>
    %c0_2 = arith.constant 0 : index
    %c0_3 = arith.constant 0 : index
    %2 = vector.load %arg2[%c0_2, %c0_3] : memref<90x32xf32, #tpu.memory_space<vmem>>, vector<64x32xf32>
    %cst = arith.constant dense<0.000000e+00> : vector<24x32xf32>
    %3 = tpu.matmul %1, %2, %cst {dimension_numbers = #tpu.dot_dimension_numbers<[1], [0], [0], [1], [0, 0, 1, 1], [], []>} : vector<24x64xf32>, vector<64x32xf32>, vector<24x32xf32> -> vector<24x32xf32>
    %c64 = arith.constant 64 : index
    %c0_4 = arith.constant 0 : index
    %4 = vector.load %arg2[%c64, %c0_4] : memref<90x32xf32, #tpu.memory_space<vmem>>, vector<24x32xf32>
    %5 = arith.addf %3, %4 : vector<24x32xf32>
    %6 = tpu.iota {dimensions = array<i32: 1>} : vector<24x24xi32>
    %c17_i32 = arith.constant 17 : i32
    %7 = vector.broadcast %c17_i32 : i32 to vector<24x24xi32>
    %8 = arith.cmpi slt, %6, %7 : vector<24x24xi32>
    %c0_5 = arith.constant 0 : index
    %c0_6 = arith.constant 0 : index
    %c0_7 = arith.constant 0 : index
    %c0_8 = arith.constant 0 : index
    %9 = vector.load %arg7[%c0_5, %c0_6, %c0_7, %c0_8] : memref<4x1x24x32xf32, #tpu.memory_space<vmem>>, vector<1x1x24x32xf32>
    %10 = vector.shape_cast %9 : vector<1x1x24x32xf32> to vector<24x32xf32>
    %11 = vector.shape_cast %5 : vector<24x32xf32> to vector<1x1x24x32xf32>
    tpu.vector_store %arg7[%c0_5, %c0_6, %c0_7, %c0_8], %11 {strides = array<i32>} : memref<4x1x24x32xf32, #tpu.memory_space<vmem>>, vector<1x1x24x32xf32>,
    %c0_9 = arith.constant 0 : index
    %c96 = arith.constant 96 : index
    %c0_10 = arith.constant 0 : index
    %12 = vector.load %arg4[%c0_9, %c96, %c0_10] : memref<2x102x32xf32, #tpu.memory_space<vmem>>, vector<1x1x32xf32>
    %13 = vector.shape_cast %12 : vector<1x1x32xf32> to vector<32xf32>
    %c0_11 = arith.constant 0 : index
    %c97 = arith.constant 97 : index
    %c0_12 = arith.constant 0 : index
    %14 = vector.load %arg4[%c0_11, %c97, %c0_12] : memref<2x102x32xf32, #tpu.memory_space<vmem>>, vector<1x1x32xf32>
    %15 = vector.shape_cast %14 : vector<1x1x32xf32> to vector<32xf32>
    %cst_13 = arith.constant dense<0.000000e+00> : vector<24xf32>
    %16 = vector.multi_reduction <add>, %5, %cst_13 [1] : vector<24x32xf32> to vector<24xf32>
    %17 = vector.shape_cast %16 : vector<24xf32> to vector<24x1xf32>
    %cst_14 = arith.constant 3.200000e+01 : f32
    %18 = vector.broadcast %cst_14 : f32 to vector<24x1xf32>
    %19 = arith.divf %17, %18 : vector<24x1xf32>
    %20 = vector.broadcast %19 : vector<24x1xf32> to vector<24x32xf32>
    %21 = arith.subf %5, %20 : vector<24x32xf32>
    %22 = arith.mulf %21, %21 : vector<24x32xf32>
    %cst_15 = arith.constant dense<0.000000e+00> : vector<24xf32>
    %23 = vector.multi_reduction <add>, %22, %cst_15 [1] : vector<24x32xf32> to vector<24xf32>
    %24 = vector.shape_cast %23 : vector<24xf32> to vector<24x1xf32>
    %cst_16 = arith.constant 3.200000e+01 : f32
    %25 = vector.broadcast %cst_16 : f32 to vector<24x1xf32>
    %26 = arith.divf %24, %25 : vector<24x1xf32>
    %27 = vector.broadcast %19 : vector<24x1xf32> to vector<24x32xf32>
    %28 = arith.subf %5, %27 : vector<24x32xf32>
    %cst_17 = arith.constant 9.99999997E-7 : f32
    %29 = vector.broadcast %cst_17 : f32 to vector<24x1xf32>
    %30 = arith.addf %26, %29 : vector<24x1xf32>
    %31 = math.rsqrt %30 : vector<24x1xf32>
    %32 = vector.broadcast %31 : vector<24x1xf32> to vector<24x32xf32>
    %33 = arith.mulf %28, %32 : vector<24x32xf32>
    %34 = vector.shape_cast %13 : vector<32xf32> to vector<1x32xf32>
    %35 = vector.broadcast %34 : vector<1x32xf32> to vector<24x32xf32>
    %36 = arith.mulf %33, %35 : vector<24x32xf32>
    %37 = vector.shape_cast %15 : vector<32xf32> to vector<1x32xf32>
    %38 = vector.broadcast %37 : vector<1x32xf32> to vector<24x32xf32>
    %39 = arith.addf %36, %38 : vector<24x32xf32>
    %cst_18 = arith.constant 0.000000e+00 : f32
    %40 = vector.broadcast %cst_18 : f32 to vector<24x32xf32>
    %c0_19 = arith.constant 0 : index
    %c0_20 = arith.constant 0 : index
    %c0_21 = arith.constant 0 : index
    %c0_22 = arith.constant 0 : index
    %c0_23 = arith.constant 0 : index
    %41 = vector.load %arg3[%c0_19, %c0_20, %c0_21, %c0_22, %c0_23] : memref<2x3x2x33x16xf32, #tpu.memory_space<vmem>>, vector<1x1x1x32x16xf32>
    %42 = vector.shape_cast %41 : vector<1x1x1x32x16xf32> to vector<32x16xf32>
    %cst_24 = arith.constant dense<0.000000e+00> : vector<24x16xf32>
    %43 = tpu.matmul %39, %42, %cst_24 {dimension_numbers = #tpu.dot_dimension_numbers<[1], [0], [0], [1], [0, 0, 1, 1], [], []>} : vector<24x32xf32>, vector<32x16xf32>, vector<24x16xf32> -> vector<24x16xf32>
    %c0_25 = arith.constant 0 : index
    %c0_26 = arith.constant 0 : index
    %c0_27 = arith.constant 0 : index
    %c32 = arith.constant 32 : index
    %c0_28 = arith.constant 0 : index
    %44 = vector.load %arg3[%c0_25, %c0_26, %c0_27, %c32, %c0_28] : memref<2x3x2x33x16xf32, #tpu.memory_space<vmem>>, vector<1x1x1x1x16xf32>
    %45 = vector.shape_cast %44 : vector<1x1x1x1x16xf32> to vector<16xf32>
    %46 = vector.shape_cast %45 : vector<16xf32> to vector<1x16xf32>
    %47 = vector.broadcast %46 : vector<1x16xf32> to vector<24x16xf32>
    %48 = arith.addf %43, %47 : vector<24x16xf32>
    %c0_29 = arith.constant 0 : index
    %c1 = arith.constant 1 : index
    %c0_30 = arith.constant 0 : index
    %c0_31 = arith.constant 0 : index
    %c0_32 = arith.constant 0 : index
    %49 = vector.load %arg3[%c0_29, %c1, %c0_30, %c0_31, %c0_32] : memref<2x3x2x33x16xf32, #tpu.memory_space<vmem>>, vector<1x1x1x32x16xf32>
    %50 = vector.shape_cast %49 : vector<1x1x1x32x16xf32> to vector<32x16xf32>
    %cst_33 = arith.constant dense<0.000000e+00> : vector<24x16xf32>
    %51 = tpu.matmul %39, %50, %cst_33 {dimension_numbers = #tpu.dot_dimension_numbers<[1], [0], [0], [1], [0, 0, 1, 1], [], []>} : vector<24x32xf32>, vector<32x16xf32>, vector<24x16xf32> -> vector<24x16xf32>
    %c0_34 = arith.constant 0 : index
    %c1_35 = arith.constant 1 : index
    %c0_36 = arith.constant 0 : index
    %c32_37 = arith.constant 32 : index
    %c0_38 = arith.constant 0 : index
    %52 = vector.load %arg3[%c0_34, %c1_35, %c0_36, %c32_37, %c0_38] : memref<2x3x2x33x16xf32, #tpu.memory_space<vmem>>, vector<1x1x1x1x16xf32>
    %53 = vector.shape_cast %52 : vector<1x1x1x1x16xf32> to vector<16xf32>
    %54 = vector.shape_cast %53 : vector<16xf32> to vector<1x16xf32>
    %55 = vector.broadcast %54 : vector<1x16xf32> to vector<24x16xf32>
    %56 = arith.addf %51, %55 : vector<24x16xf32>
    %c0_39 = arith.constant 0 : index
    %c2 = arith.constant 2 : index
    %c0_40 = arith.constant 0 : index
    %c0_41 = arith.constant 0 : index
    %c0_42 = arith.constant 0 : index
    %57 = vector.load %arg3[%c0_39, %c2, %c0_40, %c0_41, %c0_42] : memref<2x3x2x33x16xf32, #tpu.memory_space<vmem>>, vector<1x1x1x32x16xf32>
    %58 = vector.shape_cast %57 : vector<1x1x1x32x16xf32> to vector<32x16xf32>
    %cst_43 = arith.constant dense<0.000000e+00> : vector<24x16xf32>
    %59 = tpu.matmul %39, %58, %cst_43 {dimension_numbers = #tpu.dot_dimension_numbers<[1], [0], [0], [1], [0, 0, 1, 1], [], []>} : vector<24x32xf32>, vector<32x16xf32>, vector<24x16xf32> -> vector<24x16xf32>
    %c0_44 = arith.constant 0 : index
    %c2_45 = arith.constant 2 : index
    %c0_46 = arith.constant 0 : index
    %c32_47 = arith.constant 32 : index
    %c0_48 = arith.constant 0 : index
    %60 = vector.load %arg3[%c0_44, %c2_45, %c0_46, %c32_47, %c0_48] : memref<2x3x2x33x16xf32, #tpu.memory_space<vmem>>, vector<1x1x1x1x16xf32>
    %61 = vector.shape_cast %60 : vector<1x1x1x1x16xf32> to vector<16xf32>
    %62 = vector.shape_cast %61 : vector<16xf32> to vector<1x16xf32>
    %63 = vector.broadcast %62 : vector<1x16xf32> to vector<24x16xf32>
    %64 = arith.addf %59, %63 : vector<24x16xf32>
    %cst_49 = arith.constant dense<0.000000e+00> : vector<24x24xf32>
    %65 = tpu.matmul %48, %56, %cst_49 {dimension_numbers = #tpu.dot_dimension_numbers<[1], [1], [0], [0], [0, 0, 1, 0], [], []>} : vector<24x16xf32>, vector<24x16xf32>, vector<24x24xf32> -> vector<24x24xf32>
    %cst_50 = arith.constant 2.500000e-01 : f32
    %66 = vector.broadcast %cst_50 : f32 to vector<24x24xf32>
    %67 = arith.mulf %65, %66 : vector<24x24xf32>
    %cst_51 = arith.constant -1.000000e+30 : f32
    %68 = vector.broadcast %cst_51 : f32 to vector<24x24xf32>
    %69 = arith.select %8, %67, %68 : vector<24x24xi1>, vector<24x24xf32>
    %cst_52 = arith.constant dense<0xFF800000> : vector<24xf32>
    %70 = vector.multi_reduction <maximumf>, %69, %cst_52 [1] : vector<24x24xf32> to vector<24xf32>
    %71 = vector.shape_cast %70 : vector<24xf32> to vector<24x1xf32>
    %72 = vector.broadcast %71 : vector<24x1xf32> to vector<24x24xf32>
    %73 = arith.subf %69, %72 : vector<24x24xf32>
    %74 = math.exp %73 : vector<24x24xf32>
    %cst_53 = arith.constant dense<0.000000e+00> : vector<24xf32>
    %75 = vector.multi_reduction <add>, %74, %cst_53 [1] : vector<24x24xf32> to vector<24xf32>
    %76 = vector.shape_cast %75 : vector<24xf32> to vector<24x1xf32>
    %77 = tpu.reciprocal %76 {approx = true} : vector<24x1xf32> -> vector<24x1xf32>
    %cst_54 = arith.constant dense<0.000000e+00> : vector<24x16xf32>
    %78 = tpu.matmul %74, %64, %cst_54 {dimension_numbers = #tpu.dot_dimension_numbers<[1], [0], [0], [1], [0, 0, 1, 1], [], []>} : vector<24x24xf32>, vector<24x16xf32>, vector<24x16xf32> -> vector<24x16xf32>
    %79 = vector.broadcast %77 : vector<24x1xf32> to vector<24x16xf32>
    %80 = arith.mulf %78, %79 : vector<24x16xf32>
    %c0_55 = arith.constant 0 : index
    %c0_56 = arith.constant 0 : index
    %c0_57 = arith.constant 0 : index
    %81 = vector.load %arg4[%c0_55, %c0_56, %c0_57] : memref<2x102x32xf32, #tpu.memory_space<vmem>>, vector<1x16x32xf32>
    %82 = vector.shape_cast %81 : vector<1x16x32xf32> to vector<16x32xf32>
    %cst_58 = arith.constant dense<0.000000e+00> : vector<24x32xf32>
    %83 = tpu.matmul %80, %82, %cst_58 {dimension_numbers = #tpu.dot_dimension_numbers<[1], [0], [0], [1], [0, 0, 1, 1], [], []>} : vector<24x16xf32>, vector<16x32xf32>, vector<24x32xf32> -> vector<24x32xf32>
    %84 = arith.addf %40, %83 : vector<24x32xf32>
    %c0_59 = arith.constant 0 : index
    %c0_60 = arith.constant 0 : index
    %c1_61 = arith.constant 1 : index
    %c0_62 = arith.constant 0 : index
    %c0_63 = arith.constant 0 : index
    %85 = vector.load %arg3[%c0_59, %c0_60, %c1_61, %c0_62, %c0_63] : memref<2x3x2x33x16xf32, #tpu.memory_space<vmem>>, vector<1x1x1x32x16xf32>
    %86 = vector.shape_cast %85 : vector<1x1x1x32x16xf32> to vector<32x16xf32>
    %cst_64 = arith.constant dense<0.000000e+00> : vector<24x16xf32>
    %87 = tpu.matmul %39, %86, %cst_64 {dimension_numbers = #tpu.dot_dimension_numbers<[1], [0], [0], [1], [0, 0, 1, 1], [], []>} : vector<24x32xf32>, vector<32x16xf32>, vector<24x16xf32> -> vector<24x16xf32>
    %c0_65 = arith.constant 0 : index
    %c0_66 = arith.constant 0 : index
    %c1_67 = arith.constant 1 : index
    %c32_68 = arith.constant 32 : index
    %c0_69 = arith.constant 0 : index
    %88 = vector.load %arg3[%c0_65, %c0_66, %c1_67, %c32_68, %c0_69] : memref<2x3x2x33x16xf32, #tpu.memory_space<vmem>>, vector<1x1x1x1x16xf32>
    %89 = vector.shape_cast %88 : vector<1x1x1x1x16xf32> to vector<16xf32>
    %90 = vector.shape_cast %89 : vector<16xf32> to vector<1x16xf32>
    %91 = vector.broadcast %90 : vector<1x16xf32> to vector<24x16xf32>
    %92 = arith.addf %87, %91 : vector<24x16xf32>
    %c0_70 = arith.constant 0 : index
    %c1_71 = arith.constant 1 : index
    %c1_72 = arith.constant 1 : index
    %c0_73 = arith.constant 0 : index
    %c0_74 = arith.constant 0 : index
    %93 = vector.load %arg3[%c0_70, %c1_71, %c1_72, %c0_73, %c0_74] : memref<2x3x2x33x16xf32, #tpu.memory_space<vmem>>, vector<1x1x1x32x16xf32>
    %94 = vector.shape_cast %93 : vector<1x1x1x32x16xf32> to vector<32x16xf32>
    %cst_75 = arith.constant dense<0.000000e+00> : vector<24x16xf32>
    %95 = tpu.matmul %39, %94, %cst_75 {dimension_numbers = #tpu.dot_dimension_numbers<[1], [0], [0], [1], [0, 0, 1, 1], [], []>} : vector<24x32xf32>, vector<32x16xf32>, vector<24x16xf32> -> vector<24x16xf32>
    %c0_76 = arith.constant 0 : index
    %c1_77 = arith.constant 1 : index
    %c1_78 = arith.constant 1 : index
    %c32_79 = arith.constant 32 : index
    %c0_80 = arith.constant 0 : index
    %96 = vector.load %arg3[%c0_76, %c1_77, %c1_78, %c32_79, %c0_80] : memref<2x3x2x33x16xf32, #tpu.memory_space<vmem>>, vector<1x1x1x1x16xf32>
    %97 = vector.shape_cast %96 : vector<1x1x1x1x16xf32> to vector<16xf32>
    %98 = vector.shape_cast %97 : vector<16xf32> to vector<1x16xf32>
    %99 = vector.broadcast %98 : vector<1x16xf32> to vector<24x16xf32>
    %100 = arith.addf %95, %99 : vector<24x16xf32>
    %c0_81 = arith.constant 0 : index
    %c2_82 = arith.constant 2 : index
    %c1_83 = arith.constant 1 : index
    %c0_84 = arith.constant 0 : index
    %c0_85 = arith.constant 0 : index
    %101 = vector.load %arg3[%c0_81, %c2_82, %c1_83, %c0_84, %c0_85] : memref<2x3x2x33x16xf32, #tpu.memory_space<vmem>>, vector<1x1x1x32x16xf32>
    %102 = vector.shape_cast %101 : vector<1x1x1x32x16xf32> to vector<32x16xf32>
    %cst_86 = arith.constant dense<0.000000e+00> : vector<24x16xf32>
    %103 = tpu.matmul %39, %102, %cst_86 {dimension_numbers = #tpu.dot_dimension_numbers<[1], [0], [0], [1], [0, 0, 1, 1], [], []>} : vector<24x32xf32>, vector<32x16xf32>, vector<24x16xf32> -> vector<24x16xf32>
    %c0_87 = arith.constant 0 : index
    %c2_88 = arith.constant 2 : index
    %c1_89 = arith.constant 1 : index
    %c32_90 = arith.constant 32 : index
    %c0_91 = arith.constant 0 : index
    %104 = vector.load %arg3[%c0_87, %c2_88, %c1_89, %c32_90, %c0_91] : memref<2x3x2x33x16xf32, #tpu.memory_space<vmem>>, vector<1x1x1x1x16xf32>
    %105 = vector.shape_cast %104 : vector<1x1x1x1x16xf32> to vector<16xf32>
    %106 = vector.shape_cast %105 : vector<16xf32> to vector<1x16xf32>
    %107 = vector.broadcast %106 : vector<1x16xf32> to vector<24x16xf32>
    %108 = arith.addf %103, %107 : vector<24x16xf32>
    %cst_92 = arith.constant dense<0.000000e+00> : vector<24x24xf32>
    %109 = tpu.matmul %92, %100, %cst_92 {dimension_numbers = #tpu.dot_dimension_numbers<[1], [1], [0], [0], [0, 0, 1, 0], [], []>} : vector<24x16xf32>, vector<24x16xf32>, vector<24x24xf32> -> vector<24x24xf32>
    %cst_93 = arith.constant 2.500000e-01 : f32
    %110 = vector.broadcast %cst_93 : f32 to vector<24x24xf32>
    %111 = arith.mulf %109, %110 : vector<24x24xf32>
    %cst_94 = arith.constant -1.000000e+30 : f32
    %112 = vector.broadcast %cst_94 : f32 to vector<24x24xf32>
    %113 = arith.select %8, %111, %112 : vector<24x24xi1>, vector<24x24xf32>
    %cst_95 = arith.constant dense<0xFF800000> : vector<24xf32>
    %114 = vector.multi_reduction <maximumf>, %113, %cst_95 [1] : vector<24x24xf32> to vector<24xf32>
    %115 = vector.shape_cast %114 : vector<24xf32> to vector<24x1xf32>
    %116 = vector.broadcast %115 : vector<24x1xf32> to vector<24x24xf32>
    %117 = arith.subf %113, %116 : vector<24x24xf32>
    %118 = math.exp %117 : vector<24x24xf32>
    %cst_96 = arith.constant dense<0.000000e+00> : vector<24xf32>
    %119 = vector.multi_reduction <add>, %118, %cst_96 [1] : vector<24x24xf32> to vector<24xf32>
    %120 = vector.shape_cast %119 : vector<24xf32> to vector<24x1xf32>
    %121 = tpu.reciprocal %120 {approx = true} : vector<24x1xf32> -> vector<24x1xf32>
    %cst_97 = arith.constant dense<0.000000e+00> : vector<24x16xf32>
    %122 = tpu.matmul %118, %108, %cst_97 {dimension_numbers = #tpu.dot_dimension_numbers<[1], [0], [0], [1], [0, 0, 1, 1], [], []>} : vector<24x24xf32>, vector<24x16xf32>, vector<24x16xf32> -> vector<24x16xf32>
    %123 = vector.broadcast %121 : vector<24x1xf32> to vector<24x16xf32>
    %124 = arith.mulf %122, %123 : vector<24x16xf32>
    %c0_98 = arith.constant 0 : index
    %c16 = arith.constant 16 : index
    %c0_99 = arith.constant 0 : index
    %125 = vector.load %arg4[%c0_98, %c16, %c0_99] : memref<2x102x32xf32, #tpu.memory_space<vmem>>, vector<1x16x32xf32>
    %126 = vector.shape_cast %125 : vector<1x16x32xf32> to vector<16x32xf32>
    %cst_100 = arith.constant dense<0.000000e+00> : vector<24x32xf32>
    %127 = tpu.matmul %124, %126, %cst_100 {dimension_numbers = #tpu.dot_dimension_numbers<[1], [0], [0], [1], [0, 0, 1, 1], [], []>} : vector<24x16xf32>, vector<16x32xf32>, vector<24x32xf32> -> vector<24x32xf32>
    %128 = arith.addf %84, %127 : vector<24x32xf32>
    %129 = arith.addf %5, %128 : vector<24x32xf32>
    %c0_101 = arith.constant 0 : index
    %c100 = arith.constant 100 : index
    %c0_102 = arith.constant 0 : index
    %130 = vector.load %arg4[%c0_101, %c100, %c0_102] : memref<2x102x32xf32, #tpu.memory_space<vmem>>, vector<1x1x32xf32>
    %131 = vector.shape_cast %130 : vector<1x1x32xf32> to vector<32xf32>
    %132 = vector.shape_cast %131 : vector<32xf32> to vector<1x32xf32>
    %133 = vector.broadcast %132 : vector<1x32xf32> to vector<24x32xf32>
    %134 = arith.addf %129, %133 : vector<24x32xf32>
    %c1_103 = arith.constant 1 : index
    %c0_104 = arith.constant 0 : index
    %c0_105 = arith.constant 0 : index
    %c0_106 = arith.constant 0 : index
    %135 = vector.load %arg7[%c1_103, %c0_104, %c0_105, %c0_106] : memref<4x1x24x32xf32, #tpu.memory_space<vmem>>, vector<1x1x24x32xf32>
    %136 = vector.shape_cast %135 : vector<1x1x24x32xf32> to vector<24x32xf32>
    %137 = vector.shape_cast %134 : vector<24x32xf32> to vector<1x1x24x32xf32>
    tpu.vector_store %arg7[%c1_103, %c0_104, %c0_105, %c0_106], %137 {strides = array<i32>} : memref<4x1x24x32xf32, #tpu.memory_space<vmem>>, vector<1x1x24x32xf32>,
    %c0_107 = arith.constant 0 : index
    %c98 = arith.constant 98 : index
    %c0_108 = arith.constant 0 : index
    %138 = vector.load %arg4[%c0_107, %c98, %c0_108] : memref<2x102x32xf32, #tpu.memory_space<vmem>>, vector<1x1x32xf32>
    %139 = vector.shape_cast %138 : vector<1x1x32xf32> to vector<32xf32>
    %c0_109 = arith.constant 0 : index
    %c99 = arith.constant 99 : index
    %c0_110 = arith.constant 0 : index
    %140 = vector.load %arg4[%c0_109, %c99, %c0_110] : memref<2x102x32xf32, #tpu.memory_space<vmem>>, vector<1x1x32xf32>
    %141 = vector.shape_cast %140 : vector<1x1x32xf32> to vector<32xf32>
    %cst_111 = arith.constant dense<0.000000e+00> : vector<24xf32>
    %142 = vector.multi_reduction <add>, %134, %cst_111 [1] : vector<24x32xf32> to vector<24xf32>
    %143 = vector.shape_cast %142 : vector<24xf32> to vector<24x1xf32>
    %cst_112 = arith.constant 3.200000e+01 : f32
    %144 = vector.broadcast %cst_112 : f32 to vector<24x1xf32>
    %145 = arith.divf %143, %144 : vector<24x1xf32>
    %146 = vector.broadcast %145 : vector<24x1xf32> to vector<24x32xf32>
    %147 = arith.subf %134, %146 : vector<24x32xf32>
    %148 = arith.mulf %147, %147 : vector<24x32xf32>
    %cst_113 = arith.constant dense<0.000000e+00> : vector<24xf32>
    %149 = vector.multi_reduction <add>, %148, %cst_113 [1] : vector<24x32xf32> to vector<24xf32>
    %150 = vector.shape_cast %149 : vector<24xf32> to vector<24x1xf32>
    %cst_114 = arith.constant 3.200000e+01 : f32
    %151 = vector.broadcast %cst_114 : f32 to vector<24x1xf32>
    %152 = arith.divf %150, %151 : vector<24x1xf32>
    %153 = vector.broadcast %145 : vector<24x1xf32> to vector<24x32xf32>
    %154 = arith.subf %134, %153 : vector<24x32xf32>
    %cst_115 = arith.constant 9.99999997E-7 : f32
    %155 = vector.broadcast %cst_115 : f32 to vector<24x1xf32>
    %156 = arith.addf %152, %155 : vector<24x1xf32>
    %157 = math.rsqrt %156 : vector<24x1xf32>
    %158 = vector.broadcast %157 : vector<24x1xf32> to vector<24x32xf32>
    %159 = arith.mulf %154, %158 : vector<24x32xf32>
    %160 = vector.shape_cast %139 : vector<32xf32> to vector<1x32xf32>
    %161 = vector.broadcast %160 : vector<1x32xf32> to vector<24x32xf32>
    %162 = arith.mulf %159, %161 : vector<24x32xf32>
    %163 = vector.shape_cast %141 : vector<32xf32> to vector<1x32xf32>
    %164 = vector.broadcast %163 : vector<1x32xf32> to vector<24x32xf32>
    %165 = arith.addf %162, %164 : vector<24x32xf32>
    %c0_116 = arith.constant 0 : index
    %c0_117 = arith.constant 0 : index
    %c0_118 = arith.constant 0 : index
    %166 = vector.load %arg5[%c0_116, %c0_117, %c0_118] : memref<2x33x64xf32, #tpu.memory_space<vmem>>, vector<1x32x64xf32>
    %167 = vector.shape_cast %166 : vector<1x32x64xf32> to vector<32x64xf32>
    %cst_119 = arith.constant dense<0.000000e+00> : vector<24x64xf32>
    %168 = tpu.matmul %165, %167, %cst_119 {dimension_numbers = #tpu.dot_dimension_numbers<[1], [0], [0], [1], [0, 0, 1, 1], [], []>} : vector<24x32xf32>, vector<32x64xf32>, vector<24x64xf32> -> vector<24x64xf32>
    %c0_120 = arith.constant 0 : index
    %c32_121 = arith.constant 32 : index
    %c0_122 = arith.constant 0 : index
    %169 = vector.load %arg5[%c0_120, %c32_121, %c0_122] : memref<2x33x64xf32, #tpu.memory_space<vmem>>, vector<1x1x64xf32>
    %170 = vector.shape_cast %169 : vector<1x1x64xf32> to vector<64xf32>
    %171 = vector.shape_cast %170 : vector<64xf32> to vector<1x64xf32>
    %172 = vector.broadcast %171 : vector<1x64xf32> to vector<24x64xf32>
    %173 = arith.addf %168, %172 : vector<24x64xf32>
    %174 = arith.mulf %173, %173 : vector<24x64xf32>
    %175 = arith.mulf %173, %174 : vector<24x64xf32>
    %cst_123 = arith.constant 4.471500e-02 : f32
    %176 = vector.broadcast %cst_123 : f32 to vector<24x64xf32>
    %177 = arith.mulf %176, %175 : vector<24x64xf32>
    %178 = arith.addf %173, %177 : vector<24x64xf32>
    %cst_124 = arith.constant 0.797884583 : f32
    %179 = vector.broadcast %cst_124 : f32 to vector<24x64xf32>
    %180 = arith.mulf %179, %178 : vector<24x64xf32>
    %181 = math.tanh %180 : vector<24x64xf32>
    %cst_125 = arith.constant 1.000000e+00 : f32
    %182 = vector.broadcast %cst_125 : f32 to vector<24x64xf32>
    %183 = arith.addf %182, %181 : vector<24x64xf32>
    %cst_126 = arith.constant 5.000000e-01 : f32
    %184 = vector.broadcast %cst_126 : f32 to vector<24x64xf32>
    %185 = arith.mulf %184, %183 : vector<24x64xf32>
    %186 = arith.mulf %173, %185 : vector<24x64xf32>
    %c0_127 = arith.constant 0 : index
    %c32_128 = arith.constant 32 : index
    %c0_129 = arith.constant 0 : index
    %187 = vector.load %arg4[%c0_127, %c32_128, %c0_129] : memref<2x102x32xf32, #tpu.memory_space<vmem>>, vector<1x64x32xf32>
    %188 = vector.shape_cast %187 : vector<1x64x32xf32> to vector<64x32xf32>
    %cst_130 = arith.constant dense<0.000000e+00> : vector<24x32xf32>
    %189 = tpu.matmul %186, %188, %cst_130 {dimension_numbers = #tpu.dot_dimension_numbers<[1], [0], [0], [1], [0, 0, 1, 1], [], []>} : vector<24x64xf32>, vector<64x32xf32>, vector<24x32xf32> -> vector<24x32xf32>
    %c0_131 = arith.constant 0 : index
    %c101 = arith.constant 101 : index
    %c0_132 = arith.constant 0 : index
    %190 = vector.load %arg4[%c0_131, %c101, %c0_132] : memref<2x102x32xf32, #tpu.memory_space<vmem>>, vector<1x1x32xf32>
    %191 = vector.shape_cast %190 : vector<1x1x32xf32> to vector<32xf32>
    %192 = vector.shape_cast %191 : vector<32xf32> to vector<1x32xf32>
    %193 = vector.broadcast %192 : vector<1x32xf32> to vector<24x32xf32>
    %194 = arith.addf %189, %193 : vector<24x32xf32>
    %195 = arith.addf %134, %194 : vector<24x32xf32>
    %c2_133 = arith.constant 2 : index
    %c0_134 = arith.constant 0 : index
    %c0_135 = arith.constant 0 : index
    %c0_136 = arith.constant 0 : index
    %196 = vector.load %arg7[%c2_133, %c0_134, %c0_135, %c0_136] : memref<4x1x24x32xf32, #tpu.memory_space<vmem>>, vector<1x1x24x32xf32>
    %197 = vector.shape_cast %196 : vector<1x1x24x32xf32> to vector<24x32xf32>
    %198 = vector.shape_cast %195 : vector<24x32xf32> to vector<1x1x24x32xf32>
    tpu.vector_store %arg7[%c2_133, %c0_134, %c0_135, %c0_136], %198 {strides = array<i32>} : memref<4x1x24x32xf32, #tpu.memory_space<vmem>>, vector<1x1x24x32xf32>,
    %c1_137 = arith.constant 1 : index
    %c96_138 = arith.constant 96 : index
    %c0_139 = arith.constant 0 : index
    %199 = vector.load %arg4[%c1_137, %c96_138, %c0_139] : memref<2x102x32xf32, #tpu.memory_space<vmem>>, vector<1x1x32xf32>
    %200 = vector.shape_cast %199 : vector<1x1x32xf32> to vector<32xf32>
    %c1_140 = arith.constant 1 : index
    %c97_141 = arith.constant 97 : index
    %c0_142 = arith.constant 0 : index
    %201 = vector.load %arg4[%c1_140, %c97_141, %c0_142] : memref<2x102x32xf32, #tpu.memory_space<vmem>>, vector<1x1x32xf32>
    %202 = vector.shape_cast %201 : vector<1x1x32xf32> to vector<32xf32>
    %cst_143 = arith.constant dense<0.000000e+00> : vector<24xf32>
    %203 = vector.multi_reduction <add>, %195, %cst_143 [1] : vector<24x32xf32> to vector<24xf32>
    %204 = vector.shape_cast %203 : vector<24xf32> to vector<24x1xf32>
    %cst_144 = arith.constant 3.200000e+01 : f32
    %205 = vector.broadcast %cst_144 : f32 to vector<24x1xf32>
    %206 = arith.divf %204, %205 : vector<24x1xf32>
    %207 = vector.broadcast %206 : vector<24x1xf32> to vector<24x32xf32>
    %208 = arith.subf %195, %207 : vector<24x32xf32>
    %209 = arith.mulf %208, %208 : vector<24x32xf32>
    %cst_145 = arith.constant dense<0.000000e+00> : vector<24xf32>
    %210 = vector.multi_reduction <add>, %209, %cst_145 [1] : vector<24x32xf32> to vector<24xf32>
    %211 = vector.shape_cast %210 : vector<24xf32> to vector<24x1xf32>
    %cst_146 = arith.constant 3.200000e+01 : f32
    %212 = vector.broadcast %cst_146 : f32 to vector<24x1xf32>
    %213 = arith.divf %211, %212 : vector<24x1xf32>
    %214 = vector.broadcast %206 : vector<24x1xf32> to vector<24x32xf32>
    %215 = arith.subf %195, %214 : vector<24x32xf32>
    %cst_147 = arith.constant 9.99999997E-7 : f32
    %216 = vector.broadcast %cst_147 : f32 to vector<24x1xf32>
    %217 = arith.addf %213, %216 : vector<24x1xf32>
    %218 = math.rsqrt %217 : vector<24x1xf32>
    %219 = vector.broadcast %218 : vector<24x1xf32> to vector<24x32xf32>
    %220 = arith.mulf %215, %219 : vector<24x32xf32>
    %221 = vector.shape_cast %200 : vector<32xf32> to vector<1x32xf32>
    %222 = vector.broadcast %221 : vector<1x32xf32> to vector<24x32xf32>
    %223 = arith.mulf %220, %222 : vector<24x32xf32>
    %224 = vector.shape_cast %202 : vector<32xf32> to vector<1x32xf32>
    %225 = vector.broadcast %224 : vector<1x32xf32> to vector<24x32xf32>
    %226 = arith.addf %223, %225 : vector<24x32xf32>
    %cst_148 = arith.constant 0.000000e+00 : f32
    %227 = vector.broadcast %cst_148 : f32 to vector<24x32xf32>
    %c1_149 = arith.constant 1 : index
    %c0_150 = arith.constant 0 : index
    %c0_151 = arith.constant 0 : index
    %c0_152 = arith.constant 0 : index
    %c0_153 = arith.constant 0 : index
    %228 = vector.load %arg3[%c1_149, %c0_150, %c0_151, %c0_152, %c0_153] : memref<2x3x2x33x16xf32, #tpu.memory_space<vmem>>, vector<1x1x1x32x16xf32>
    %229 = vector.shape_cast %228 : vector<1x1x1x32x16xf32> to vector<32x16xf32>
    %cst_154 = arith.constant dense<0.000000e+00> : vector<24x16xf32>
    %230 = tpu.matmul %226, %229, %cst_154 {dimension_numbers = #tpu.dot_dimension_numbers<[1], [0], [0], [1], [0, 0, 1, 1], [], []>} : vector<24x32xf32>, vector<32x16xf32>, vector<24x16xf32> -> vector<24x16xf32>
    %c1_155 = arith.constant 1 : index
    %c0_156 = arith.constant 0 : index
    %c0_157 = arith.constant 0 : index
    %c32_158 = arith.constant 32 : index
    %c0_159 = arith.constant 0 : index
    %231 = vector.load %arg3[%c1_155, %c0_156, %c0_157, %c32_158, %c0_159] : memref<2x3x2x33x16xf32, #tpu.memory_space<vmem>>, vector<1x1x1x1x16xf32>
    %232 = vector.shape_cast %231 : vector<1x1x1x1x16xf32> to vector<16xf32>
    %233 = vector.shape_cast %232 : vector<16xf32> to vector<1x16xf32>
    %234 = vector.broadcast %233 : vector<1x16xf32> to vector<24x16xf32>
    %235 = arith.addf %230, %234 : vector<24x16xf32>
    %c1_160 = arith.constant 1 : index
    %c1_161 = arith.constant 1 : index
    %c0_162 = arith.constant 0 : index
    %c0_163 = arith.constant 0 : index
    %c0_164 = arith.constant 0 : index
    %236 = vector.load %arg3[%c1_160, %c1_161, %c0_162, %c0_163, %c0_164] : memref<2x3x2x33x16xf32, #tpu.memory_space<vmem>>, vector<1x1x1x32x16xf32>
    %237 = vector.shape_cast %236 : vector<1x1x1x32x16xf32> to vector<32x16xf32>
    %cst_165 = arith.constant dense<0.000000e+00> : vector<24x16xf32>
    %238 = tpu.matmul %226, %237, %cst_165 {dimension_numbers = #tpu.dot_dimension_numbers<[1], [0], [0], [1], [0, 0, 1, 1], [], []>} : vector<24x32xf32>, vector<32x16xf32>, vector<24x16xf32> -> vector<24x16xf32>
    %c1_166 = arith.constant 1 : index
    %c1_167 = arith.constant 1 : index
    %c0_168 = arith.constant 0 : index
    %c32_169 = arith.constant 32 : index
    %c0_170 = arith.constant 0 : index
    %239 = vector.load %arg3[%c1_166, %c1_167, %c0_168, %c32_169, %c0_170] : memref<2x3x2x33x16xf32, #tpu.memory_space<vmem>>, vector<1x1x1x1x16xf32>
    %240 = vector.shape_cast %239 : vector<1x1x1x1x16xf32> to vector<16xf32>
    %241 = vector.shape_cast %240 : vector<16xf32> to vector<1x16xf32>
    %242 = vector.broadcast %241 : vector<1x16xf32> to vector<24x16xf32>
    %243 = arith.addf %238, %242 : vector<24x16xf32>
    %c1_171 = arith.constant 1 : index
    %c2_172 = arith.constant 2 : index
    %c0_173 = arith.constant 0 : index
    %c0_174 = arith.constant 0 : index
    %c0_175 = arith.constant 0 : index
    %244 = vector.load %arg3[%c1_171, %c2_172, %c0_173, %c0_174, %c0_175] : memref<2x3x2x33x16xf32, #tpu.memory_space<vmem>>, vector<1x1x1x32x16xf32>
    %245 = vector.shape_cast %244 : vector<1x1x1x32x16xf32> to vector<32x16xf32>
    %cst_176 = arith.constant dense<0.000000e+00> : vector<24x16xf32>
    %246 = tpu.matmul %226, %245, %cst_176 {dimension_numbers = #tpu.dot_dimension_numbers<[1], [0], [0], [1], [0, 0, 1, 1], [], []>} : vector<24x32xf32>, vector<32x16xf32>, vector<24x16xf32> -> vector<24x16xf32>
    %c1_177 = arith.constant 1 : index
    %c2_178 = arith.constant 2 : index
    %c0_179 = arith.constant 0 : index
    %c32_180 = arith.constant 32 : index
    %c0_181 = arith.constant 0 : index
    %247 = vector.load %arg3[%c1_177, %c2_178, %c0_179, %c32_180, %c0_181] : memref<2x3x2x33x16xf32, #tpu.memory_space<vmem>>, vector<1x1x1x1x16xf32>
    %248 = vector.shape_cast %247 : vector<1x1x1x1x16xf32> to vector<16xf32>
    %249 = vector.shape_cast %248 : vector<16xf32> to vector<1x16xf32>
    %250 = vector.broadcast %249 : vector<1x16xf32> to vector<24x16xf32>
    %251 = arith.addf %246, %250 : vector<24x16xf32>
    %cst_182 = arith.constant dense<0.000000e+00> : vector<24x24xf32>
    %252 = tpu.matmul %235, %243, %cst_182 {dimension_numbers = #tpu.dot_dimension_numbers<[1], [1], [0], [0], [0, 0, 1, 0], [], []>} : vector<24x16xf32>, vector<24x16xf32>, vector<24x24xf32> -> vector<24x24xf32>
    %cst_183 = arith.constant 2.500000e-01 : f32
    %253 = vector.broadcast %cst_183 : f32 to vector<24x24xf32>
    %254 = arith.mulf %252, %253 : vector<24x24xf32>
    %cst_184 = arith.constant -1.000000e+30 : f32
    %255 = vector.broadcast %cst_184 : f32 to vector<24x24xf32>
    %256 = arith.select %8, %254, %255 : vector<24x24xi1>, vector<24x24xf32>
    %cst_185 = arith.constant dense<0xFF800000> : vector<24xf32>
    %257 = vector.multi_reduction <maximumf>, %256, %cst_185 [1] : vector<24x24xf32> to vector<24xf32>
    %258 = vector.shape_cast %257 : vector<24xf32> to vector<24x1xf32>
    %259 = vector.broadcast %258 : vector<24x1xf32> to vector<24x24xf32>
    %260 = arith.subf %256, %259 : vector<24x24xf32>
    %261 = math.exp %260 : vector<24x24xf32>
    %cst_186 = arith.constant dense<0.000000e+00> : vector<24xf32>
    %262 = vector.multi_reduction <add>, %261, %cst_186 [1] : vector<24x24xf32> to vector<24xf32>
    %263 = vector.shape_cast %262 : vector<24xf32> to vector<24x1xf32>
    %264 = tpu.reciprocal %263 {approx = true} : vector<24x1xf32> -> vector<24x1xf32>
    %cst_187 = arith.constant dense<0.000000e+00> : vector<24x16xf32>
    %265 = tpu.matmul %261, %251, %cst_187 {dimension_numbers = #tpu.dot_dimension_numbers<[1], [0], [0], [1], [0, 0, 1, 1], [], []>} : vector<24x24xf32>, vector<24x16xf32>, vector<24x16xf32> -> vector<24x16xf32>
    %266 = vector.broadcast %264 : vector<24x1xf32> to vector<24x16xf32>
    %267 = arith.mulf %265, %266 : vector<24x16xf32>
    %c1_188 = arith.constant 1 : index
    %c0_189 = arith.constant 0 : index
    %c0_190 = arith.constant 0 : index
    %268 = vector.load %arg4[%c1_188, %c0_189, %c0_190] : memref<2x102x32xf32, #tpu.memory_space<vmem>>, vector<1x16x32xf32>
    %269 = vector.shape_cast %268 : vector<1x16x32xf32> to vector<16x32xf32>
    %cst_191 = arith.constant dense<0.000000e+00> : vector<24x32xf32>
    %270 = tpu.matmul %267, %269, %cst_191 {dimension_numbers = #tpu.dot_dimension_numbers<[1], [0], [0], [1], [0, 0, 1, 1], [], []>} : vector<24x16xf32>, vector<16x32xf32>, vector<24x32xf32> -> vector<24x32xf32>
    %271 = arith.addf %227, %270 : vector<24x32xf32>
    %c1_192 = arith.constant 1 : index
    %c0_193 = arith.constant 0 : index
    %c1_194 = arith.constant 1 : index
    %c0_195 = arith.constant 0 : index
    %c0_196 = arith.constant 0 : index
    %272 = vector.load %arg3[%c1_192, %c0_193, %c1_194, %c0_195, %c0_196] : memref<2x3x2x33x16xf32, #tpu.memory_space<vmem>>, vector<1x1x1x32x16xf32>
    %273 = vector.shape_cast %272 : vector<1x1x1x32x16xf32> to vector<32x16xf32>
    %cst_197 = arith.constant dense<0.000000e+00> : vector<24x16xf32>
    %274 = tpu.matmul %226, %273, %cst_197 {dimension_numbers = #tpu.dot_dimension_numbers<[1], [0], [0], [1], [0, 0, 1, 1], [], []>} : vector<24x32xf32>, vector<32x16xf32>, vector<24x16xf32> -> vector<24x16xf32>
    %c1_198 = arith.constant 1 : index
    %c0_199 = arith.constant 0 : index
    %c1_200 = arith.constant 1 : index
    %c32_201 = arith.constant 32 : index
    %c0_202 = arith.constant 0 : index
    %275 = vector.load %arg3[%c1_198, %c0_199, %c1_200, %c32_201, %c0_202] : memref<2x3x2x33x16xf32, #tpu.memory_space<vmem>>, vector<1x1x1x1x16xf32>
    %276 = vector.shape_cast %275 : vector<1x1x1x1x16xf32> to vector<16xf32>
    %277 = vector.shape_cast %276 : vector<16xf32> to vector<1x16xf32>
    %278 = vector.broadcast %277 : vector<1x16xf32> to vector<24x16xf32>
    %279 = arith.addf %274, %278 : vector<24x16xf32>
    %c1_203 = arith.constant 1 : index
    %c1_204 = arith.constant 1 : index
    %c1_205 = arith.constant 1 : index
    %c0_206 = arith.constant 0 : index
    %c0_207 = arith.constant 0 : index
    %280 = vector.load %arg3[%c1_203, %c1_204, %c1_205, %c0_206, %c0_207] : memref<2x3x2x33x16xf32, #tpu.memory_space<vmem>>, vector<1x1x1x32x16xf32>
    %281 = vector.shape_cast %280 : vector<1x1x1x32x16xf32> to vector<32x16xf32>
    %cst_208 = arith.constant dense<0.000000e+00> : vector<24x16xf32>
    %282 = tpu.matmul %226, %281, %cst_208 {dimension_numbers = #tpu.dot_dimension_numbers<[1], [0], [0], [1], [0, 0, 1, 1], [], []>} : vector<24x32xf32>, vector<32x16xf32>, vector<24x16xf32> -> vector<24x16xf32>
    %c1_209 = arith.constant 1 : index
    %c1_210 = arith.constant 1 : index
    %c1_211 = arith.constant 1 : index
    %c32_212 = arith.constant 32 : index
    %c0_213 = arith.constant 0 : index
    %283 = vector.load %arg3[%c1_209, %c1_210, %c1_211, %c32_212, %c0_213] : memref<2x3x2x33x16xf32, #tpu.memory_space<vmem>>, vector<1x1x1x1x16xf32>
    %284 = vector.shape_cast %283 : vector<1x1x1x1x16xf32> to vector<16xf32>
    %285 = vector.shape_cast %284 : vector<16xf32> to vector<1x16xf32>
    %286 = vector.broadcast %285 : vector<1x16xf32> to vector<24x16xf32>
    %287 = arith.addf %282, %286 : vector<24x16xf32>
    %c1_214 = arith.constant 1 : index
    %c2_215 = arith.constant 2 : index
    %c1_216 = arith.constant 1 : index
    %c0_217 = arith.constant 0 : index
    %c0_218 = arith.constant 0 : index
    %288 = vector.load %arg3[%c1_214, %c2_215, %c1_216, %c0_217, %c0_218] : memref<2x3x2x33x16xf32, #tpu.memory_space<vmem>>, vector<1x1x1x32x16xf32>
    %289 = vector.shape_cast %288 : vector<1x1x1x32x16xf32> to vector<32x16xf32>
    %cst_219 = arith.constant dense<0.000000e+00> : vector<24x16xf32>
    %290 = tpu.matmul %226, %289, %cst_219 {dimension_numbers = #tpu.dot_dimension_numbers<[1], [0], [0], [1], [0, 0, 1, 1], [], []>} : vector<24x32xf32>, vector<32x16xf32>, vector<24x16xf32> -> vector<24x16xf32>
    %c1_220 = arith.constant 1 : index
    %c2_221 = arith.constant 2 : index
    %c1_222 = arith.constant 1 : index
    %c32_223 = arith.constant 32 : index
    %c0_224 = arith.constant 0 : index
    %291 = vector.load %arg3[%c1_220, %c2_221, %c1_222, %c32_223, %c0_224] : memref<2x3x2x33x16xf32, #tpu.memory_space<vmem>>, vector<1x1x1x1x16xf32>
    %292 = vector.shape_cast %291 : vector<1x1x1x1x16xf32> to vector<16xf32>
    %293 = vector.shape_cast %292 : vector<16xf32> to vector<1x16xf32>
    %294 = vector.broadcast %293 : vector<1x16xf32> to vector<24x16xf32>
    %295 = arith.addf %290, %294 : vector<24x16xf32>
    %cst_225 = arith.constant dense<0.000000e+00> : vector<24x24xf32>
    %296 = tpu.matmul %279, %287, %cst_225 {dimension_numbers = #tpu.dot_dimension_numbers<[1], [1], [0], [0], [0, 0, 1, 0], [], []>} : vector<24x16xf32>, vector<24x16xf32>, vector<24x24xf32> -> vector<24x24xf32>
    %cst_226 = arith.constant 2.500000e-01 : f32
    %297 = vector.broadcast %cst_226 : f32 to vector<24x24xf32>
    %298 = arith.mulf %296, %297 : vector<24x24xf32>
    %cst_227 = arith.constant -1.000000e+30 : f32
    %299 = vector.broadcast %cst_227 : f32 to vector<24x24xf32>
    %300 = arith.select %8, %298, %299 : vector<24x24xi1>, vector<24x24xf32>
    %cst_228 = arith.constant dense<0xFF800000> : vector<24xf32>
    %301 = vector.multi_reduction <maximumf>, %300, %cst_228 [1] : vector<24x24xf32> to vector<24xf32>
    %302 = vector.shape_cast %301 : vector<24xf32> to vector<24x1xf32>
    %303 = vector.broadcast %302 : vector<24x1xf32> to vector<24x24xf32>
    %304 = arith.subf %300, %303 : vector<24x24xf32>
    %305 = math.exp %304 : vector<24x24xf32>
    %cst_229 = arith.constant dense<0.000000e+00> : vector<24xf32>
    %306 = vector.multi_reduction <add>, %305, %cst_229 [1] : vector<24x24xf32> to vector<24xf32>
    %307 = vector.shape_cast %306 : vector<24xf32> to vector<24x1xf32>
    %308 = tpu.reciprocal %307 {approx = true} : vector<24x1xf32> -> vector<24x1xf32>
    %cst_230 = arith.constant dense<0.000000e+00> : vector<24x16xf32>
    %309 = tpu.matmul %305, %295, %cst_230 {dimension_numbers = #tpu.dot_dimension_numbers<[1], [0], [0], [1], [0, 0, 1, 1], [], []>} : vector<24x24xf32>, vector<24x16xf32>, vector<24x16xf32> -> vector<24x16xf32>
    %310 = vector.broadcast %308 : vector<24x1xf32> to vector<24x16xf32>
    %311 = arith.mulf %309, %310 : vector<24x16xf32>
    %c1_231 = arith.constant 1 : index
    %c16_232 = arith.constant 16 : index
    %c0_233 = arith.constant 0 : index
    %312 = vector.load %arg4[%c1_231, %c16_232, %c0_233] : memref<2x102x32xf32, #tpu.memory_space<vmem>>, vector<1x16x32xf32>
    %313 = vector.shape_cast %312 : vector<1x16x32xf32> to vector<16x32xf32>
    %cst_234 = arith.constant dense<0.000000e+00> : vector<24x32xf32>
    %314 = tpu.matmul %311, %313, %cst_234 {dimension_numbers = #tpu.dot_dimension_numbers<[1], [0], [0], [1], [0, 0, 1, 1], [], []>} : vector<24x16xf32>, vector<16x32xf32>, vector<24x32xf32> -> vector<24x32xf32>
    %315 = arith.addf %271, %314 : vector<24x32xf32>
    %316 = arith.addf %195, %315 : vector<24x32xf32>
    %c1_235 = arith.constant 1 : index
    %c100_236 = arith.constant 100 : index
    %c0_237 = arith.constant 0 : index
    %317 = vector.load %arg4[%c1_235, %c100_236, %c0_237] : memref<2x102x32xf32, #tpu.memory_space<vmem>>, vector<1x1x32xf32>
    %318 = vector.shape_cast %317 : vector<1x1x32xf32> to vector<32xf32>
    %319 = vector.shape_cast %318 : vector<32xf32> to vector<1x32xf32>
    %320 = vector.broadcast %319 : vector<1x32xf32> to vector<24x32xf32>
    %321 = arith.addf %316, %320 : vector<24x32xf32>
    %c3 = arith.constant 3 : index
    %c0_238 = arith.constant 0 : index
    %c0_239 = arith.constant 0 : index
    %c0_240 = arith.constant 0 : index
    %322 = vector.load %arg7[%c3, %c0_238, %c0_239, %c0_240] : memref<4x1x24x32xf32, #tpu.memory_space<vmem>>, vector<1x1x24x32xf32>
    %323 = vector.shape_cast %322 : vector<1x1x24x32xf32> to vector<24x32xf32>
    %324 = vector.shape_cast %321 : vector<24x32xf32> to vector<1x1x24x32xf32>
    tpu.vector_store %arg7[%c3, %c0_238, %c0_239, %c0_240], %324 {strides = array<i32>} : memref<4x1x24x32xf32, #tpu.memory_space<vmem>>, vector<1x1x24x32xf32>,
    %c1_241 = arith.constant 1 : index
    %c98_242 = arith.constant 98 : index
    %c0_243 = arith.constant 0 : index
    %325 = vector.load %arg4[%c1_241, %c98_242, %c0_243] : memref<2x102x32xf32, #tpu.memory_space<vmem>>, vector<1x1x32xf32>
    %326 = vector.shape_cast %325 : vector<1x1x32xf32> to vector<32xf32>
    %c1_244 = arith.constant 1 : index
    %c99_245 = arith.constant 99 : index
    %c0_246 = arith.constant 0 : index
    %327 = vector.load %arg4[%c1_244, %c99_245, %c0_246] : memref<2x102x32xf32, #tpu.memory_space<vmem>>, vector<1x1x32xf32>
    %328 = vector.shape_cast %327 : vector<1x1x32xf32> to vector<32xf32>
    %cst_247 = arith.constant dense<0.000000e+00> : vector<24xf32>
    %329 = vector.multi_reduction <add>, %321, %cst_247 [1] : vector<24x32xf32> to vector<24xf32>
    %330 = vector.shape_cast %329 : vector<24xf32> to vector<24x1xf32>
    %cst_248 = arith.constant 3.200000e+01 : f32
    %331 = vector.broadcast %cst_248 : f32 to vector<24x1xf32>
    %332 = arith.divf %330, %331 : vector<24x1xf32>
    %333 = vector.broadcast %332 : vector<24x1xf32> to vector<24x32xf32>
    %334 = arith.subf %321, %333 : vector<24x32xf32>
    %335 = arith.mulf %334, %334 : vector<24x32xf32>
    %cst_249 = arith.constant dense<0.000000e+00> : vector<24xf32>
    %336 = vector.multi_reduction <add>, %335, %cst_249 [1] : vector<24x32xf32> to vector<24xf32>
    %337 = vector.shape_cast %336 : vector<24xf32> to vector<24x1xf32>
    %cst_250 = arith.constant 3.200000e+01 : f32
    %338 = vector.broadcast %cst_250 : f32 to vector<24x1xf32>
    %339 = arith.divf %337, %338 : vector<24x1xf32>
    %340 = vector.broadcast %332 : vector<24x1xf32> to vector<24x32xf32>
    %341 = arith.subf %321, %340 : vector<24x32xf32>
    %cst_251 = arith.constant 9.99999997E-7 : f32
    %342 = vector.broadcast %cst_251 : f32 to vector<24x1xf32>
    %343 = arith.addf %339, %342 : vector<24x1xf32>
    %344 = math.rsqrt %343 : vector<24x1xf32>
    %345 = vector.broadcast %344 : vector<24x1xf32> to vector<24x32xf32>
    %346 = arith.mulf %341, %345 : vector<24x32xf32>
    %347 = vector.shape_cast %326 : vector<32xf32> to vector<1x32xf32>
    %348 = vector.broadcast %347 : vector<1x32xf32> to vector<24x32xf32>
    %349 = arith.mulf %346, %348 : vector<24x32xf32>
    %350 = vector.shape_cast %328 : vector<32xf32> to vector<1x32xf32>
    %351 = vector.broadcast %350 : vector<1x32xf32> to vector<24x32xf32>
    %352 = arith.addf %349, %351 : vector<24x32xf32>
    %c1_252 = arith.constant 1 : index
    %c0_253 = arith.constant 0 : index
    %c0_254 = arith.constant 0 : index
    %353 = vector.load %arg5[%c1_252, %c0_253, %c0_254] : memref<2x33x64xf32, #tpu.memory_space<vmem>>, vector<1x32x64xf32>
    %354 = vector.shape_cast %353 : vector<1x32x64xf32> to vector<32x64xf32>
    %cst_255 = arith.constant dense<0.000000e+00> : vector<24x64xf32>
    %355 = tpu.matmul %352, %354, %cst_255 {dimension_numbers = #tpu.dot_dimension_numbers<[1], [0], [0], [1], [0, 0, 1, 1], [], []>} : vector<24x32xf32>, vector<32x64xf32>, vector<24x64xf32> -> vector<24x64xf32>
    %c1_256 = arith.constant 1 : index
    %c32_257 = arith.constant 32 : index
    %c0_258 = arith.constant 0 : index
    %356 = vector.load %arg5[%c1_256, %c32_257, %c0_258] : memref<2x33x64xf32, #tpu.memory_space<vmem>>, vector<1x1x64xf32>
    %357 = vector.shape_cast %356 : vector<1x1x64xf32> to vector<64xf32>
    %358 = vector.shape_cast %357 : vector<64xf32> to vector<1x64xf32>
    %359 = vector.broadcast %358 : vector<1x64xf32> to vector<24x64xf32>
    %360 = arith.addf %355, %359 : vector<24x64xf32>
    %361 = arith.mulf %360, %360 : vector<24x64xf32>
    %362 = arith.mulf %360, %361 : vector<24x64xf32>
    %cst_259 = arith.constant 4.471500e-02 : f32
    %363 = vector.broadcast %cst_259 : f32 to vector<24x64xf32>
    %364 = arith.mulf %363, %362 : vector<24x64xf32>
    %365 = arith.addf %360, %364 : vector<24x64xf32>
    %cst_260 = arith.constant 0.797884583 : f32
    %366 = vector.broadcast %cst_260 : f32 to vector<24x64xf32>
    %367 = arith.mulf %366, %365 : vector<24x64xf32>
    %368 = math.tanh %367 : vector<24x64xf32>
    %cst_261 = arith.constant 1.000000e+00 : f32
    %369 = vector.broadcast %cst_261 : f32 to vector<24x64xf32>
    %370 = arith.addf %369, %368 : vector<24x64xf32>
    %cst_262 = arith.constant 5.000000e-01 : f32
    %371 = vector.broadcast %cst_262 : f32 to vector<24x64xf32>
    %372 = arith.mulf %371, %370 : vector<24x64xf32>
    %373 = arith.mulf %360, %372 : vector<24x64xf32>
    %c1_263 = arith.constant 1 : index
    %c32_264 = arith.constant 32 : index
    %c0_265 = arith.constant 0 : index
    %374 = vector.load %arg4[%c1_263, %c32_264, %c0_265] : memref<2x102x32xf32, #tpu.memory_space<vmem>>, vector<1x64x32xf32>
    %375 = vector.shape_cast %374 : vector<1x64x32xf32> to vector<64x32xf32>
    %cst_266 = arith.constant dense<0.000000e+00> : vector<24x32xf32>
    %376 = tpu.matmul %373, %375, %cst_266 {dimension_numbers = #tpu.dot_dimension_numbers<[1], [0], [0], [1], [0, 0, 1, 1], [], []>} : vector<24x64xf32>, vector<64x32xf32>, vector<24x32xf32> -> vector<24x32xf32>
    %c1_267 = arith.constant 1 : index
    %c101_268 = arith.constant 101 : index
    %c0_269 = arith.constant 0 : index
    %377 = vector.load %arg4[%c1_267, %c101_268, %c0_269] : memref<2x102x32xf32, #tpu.memory_space<vmem>>, vector<1x1x32xf32>
    %378 = vector.shape_cast %377 : vector<1x1x32xf32> to vector<32xf32>
    %379 = vector.shape_cast %378 : vector<32xf32> to vector<1x32xf32>
    %380 = vector.broadcast %379 : vector<1x32xf32> to vector<24x32xf32>
    %381 = arith.addf %376, %380 : vector<24x32xf32>
    %382 = arith.addf %321, %381 : vector<24x32xf32>
    %383 = vector.extract_strided_slice %382 {offsets = [0, 0], sizes = [8, 32], strides = [1, 1]} : vector<24x32xf32> to vector<8x32xf32>
    %c88 = arith.constant 88 : index
    %c0_270 = arith.constant 0 : index
    %384 = vector.load %arg2[%c88, %c0_270] : memref<90x32xf32, #tpu.memory_space<vmem>>, vector<1x32xf32>
    %385 = vector.shape_cast %384 : vector<1x32xf32> to vector<32xf32>
    %c89 = arith.constant 89 : index
    %c0_271 = arith.constant 0 : index
    %386 = vector.load %arg2[%c89, %c0_271] : memref<90x32xf32, #tpu.memory_space<vmem>>, vector<1x32xf32>
    %387 = vector.shape_cast %386 : vector<1x32xf32> to vector<32xf32>
    %cst_272 = arith.constant dense<0.000000e+00> : vector<8xf32>
    %388 = vector.multi_reduction <add>, %383, %cst_272 [1] : vector<8x32xf32> to vector<8xf32>
    %389 = vector.shape_cast %388 : vector<8xf32> to vector<8x1xf32>
    %cst_273 = arith.constant 3.200000e+01 : f32
    %390 = vector.broadcast %cst_273 : f32 to vector<8x1xf32>
    %391 = arith.divf %389, %390 : vector<8x1xf32>
    %392 = vector.broadcast %391 : vector<8x1xf32> to vector<8x32xf32>
    %393 = arith.subf %383, %392 : vector<8x32xf32>
    %394 = arith.mulf %393, %393 : vector<8x32xf32>
    %cst_274 = arith.constant dense<0.000000e+00> : vector<8xf32>
    %395 = vector.multi_reduction <add>, %394, %cst_274 [1] : vector<8x32xf32> to vector<8xf32>
    %396 = vector.shape_cast %395 : vector<8xf32> to vector<8x1xf32>
    %cst_275 = arith.constant 3.200000e+01 : f32
    %397 = vector.broadcast %cst_275 : f32 to vector<8x1xf32>
    %398 = arith.divf %396, %397 : vector<8x1xf32>
    %399 = vector.broadcast %391 : vector<8x1xf32> to vector<8x32xf32>
    %400 = arith.subf %383, %399 : vector<8x32xf32>
    %cst_276 = arith.constant 9.99999997E-7 : f32
    %401 = vector.broadcast %cst_276 : f32 to vector<8x1xf32>
    %402 = arith.addf %398, %401 : vector<8x1xf32>
    %403 = math.rsqrt %402 : vector<8x1xf32>
    %404 = vector.broadcast %403 : vector<8x1xf32> to vector<8x32xf32>
    %405 = arith.mulf %400, %404 : vector<8x32xf32>
    %406 = vector.shape_cast %385 : vector<32xf32> to vector<1x32xf32>
    %407 = vector.broadcast %406 : vector<1x32xf32> to vector<8x32xf32>
    %408 = arith.mulf %405, %407 : vector<8x32xf32>
    %409 = vector.shape_cast %387 : vector<32xf32> to vector<1x32xf32>
    %410 = vector.broadcast %409 : vector<1x32xf32> to vector<8x32xf32>
    %411 = arith.addf %408, %410 : vector<8x32xf32>
    %c0_277 = arith.constant 0 : index
    %c0_278 = arith.constant 0 : index
    %412 = vector.load %arg6[%c0_277, %c0_278] : memref<33x128xf32, #tpu.memory_space<vmem>>, vector<32x128xf32>
    %cst_279 = arith.constant dense<0.000000e+00> : vector<8x128xf32>
    %413 = tpu.matmul %411, %412, %cst_279 {dimension_numbers = #tpu.dot_dimension_numbers<[1], [0], [0], [1], [0, 0, 1, 1], [], []>} : vector<8x32xf32>, vector<32x128xf32>, vector<8x128xf32> -> vector<8x128xf32>
    %c32_280 = arith.constant 32 : index
    %c0_281 = arith.constant 0 : index
    %414 = vector.load %arg6[%c32_280, %c0_281] : memref<33x128xf32, #tpu.memory_space<vmem>>, vector<1x128xf32>
    %415 = vector.shape_cast %414 : vector<1x128xf32> to vector<128xf32>
    %416 = vector.shape_cast %415 : vector<128xf32> to vector<1x128xf32>
    %417 = vector.broadcast %416 : vector<1x128xf32> to vector<8x128xf32>
    %418 = arith.addf %413, %417 : vector<8x128xf32>
    %c0_282 = arith.constant 0 : index
    %c0_283 = arith.constant 0 : index
    %c0_284 = arith.constant 0 : index
    %419 = vector.load %arg8[%c0_282, %c0_283, %c0_284] : memref<1x8x128xf32, #tpu.memory_space<vmem>>, vector<1x8x128xf32>
    %420 = vector.shape_cast %419 : vector<1x8x128xf32> to vector<8x128xf32>
    %421 = vector.shape_cast %418 : vector<8x128xf32> to vector<1x8x128xf32>
    tpu.vector_store %arg8[%c0_282, %c0_283, %c0_284], %421 {strides = array<i32>} : memref<1x8x128xf32, #tpu.memory_space<vmem>>, vector<1x8x128xf32>,
    return
  }
  func.func @transform_0(%arg0: i32) -> (i32, i32, i32) {
    %c0_i32 = arith.constant 0 : i32
    %c0_i32_0 = arith.constant 0 : i32
    %c0_i32_1 = arith.constant 0 : i32
    return %arg0, %c0_i32, %c0_i32_0 : i32, i32, i32
  }
  func.func @transform_1(%arg0: i32) -> (i32, i32) {
    %c0_i32 = arith.constant 0 : i32
    %c0_i32_0 = arith.constant 0 : i32
    %c0_i32_1 = arith.constant 0 : i32
    return %c0_i32, %c0_i32_0 : i32, i32
  }
  func.func @transform_2(%arg0: i32) -> (i32, i32, i32, i32, i32) {
    %c0_i32 = arith.constant 0 : i32
    %c0_i32_0 = arith.constant 0 : i32
    %c0_i32_1 = arith.constant 0 : i32
    %c0_i32_2 = arith.constant 0 : i32
    %c0_i32_3 = arith.constant 0 : i32
    %c0_i32_4 = arith.constant 0 : i32
    return %c0_i32, %c0_i32_0, %c0_i32_1, %c0_i32_2, %c0_i32_3 : i32, i32, i32, i32, i32
  }
  func.func @transform_3(%arg0: i32) -> (i32, i32, i32) {
    %c0_i32 = arith.constant 0 : i32
    %c0_i32_0 = arith.constant 0 : i32
    %c0_i32_1 = arith.constant 0 : i32
    %c0_i32_2 = arith.constant 0 : i32
    return %c0_i32, %c0_i32_0, %c0_i32_1 : i32, i32, i32
  }
  func.func @transform_4(%arg0: i32) -> (i32, i32, i32) {
    %c0_i32 = arith.constant 0 : i32
    %c0_i32_0 = arith.constant 0 : i32
    %c0_i32_1 = arith.constant 0 : i32
    %c0_i32_2 = arith.constant 0 : i32
    return %c0_i32, %c0_i32_0, %c0_i32_1 : i32, i32, i32
  }
  func.func @transform_5(%arg0: i32) -> (i32, i32) {
    %c0_i32 = arith.constant 0 : i32
    %c0_i32_0 = arith.constant 0 : i32
    %c0_i32_1 = arith.constant 0 : i32
    return %c0_i32, %c0_i32_0 : i32, i32
  }
  func.func @transform_6(%arg0: i32) -> (i32, i32, i32, i32) {
    %c0_i32 = arith.constant 0 : i32
    %c0_i32_0 = arith.constant 0 : i32
    %c0_i32_1 = arith.constant 0 : i32
    %c0_i32_2 = arith.constant 0 : i32
    return %c0_i32, %arg0, %c0_i32_0, %c0_i32_1 : i32, i32, i32, i32
  }
  func.func @transform_7(%arg0: i32) -> (i32, i32, i32) {
    %c0_i32 = arith.constant 0 : i32
    %c0_i32_0 = arith.constant 0 : i32
    %c0_i32_1 = arith.constant 0 : i32
    return %arg0, %c0_i32, %c0_i32_0 : i32, i32, i32
  }
}

</mosaic_0001>

<llo_original>
// kernel: vit_forward_fused.1
$region0: #{vit_forward_fused.1}
  #allocation0 [shape = 'u32[]', space=smem, size = 0x4, offset = 0x4, fixed_abs, tag = 'smem constant byte address 0x4 - core index']
  #allocation1 [shape = 'u32[144,128]{1,0:T(1,128)}', space=vmem, size = 0x12000, scoped, tag = 'internal scratch']
  %s0 = inlined_call_operand.vmem [shape: f32[2,24,64], index: 0, kind: input, shape index: {}]
  %s1 = inlined_call_operand.vmem [shape: f32[90,32], index: 1, kind: input, shape index: {}]
  %s2 = inlined_call_operand.vmem [shape: f32[2,3,2,33,16], index: 2, kind: input, shape index: {}]
  %s3 = inlined_call_operand.vmem [shape: f32[2,102,32], index: 3, kind: input, shape index: {}]
  %s4 = inlined_call_operand.vmem [shape: f32[2,33,64], index: 4, kind: input, shape index: {}]
  %s5 = inlined_call_operand.vmem [shape: f32[33,128], index: 5, kind: input, shape index: {}]
  %s6 = inlined_call_operand.vmem [shape: f32[4,2,24,32], index: 6, kind: output, shape index: {0}]
  %s7 = inlined_call_operand.vmem [shape: f32[2,8,128], index: 7, kind: output, shape index: {1}]
  %8 = xla_tuple %s6, %s7
  %s9 = sld [smem:[#allocation0]]
  $region99: #{vit_forward_fused.1} parent=0
    _
  %s11 = ssub.s32 1, %s9
  %s12 = scalar_select 0, %s11, %s9
  $region1: #{vit_forward_fused.1} parent=0
    #allocation2 [shape = 'u8[98304]{0}', space=vmem, size = 0x18000, scoped, tag = 'output window, operand 0']
    loop: start=0, step=1, limit=4
    $region2: #{vit_forward_fused.1} parent=1 // loop_pre_header
      _
    $region3: #{vit_forward_fused.1} parent=1 // loop_header
      %s14 = sphi 0, %s18
      %p15 = scmp.ge.s32.totalorder %s14, 4
      %s24 = sphi 0, %s26
      %s27 = sphi 0, %s24
      %s28 = sphi 0, %s27
      %s44 = sphi 0, %s28
      %s48 = sphi 0, %s48
      %s50 = sphi 0, %s48
      %s51 = sphi 0, %s50
      %s65 = sphi 0, %s51
      %s69 = sphi 0, %s69
      %s71 = sphi 0, %s69
      %s72 = sphi 0, %s71
      %s86 = sphi 0, %s72
      %s90 = sphi 0, %s90
      %s92 = sphi 0, %s90
      %s93 = sphi 0, %s92
      %s107 = sphi 0, %s93
      %s111 = sphi 0, %s111
      %s113 = sphi 0, %s111
      %s114 = sphi 0, %s113
      %s128 = sphi 0, %s114
      %s132 = sphi 0, %s132
      %s134 = sphi 0, %s132
      %s135 = sphi 0, %s134
      %s149 = sphi 0, %s135
      %s155 = sphi 0, %s157
      %s158 = sphi 0, %s155
      %s159 = sphi 0, %s158
      %s175 = sphi 0, %s159
      %s181 = sphi 0, %s183
      %s184 = sphi 0, %s181
      %s185 = sphi 0, %s184
      %s201 = sphi 0, %s185
    $region4: #{vit_forward_fused.1} parent=1 // loop_header_branch
      %17 = sbr.rel (%p15) target = $region8
    $region5: #{vit_forward_fused.1} parent=1 // loop_body
      %s19 = ssub.s32 %s14, 1
      %s20 = ssub.s32 %s14, 2
      %s21 = sadd.s32 %s14, 1
      %s22 = ssub.s32 %s14, %s21
      %p23 = scmp.eq.s32.totalorder %s22, 0
      %s25 = sadd.s32 %s24, 1
      %s26 = scalar_select %p23, %s24, %s25
      %p29 = pneg %p23
      %p30 = scmp.eq.s32.totalorder %s14, 1
      %p31 = por %p29, %p30
      %p32 = scmp.ne.s32.totalorder %s24, %s27
      %p33 = scmp.eq.s32.totalorder %s14, 0
      %p34 = por %p32, %p33
      %p35 = scmp.ne.s32.totalorder %s24, %s27
      %p36 = scmp.eq.s32.totalorder %s19, 1
      %p37 = por %p35, %p36
      %p38 = scmp.ne.s32.totalorder %s27, %s28
      %p39 = scmp.eq.s32.totalorder %s19, 0
      %p40 = por %p38, %p39
      %p41 = scmp.ne.s32.totalorder %s27, %s28
      %p42 = scmp.eq.s32.totalorder %s20, 1
      %p43 = por %p41, %p42
      %p45 = scmp.ne.s32.totalorder %s28, %s44
      %p46 = scmp.eq.s32.totalorder %s20, 0
      %p47 = por %p45, %p46
      %s49 = sadd.s32 %s48, 1
      %p52 = scmp.eq.s32.totalorder %s14, 1
      %p53 = scmp.ne.s32.totalorder %s48, %s50
      %p54 = scmp.eq.s32.totalorder %s14, 0
      %p55 = por %p53, %p54
      %p56 = scmp.ne.s32.totalorder %s48, %s50
      %p57 = scmp.eq.s32.totalorder %s19, 1
      %p58 = por %p56, %p57
      %p59 = scmp.ne.s32.totalorder %s50, %s51
      %p60 = scmp.eq.s32.totalorder %s19, 0
      %p61 = por %p59, %p60
      %p62 = scmp.ne.s32.totalorder %s50, %s51
      %p63 = scmp.eq.s32.totalorder %s20, 1
      %p64 = por %p62, %p63
      %p66 = scmp.ne.s32.totalorder %s51, %s65
      %p67 = scmp.eq.s32.totalorder %s20, 0
      %p68 = por %p66, %p67
      %s70 = sadd.s32 %s69, 1
      %p73 = scmp.eq.s32.totalorder %s14, 1
      %p74 = scmp.ne.s32.totalorder %s69, %s71
      %p75 = scmp.eq.s32.totalorder %s14, 0
      %p76 = por %p74, %p75
      %p77 = scmp.ne.s32.totalorder %s69, %s71
      %p78 = scmp.eq.s32.totalorder %s19, 1
      %p79 = por %p77, %p78
      %p80 = scmp.ne.s32.totalorder %s71, %s72
      %p81 = scmp.eq.s32.totalorder %s19, 0
      %p82 = por %p80, %p81
      %p83 = scmp.ne.s32.totalorder %s71, %s72
      %p84 = scmp.eq.s32.totalorder %s20, 1
      %p85 = por %p83, %p84
      %p87 = scmp.ne.s32.totalorder %s72, %s86
      %p88 = scmp.eq.s32.totalorder %s20, 0
      %p89 = por %p87, %p88
      %s91 = sadd.s32 %s90, 1
      %p94 = scmp.eq.s32.totalorder %s14, 1
      %p95 = scmp.ne.s32.totalorder %s90, %s92
      %p96 = scmp.eq.s32.totalorder %s14, 0
      %p97 = por %p95, %p96
      %p98 = scmp.ne.s32.totalorder %s90, %s92
      %p99 = scmp.eq.s32.totalorder %s19, 1
      %p100 = por %p98, %p99
      %p101 = scmp.ne.s32.totalorder %s92, %s93
      %p102 = scmp.eq.s32.totalorder %s19, 0
      %p103 = por %p101, %p102
      %p104 = scmp.ne.s32.totalorder %s92, %s93
      %p105 = scmp.eq.s32.totalorder %s20, 1
      %p106 = por %p104, %p105
      %p108 = scmp.ne.s32.totalorder %s93, %s107
      %p109 = scmp.eq.s32.totalorder %s20, 0
      %p110 = por %p108, %p109
      %s112 = sadd.s32 %s111, 1
      %p115 = scmp.eq.s32.totalorder %s14, 1
      %p116 = scmp.ne.s32.totalorder %s111, %s113
      %p117 = scmp.eq.s32.totalorder %s14, 0
      %p118 = por %p116, %p117
      %p119 = scmp.ne.s32.totalorder %s111, %s113
      %p120 = scmp.eq.s32.totalorder %s19, 1
      %p121 = por %p119, %p120
      %p122 = scmp.ne.s32.totalorder %s113, %s114
      %p123 = scmp.eq.s32.totalorder %s19, 0
      %p124 = por %p122, %p123
      %p125 = scmp.ne.s32.totalorder %s113, %s114
      %p126 = scmp.eq.s32.totalorder %s20, 1
      %p127 = por %p125, %p126
      %p129 = scmp.ne.s32.totalorder %s114, %s128
      %p130 = scmp.eq.s32.totalorder %s20, 0
      %p131 = por %p129, %p130
      %s133 = sadd.s32 %s132, 1
      %p136 = scmp.eq.s32.totalorder %s14, 1
      %p137 = scmp.ne.s32.totalorder %s132, %s134
      %p138 = scmp.eq.s32.totalorder %s14, 0
      %p139 = por %p137, %p138
      %p140 = scmp.ne.s32.totalorder %s132, %s134
      %p141 = scmp.eq.s32.totalorder %s19, 1
      %p142 = por %p140, %p141
      %p143 = scmp.ne.s32.totalorder %s134, %s135
      %p144 = scmp.eq.s32.totalorder %s19, 0
      %p145 = por %p143, %p144
      %p146 = scmp.ne.s32.totalorder %s134, %s135
      %p147 = scmp.eq.s32.totalorder %s20, 1
      %p148 = por %p146, %p147
      %p150 = scmp.ne.s32.totalorder %s135, %s149
      %p151 = scmp.eq.s32.totalorder %s20, 0
      %p152 = por %p150, %p151
      %s153 = ssub.s32 %s14, %s21
      %p154 = scmp.eq.s32.totalorder %s153, 0
      %s156 = sadd.s32 %s155, 1
      %s157 = scalar_select %p154, %s155, %s156
      %p160 = pneg %p154
      %p161 = scmp.eq.s32.totalorder %s14, 1
      %p162 = por %p160, %p161
      %p163 = scmp.ne.s32.totalorder %s155, %s158
      %p164 = scmp.eq.s32.totalorder %s14, 0
      %p165 = por %p163, %p164
      %p166 = scmp.ne.s32.totalorder %s155, %s158
      %p167 = scmp.eq.s32.totalorder %s19, 1
      %p168 = por %p166, %p167
      %p169 = scmp.ne.s32.totalorder %s158, %s159
      %p170 = scmp.eq.s32.totalorder %s19, 0
      %p171 = por %p169, %p170
      %p172 = scmp.ne.s32.totalorder %s158, %s159
      %p173 = scmp.eq.s32.totalorder %s20, 1
      %p174 = por %p172, %p173
      %p176 = scmp.ne.s32.totalorder %s159, %s175
      %p177 = scmp.eq.s32.totalorder %s20, 0
      %p178 = por %p176, %p177
      %s179 = ssub.s32 %s14, %s21
      %p180 = scmp.eq.s32.totalorder %s179, 0
      %s182 = sadd.s32 %s181, 1
      %s183 = scalar_select %p180, %s181, %s182
      %p186 = pneg %p180
      %p187 = scmp.eq.s32.totalorder %s14, 1
      %p188 = por %p186, %p187
      %p189 = scmp.ne.s32.totalorder %s181, %s184
      %p190 = scmp.eq.s32.totalorder %s14, 0
      %p191 = por %p189, %p190
      %p192 = scmp.ne.s32.totalorder %s181, %s184
      %p193 = scmp.eq.s32.totalorder %s19, 1
      %p194 = por %p192, %p193
      %p195 = scmp.ne.s32.totalorder %s184, %s185
      %p196 = scmp.eq.s32.totalorder %s19, 0
      %p197 = por %p195, %p196
      %p198 = scmp.ne.s32.totalorder %s184, %s185
      %p199 = scmp.eq.s32.totalorder %s20, 1
      %p200 = por %p198, %p199
      %p202 = scmp.ne.s32.totalorder %s185, %s201
      %p203 = scmp.eq.s32.totalorder %s20, 0
      %p204 = por %p202, %p203
      %p205 = scmp.le.s32.totalorder 1, %s14
      %p206 = scmp.lt.s32.totalorder %s14, 3
      %p207 = pnand %p205, %p206
      %p208 = pneg %p207
      // Predicated region
      $region9: #{vit_forward_fused.1} parent=5 // pred_check
        _
      $region10: #{vit_forward_fused.1} parent=5 // pred_check_branch
        %210 = sbr.rel (%p207) target = $region12
      $region11: #{vit_forward_fused.1} parent=5 // pred_region
        %s211 = ssub.s32 %s14, 1
        // Predicated region
        $region13: #{vit_forward_fused.1} parent=11 // pred_check
          %p212 = pneg %p61
        $region14: #{vit_forward_fused.1} parent=11 // pred_check_branch
          %214 = sbr.rel (%p212) target = $region16
        $region15: #{vit_forward_fused.1} parent=11 // pred_region
          _
        $region16: #{vit_forward_fused.1} parent=11 // pred_fallthru
          _
        // Predicated region
        $region17: #{vit_forward_fused.1} parent=11 // pred_check
          %p215 = pneg %p82
        $region18: #{vit_forward_fused.1} parent=11 // pred_check_branch
          %217 = sbr.rel (%p215) target = $region20
        $region19: #{vit_forward_fused.1} parent=11 // pred_region
          _
        $region20: #{vit_forward_fused.1} parent=11 // pred_fallthru
          _
        // Predicated region
        $region21: #{vit_forward_fused.1} parent=11 // pred_check
          %p218 = pneg %p103
        $region22: #{vit_forward_fused.1} parent=11 // pred_check_branch
          %220 = sbr.rel (%p218) target = $region24
        $region23: #{vit_forward_fused.1} parent=11 // pred_region
          _
        $region24: #{vit_forward_fused.1} parent=11 // pred_fallthru
          _
        // Predicated region
        $region25: #{vit_forward_fused.1} parent=11 // pred_check
          %p221 = pneg %p124
        $region26: #{vit_forward_fused.1} parent=11 // pred_check_branch
          %223 = sbr.rel (%p221) target = $region28
        $region27: #{vit_forward_fused.1} parent=11 // pred_region
          _
        $region28: #{vit_forward_fused.1} parent=11 // pred_fallthru
          _
        // Predicated region
        $region29: #{vit_forward_fused.1} parent=11 // pred_check
          %p224 = pneg %p145
        $region30: #{vit_forward_fused.1} parent=11 // pred_check_branch
          %226 = sbr.rel (%p224) target = $region32
        $region31: #{vit_forward_fused.1} parent=11 // pred_region
          _
        $region32: #{vit_forward_fused.1} parent=11 // pred_fallthru
          _
      $region12: #{vit_forward_fused.1} parent=5 // pred_fallthru
        _
      %p227 = scmp.lt.s32.totalorder %s14, 2
      // Predicated region
      $region33: #{vit_forward_fused.1} parent=5 // pred_check
        %p228 = pneg %p227
      $region34: #{vit_forward_fused.1} parent=5 // pred_check_branch
        %230 = sbr.rel (%p228) target = $region36
      $region35: #{vit_forward_fused.1} parent=5 // pred_region
        // Predicated region
        $region37: #{vit_forward_fused.1} parent=35 // pred_check
          %p231 = pneg %p34
        $region38: #{vit_forward_fused.1} parent=35 // pred_check_branch
          %233 = sbr.rel (%p231) target = $region40
        $region39: #{vit_forward_fused.1} parent=35 // pred_region
          %p234 = scmp.lt.s32.totalorder %s14, 1
          %s235 = scalar_select %p234, %s14, 1
          %s236 = smul.addr %s235, 3
          %s237 = smul.addr %s236, 8
          %s238 = scalar_lea.vmem %s0, %s237
        $region40: #{vit_forward_fused.1} parent=35 // pred_fallthru
          _
      $region36: #{vit_forward_fused.1} parent=5 // pred_fallthru
        _
      %p239 = scmp.le.s32.totalorder 1, %s14
      %p240 = scmp.lt.s32.totalorder %s14, 3
      %p241 = pnand %p239, %p240
      %p242 = pneg %p241
      // Predicated region
      $region41: #{vit_forward_fused.1} parent=5 // pred_check
        _
      $region42: #{vit_forward_fused.1} parent=5 // pred_check_branch
        %244 = sbr.rel (%p241) target = $region44
      $region43: #{vit_forward_fused.1} parent=5 // pred_region
        %s245 = ssub.s32 %s14, 1
        %p246 = scmp.lt.s32.totalorder %s19, 1
        %s247 = scalar_select %p246, %s19, 1
        %s248 = smul.addr %s247, 3
        %s249 = smul.addr %s248, 8
        %s250 = scalar_lea.vmem %s0, %s249
        %p251 = pneg %p40
        %p252 = pneg %p37
        %p253 = pneg %p61
        %p254 = pneg %p58
        %p255 = pneg %p82
        %p256 = pneg %p79
        %p257 = pneg %p103
        %p258 = pneg %p100
        %p259 = pneg %p124
        %p260 = pneg %p121
        %p261 = pneg %p145
        %p262 = pneg %p142
        %p263 = pneg %p171
        %p264 = pneg %p168
        %s265 = sand.u32 %s158, 1
        %s266 = sand.u32 %s158, 1
        %s267 = smul.addr %s266, 96
        %s268 = scalar_lea.vmem [#allocation2], %s267
        %p269 = pneg %p197
        %p270 = pneg %p194
        %p271 = scmp.lt.s32.totalorder %s19, 1
        %s272 = scalar_select %p271, %s19, 1
        %s273 = smul.addr %s272, 8
        %s274 = scalar_lea.vmem %s7, %s273
        %p275 = scmp.lt.s32.totalorder %s19, 1
        %s276 = scalar_select %p275, %s19, 1
        %s277 = smul.addr %s276, 3
        %s278 = smul.addr %s277, 8
        %s279 = scalar_lea.vmem %s0, %s278
        %p280 = scmp.lt.s32.totalorder %s19, 1
        %s281 = scalar_select %p280, %s19, 1
        %s282 = smul.addr %s281, 8
        %s283 = scalar_lea.vmem %s7, %s282
        %v284 = vld [vmem:[%s279] sm:$0xff]
        %v285 = vld [vmem:[%s279 + $0x8] sm:$0xff]
        %v286 = vld [vmem:[%s279 + $0x10] sm:$0xff]
        %v287 = vld [vmem:[%s1] sm:$0xff]
        %v288 = vld [vmem:[%s1 + $0x8] sm:$0xff]
        %v289 = vld [vmem:[%s1 + $0x10] sm:$0xff]
        %v290 = vld [vmem:[%s1 + $0x18] sm:$0xff]
        %v291 = vld [vmem:[%s1 + $0x20] sm:$0xff]
        %v292 = vld [vmem:[%s1 + $0x28] sm:$0xff]
        %v293 = vld [vmem:[%s1 + $0x30] sm:$0xff]
        %v294 = vld [vmem:[%s1 + $0x38] sm:$0xff]
        %v295 = vld [vmem:[%s1 + $0x40] sm:$0xff]
        %v296 = vld [vmem:[%s1 + $0x48] sm:$0xff]
        %v297 = vld [vmem:[%s1 + $0x50] sm:$0xff]
        %vm298 = vcmask 523264
        %v300 = vsel %vm298, %v284, 0
        %v303 = vsel %vm298, %v285, 0
        %v306 = vsel %vm298, %v286, 0
        %308 = vmatprep.subr.mxu0 0.0
        %309 = vmatpush1.msra.mxu0 %v287
        %310 = vmatprep.subr.mxu0 0.0
        %311 = vmatpush1.msra.mxu0 %v288
        %312 = vmatprep.subr.mxu0 0.0
        %313 = vmatpush1.msra.mxu0 %v289
        %314 = vmatprep.subr.mxu0 0.0
        %315 = vmatpush1.msra.mxu0 %v290
        %316 = vmatprep.subr.mxu0 0.0
        %317 = vmatpush1.msra.mxu0 %v291
        %318 = vmatprep.subr.mxu0 0.0
        %319 = vmatpush1.msra.mxu0 %v292
        %320 = vmatprep.subr.mxu0 0.0
        %321 = vmatpush1.msra.mxu0 %v293
        %322 = vmatprep.subr.mxu0 0.0
        %323 = vmatpush1.msra.mxu0 %v294
        %324 = vmatprep.subr.mxu0 0.0
        %325 = vmatpush1.msra.mxu0 0.0
        %326 = vmatprep.subr.mxu0 0.0
        %327 = vmatpush1.msra.mxu0 0.0
        %328 = vmatprep.subr.mxu0 0.0
        %329 = vmatpush1.msra.mxu0 0.0
        %330 = vmatprep.subr.mxu0 0.0
        %331 = vmatpush1.msra.mxu0 0.0
        %332 = vmatprep.subr.mxu0 0.0
        %333 = vmatpush1.msra.mxu0 0.0
        %334 = vmatprep.subr.mxu0 0.0
        %335 = vmatpush1.msra.mxu0 0.0
        %336 = vmatprep.subr.mxu0 0.0
        %337 = vmatpush1.msra.mxu0 0.0
        %338 = vmatprep.subr.mxu0 0.0
        %339 = vmatpush1.msra.mxu0 0.0
        %340 = vmatprep.subr.mxu0 0.0
        %341 = vmatpush1.msra.mxu0 0.0
        %342 = vmatprep.subr.mxu0 0.0
        %343 = vmatpush1.msra.mxu0 0.0
        %344 = vmatprep.subr.mxu0 0.0
        %345 = vmatpush1.msra.mxu0 0.0
        %346 = vmatprep.subr.mxu0 0.0
        %347 = vmatpush1.msra.mxu0 0.0
        %348 = vmatprep.subr.mxu0 0.0
        %349 = vmatpush1.msra.mxu0 0.0
        %350 = vmatprep.subr.mxu0 0.0
        %351 = vmatpush1.msra.mxu0 0.0
        %352 = vmatprep.subr.mxu0 0.0
        %353 = vmatpush1.msra.mxu0 0.0
        %354 = vmatprep.subr.mxu0 0.0
        %355 = vmatpush1.msra.mxu0 0.0
        %356 = vmatprep.subr.mxu0 0.0
        %357 = vmatpush1.msra.mxu0 0.0
        %358 = vmatprep.subr.mxu0 0.0
        %359 = vmatpush1.msra.mxu0 0.0
        %360 = vmatprep.subr.mxu0 0.0
        %361 = vmatpush1.msra.mxu0 0.0
        %362 = vmatprep.subr.mxu0 0.0
        %363 = vmatpush1.msra.mxu0 0.0
        %364 = vmatprep.subr.mxu0 0.0
        %365 = vmatpush1.msra.mxu0 0.0
        %366 = vmatprep.subr.mxu0 0.0
        %367 = vmatpush1.msra.mxu0 0.0
        %368 = vmatprep.subr.mxu0 0.0
        %369 = vmatpush1.msra.mxu0 0.0
        %370 = vmatprep.subr.mxu0 0.0
        %371 = vmatpush1.msra.mxu0 0.0
        %372 = vmatprep.mubr.f32.mxu0 0.0
        %373 = vmatmul.mubr.f32.gmra.mrb[0].mxu0 %v300
        %v374 = vpop.f32.mrb[0].mxu0
        %v375 = vadd.f32 %v295, %v374
        %v376 = vpop.f32.mrb[0].mxu0
        %377 = vmatprep.mubr.f32.mxu0 0.0
        %378 = vmatmul.mubr.f32.gmra.mrb[0].mxu0 %v303
        %v379 = vpop.f32.mrb[0].mxu0
        %v380 = vadd.f32 %v296, %v379
        %v381 = vpop.f32.mrb[0].mxu0
        %382 = vmatprep.mubr.f32.mxu0 0.0
        %383 = vmatmul.mubr.f32.gmra.mrb[0].mxu0 %v306
        %v384 = vpop.f32.mrb[0].mxu0
        %v385 = vadd.f32 %v297, %v384
        %v386 = vpop.f32.mrb[0].mxu0
        %387 = vdwg.mxu0
        %v388 = vlaneseq
        %v389 = vand.u32 %v388, 127
        %vm390 = vcmp.lt.s32.totalorder %v389, 17
        %vm391 = vcmask 261120
        %392 = vst.msk [vmem:[%s268] sm:$0xff] %vm391, %v375
        %393 = vst.msk [vmem:[%s268 + $0x8] sm:$0xff] %vm391, %v380
        %394 = vst.msk [vmem:[%s268 + $0x10] sm:$0xff] %vm391, %v385
        %v395 = vld [vmem:[%s3 + $0x60] sm:$0x1]
        %v396 = vld [vmem:[%s3 + $0x61] sm:$0x1]
        %v397 = vsel %vm391, %v375, 0.0
        %398 = vadd.xlane.f32.xlu0 %v397
        %v399 = vpop.xlane.xlu0 %398
        %v400 = vsel %vm391, %v380, 0.0
        %401 = vadd.xlane.f32.xlu0 %v400
        %v402 = vpop.xlane.xlu0 %401
        %v403 = vsel %vm391, %v385, 0.0
        %404 = vadd.xlane.f32.xlu0 %v403
        %v405 = vpop.xlane.xlu0 %404
        %v406 = vrcp.pop 32.0
        %v407 = vmul.f32 %v399, %v406
        %v408 = vmul.f32 %v402, %v406
        %v409 = vmul.f32 %v405, %v406
        %v410 = vsub.f32 %v375, %v407
        %v411 = vsub.f32 %v380, %v408
        %v412 = vsub.f32 %v385, %v409
        %v413 = vmul.f32 %v410, %v410
        %v414 = vmul.f32 %v411, %v411
        %v415 = vmul.f32 %v412, %v412
        %v416 = vsel %vm391, %v413, 0.0
        %417 = vadd.xlane.f32.xlu0 %v416
        %v418 = vpop.xlane.xlu0 %417
        %v419 = vsel %vm391, %v414, 0.0
        %420 = vadd.xlane.f32.xlu0 %v419
        %v421 = vpop.xlane.xlu0 %420
        %v422 = vsel %vm391, %v415, 0.0
        %423 = vadd.xlane.f32.xlu0 %v422
        %v424 = vpop.xlane.xlu0 %423
        %v425 = vmul.f32 %v418, %v406
        %v426 = vmul.f32 %v421, %v406
        %v427 = vmul.f32 %v424, %v406
        %v428 = vadd.f32 %v425, 1e-06
        %v429 = vadd.f32 %v426, 1e-06
        %v430 = vadd.f32 %v427, 1e-06
        %v431 = vrsqrt.pop %v428
        %v432 = vrsqrt.pop %v429
        %v433 = vrsqrt.pop %v430
        %v434 = vmul.f32 %v410, %v431
        %v435 = vmul.f32 %v411, %v432
        %v436 = vmul.f32 %v412, %v433
        %v437 = vlaneseq
        %v438 = vshrl.u32 %v437, 7
        %v439 = vsub.s32 0, %v438
        %v440 = vrot.slane %v395, %v439
        %v441 = vmul.f32 %v434, %v440
        %v442 = vmul.f32 %v435, %v440
        %v443 = vmul.f32 %v436, %v440
        %v444 = vlaneseq
        %v445 = vshrl.u32 %v444, 7
        %v446 = vsub.s32 0, %v445
        %v447 = vrot.slane %v396, %v446
        %v448 = vadd.f32 %v441, %v447
        %v449 = vadd.f32 %v442, %v447
        %v450 = vadd.f32 %v443, %v447
        %v451 = vld [vmem:[%s2] sm:$0xff]
        %v452 = vld [vmem:[%s2 + $0x8] sm:$0xff]
        %v453 = vld [vmem:[%s2 + $0x10] sm:$0xff]
        %v454 = vld [vmem:[%s2 + $0x18] sm:$0xff]
        %v455 = vld [vmem:[%s2 + $0x20] sm:$0x1]
        %v456 = vlaneseq
        %v457 = vshrl.u32 %v456, 7
        %v458 = vsub.s32 0, %v457
        %v459 = vrot.slane %v455, %v458
        %v461 = vsel %vm391, %v448, 0
        %v464 = vsel %vm391, %v449, 0
        %v467 = vsel %vm391, %v450, 0
        %469 = vmatprep.subr.mxu0 0.0
        %470 = vmatpush1.msra.mxu0 %v451
        %471 = vmatprep.subr.mxu0 0.0
        %472 = vmatpush1.msra.mxu0 %v452
        %473 = vmatprep.subr.mxu0 0.0
        %474 = vmatpush1.msra.mxu0 %v453
        %475 = vmatprep.subr.mxu0 0.0
        %476 = vmatpush1.msra.mxu0 %v454
        %477 = vmatprep.subr.mxu0 0.0
        %478 = vmatpush1.msra.mxu0 0.0
        %479 = vmatprep.subr.mxu0 0.0
        %480 = vmatpush1.msra.mxu0 0.0
        %481 = vmatprep.subr.mxu0 0.0
        %482 = vmatpush1.msra.mxu0 0.0
        %483 = vmatprep.subr.mxu0 0.0
        %484 = vmatpush1.msra.mxu0 0.0
        %485 = vmatprep.subr.mxu0 0.0
        %486 = vmatpush1.msra.mxu0 0.0
        %487 = vmatprep.subr.mxu0 0.0
        %488 = vmatpush1.msra.mxu0 0.0
        %489 = vmatprep.subr.mxu0 0.0
        %490 = vmatpush1.msra.mxu0 0.0
        %491 = vmatprep.subr.mxu0 0.0
        %492 = vmatpush1.msra.mxu0 0.0
        %493 = vmatprep.subr.mxu0 0.0
        %494 = vmatpush1.msra.mxu0 0.0
        %495 = vmatprep.subr.mxu0 0.0
        %496 = vmatpush1.msra.mxu0 0.0
        %497 = vmatprep.subr.mxu0 0.0
        %498 = vmatpush1.msra.mxu0 0.0
        %499 = vmatprep.subr.mxu0 0.0
        %500 = vmatpush1.msra.mxu0 0.0
        %501 = vmatprep.subr.mxu0 0.0
        %502 = vmatpush1.msra.mxu0 0.0
        %503 = vmatprep.subr.mxu0 0.0
        %504 = vmatpush1.msra.mxu0 0.0
        %505 = vmatprep.subr.mxu0 0.0
        %506 = vmatpush1.msra.mxu0 0.0
        %507 = vmatprep.subr.mxu0 0.0
        %508 = vmatpush1.msra.mxu0 0.0
        %509 = vmatprep.subr.mxu0 0.0
        %510 = vmatpush1.msra.mxu0 0.0
        %511 = vmatprep.subr.mxu0 0.0
        %512 = vmatpush1.msra.mxu0 0.0
        %513 = vmatprep.subr.mxu0 0.0
        %514 = vmatpush1.msra.mxu0 0.0
        %515 = vmatprep.subr.mxu0 0.0
        %516 = vmatpush1.msra.mxu0 0.0
        %517 = vmatprep.subr.mxu0 0.0
        %518 = vmatpush1.msra.mxu0 0.0
        %519 = vmatprep.subr.mxu0 0.0
        %520 = vmatpush1.msra.mxu0 0.0
        %521 = vmatprep.subr.mxu0 0.0
        %522 = vmatpush1.msra.mxu0 0.0
        %523 = vmatprep.subr.mxu0 0.0
        %524 = vmatpush1.msra.mxu0 0.0
        %525 = vmatprep.subr.mxu0 0.0
        %526 = vmatpush1.msra.mxu0 0.0
        %527 = vmatprep.subr.mxu0 0.0
        %528 = vmatpush1.msra.mxu0 0.0
        %529 = vmatprep.subr.mxu0 0.0
        %530 = vmatpush1.msra.mxu0 0.0
        %531 = vmatprep.subr.mxu0 0.0
        %532 = vmatpush1.msra.mxu0 0.0
        %533 = vmatprep.mubr.f32.mxu0 0.0
        %534 = vmatmul.mubr.f32.gmra.mrb[0].mxu0 %v461
        %v535 = vpop.f32.mrb[0].mxu0
        %v536 = vadd.f32 %v459, %v535
        %v537 = vpop.f32.mrb[0].mxu0
        %538 = vmatprep.mubr.f32.mxu0 0.0
        %539 = vmatmul.mubr.f32.gmra.mrb[0].mxu0 %v464
        %v540 = vpop.f32.mrb[0].mxu0
        %v541 = vadd.f32 %v459, %v540
        %v542 = vpop.f32.mrb[0].mxu0
        %543 = vmatprep.mubr.f32.mxu0 0.0
        %544 = vmatmul.mubr.f32.gmra.mrb[0].mxu0 %v467
        %v545 = vpop.f32.mrb[0].mxu0
        %v546 = vadd.f32 %v459, %v545
        %v547 = vpop.f32.mrb[0].mxu0
        %548 = vdwg.mxu0
        %s549 = scalar_lea.vmem %s2, 80
        %v550 = vld [vmem:[%s549] sm:$0xff]
        %v551 = vld [vmem:[%s549 + $0x8] sm:$0xff]
        %v552 = vld [vmem:[%s549 + $0x10] sm:$0xff]
        %v553 = vld [vmem:[%s549 + $0x18] sm:$0xff]
        %v554 = vld [vmem:[%s549 + $0x20] sm:$0x1]
        %v555 = vlaneseq
        %v556 = vshrl.u32 %v555, 7
        %v557 = vsub.s32 0, %v556
        %v558 = vrot.slane %v554, %v557
        %559 = vmatprep.subr.mxu0 0.0
        %560 = vmatpush1.msra.mxu0 %v550
        %561 = vmatprep.subr.mxu0 0.0
        %562 = vmatpush1.msra.mxu0 %v551
        %563 = vmatprep.subr.mxu0 0.0
        %564 = vmatpush1.msra.mxu0 %v552
        %565 = vmatprep.subr.mxu0 0.0
        %566 = vmatpush1.msra.mxu0 %v553
        %567 = vmatprep.subr.mxu0 0.0
        %568 = vmatpush1.msra.mxu0 0.0
        %569 = vmatprep.subr.mxu0 0.0
        %570 = vmatpush1.msra.mxu0 0.0
        %571 = vmatprep.subr.mxu0 0.0
        %572 = vmatpush1.msra.mxu0 0.0
        %573 = vmatprep.subr.mxu0 0.0
        %574 = vmatpush1.msra.mxu0 0.0
        %575 = vmatprep.subr.mxu0 0.0
        %576 = vmatpush1.msra.mxu0 0.0
        %577 = vmatprep.subr.mxu0 0.0
        %578 = vmatpush1.msra.mxu0 0.0
        %579 = vmatprep.subr.mxu0 0.0
        %580 = vmatpush1.msra.mxu0 0.0
        %581 = vmatprep.subr.mxu0 0.0
        %582 = vmatpush1.msra.mxu0 0.0
        %583 = vmatprep.subr.mxu0 0.0
        %584 = vmatpush1.msra.mxu0 0.0
        %585 = vmatprep.subr.mxu0 0.0
        %586 = vmatpush1.msra.mxu0 0.0
        %587 = vmatprep.subr.mxu0 0.0
        %588 = vmatpush1.msra.mxu0 0.0
        %589 = vmatprep.subr.mxu0 0.0
        %590 = vmatpush1.msra.mxu0 0.0
        %591 = vmatprep.subr.mxu0 0.0
        %592 = vmatpush1.msra.mxu0 0.0
        %593 = vmatprep.subr.mxu0 0.0
        %594 = vmatpush1.msra.mxu0 0.0
        %595 = vmatprep.subr.mxu0 0.0
        %596 = vmatpush1.msra.mxu0 0.0
        %597 = vmatprep.subr.mxu0 0.0
        %598 = vmatpush1.msra.mxu0 0.0
        %599 = vmatprep.subr.mxu0 0.0
        %600 = vmatpush1.msra.mxu0 0.0
        %601 = vmatprep.subr.mxu0 0.0
        %602 = vmatpush1.msra.mxu0 0.0
        %603 = vmatprep.subr.mxu0 0.0
        %604 = vmatpush1.msra.mxu0 0.0
        %605 = vmatprep.subr.mxu0 0.0
        %606 = vmatpush1.msra.mxu0 0.0
        %607 = vmatprep.subr.mxu0 0.0
        %608 = vmatpush1.msra.mxu0 0.0
        %609 = vmatprep.subr.mxu0 0.0
        %610 = vmatpush1.msra.mxu0 0.0
        %611 = vmatprep.subr.mxu0 0.0
        %612 = vmatpush1.msra.mxu0 0.0
        %613 = vmatprep.subr.mxu0 0.0
        %614 = vmatpush1.msra.mxu0 0.0
        %615 = vmatprep.subr.mxu0 0.0
        %616 = vmatpush1.msra.mxu0 0.0
        %617 = vmatprep.subr.mxu0 0.0
        %618 = vmatpush1.msra.mxu0 0.0
        %619 = vmatprep.subr.mxu0 0.0
        %620 = vmatpush1.msra.mxu0 0.0
        %621 = vmatprep.subr.mxu0 0.0
        %622 = vmatpush1.msra.mxu0 0.0
        %623 = vmatprep.mubr.f32.mxu0 0.0
        %624 = vmatmul.mubr.f32.gmra.mrb[0].mxu0 %v461
        %v625 = vpop.f32.mrb[0].mxu0
        %v626 = vadd.f32 %v558, %v625
        %v627 = vpop.f32.mrb[0].mxu0
        %628 = vmatprep.mubr.f32.mxu0 0.0
        %629 = vmatmul.mubr.f32.gmra.mrb[0].mxu0 %v464
        %v630 = vpop.f32.mrb[0].mxu0
        %v631 = vadd.f32 %v558, %v630
        %v632 = vpop.f32.mrb[0].mxu0
        %633 = vmatprep.mubr.f32.mxu0 0.0
        %634 = vmatmul.mubr.f32.gmra.mrb[0].mxu0 %v467
        %v635 = vpop.f32.mrb[0].mxu0
        %v636 = vadd.f32 %v558, %v635
        %v637 = vpop.f32.mrb[0].mxu0
        %638 = vdwg.mxu0
        %s639 = scalar_lea.vmem %s2, 160
        %v640 = vld [vmem:[%s639] sm:$0xff]
        %v641 = vld [vmem:[%s639 + $0x8] sm:$0xff]
        %v642 = vld [vmem:[%s639 + $0x10] sm:$0xff]
        %v643 = vld [vmem:[%s639 + $0x18] sm:$0xff]
        %v644 = vld [vmem:[%s639 + $0x20] sm:$0x1]
        %v645 = vlaneseq
        %v646 = vshrl.u32 %v645, 7
        %v647 = vsub.s32 0, %v646
        %v648 = vrot.slane %v644, %v647
        %649 = vmatprep.subr.mxu0 0.0
        %650 = vmatpush1.msra.mxu0 %v640
        %651 = vmatprep.subr.mxu0 0.0
        %652 = vmatpush1.msra.mxu0 %v641
        %653 = vmatprep.subr.mxu0 0.0
        %654 = vmatpush1.msra.mxu0 %v642
        %655 = vmatprep.subr.mxu0 0.0
        %656 = vmatpush1.msra.mxu0 %v643
        %657 = vmatprep.subr.mxu0 0.0
        %658 = vmatpush1.msra.mxu0 0.0
        %659 = vmatprep.subr.mxu0 0.0
        %660 = vmatpush1.msra.mxu0 0.0
        %661 = vmatprep.subr.mxu0 0.0
        %662 = vmatpush1.msra.mxu0 0.0
        %663 = vmatprep.subr.mxu0 0.0
        %664 = vmatpush1.msra.mxu0 0.0
        %665 = vmatprep.subr.mxu0 0.0
        %666 = vmatpush1.msra.mxu0 0.0
        %667 = vmatprep.subr.mxu0 0.0
        %668 = vmatpush1.msra.mxu0 0.0
        %669 = vmatprep.subr.mxu0 0.0
        %670 = vmatpush1.msra.mxu0 0.0
        %671 = vmatprep.subr.mxu0 0.0
        %672 = vmatpush1.msra.mxu0 0.0
        %673 = vmatprep.subr.mxu0 0.0
        %674 = vmatpush1.msra.mxu0 0.0
        %675 = vmatprep.subr.mxu0 0.0
        %676 = vmatpush1.msra.mxu0 0.0
        %677 = vmatprep.subr.mxu0 0.0
        %678 = vmatpush1.msra.mxu0 0.0
        %679 = vmatprep.subr.mxu0 0.0
        %680 = vmatpush1.msra.mxu0 0.0
        %681 = vmatprep.subr.mxu0 0.0
        %682 = vmatpush1.msra.mxu0 0.0
        %683 = vmatprep.subr.mxu0 0.0
        %684 = vmatpush1.msra.mxu0 0.0
        %685 = vmatprep.subr.mxu0 0.0
        %686 = vmatpush1.msra.mxu0 0.0
        %687 = vmatprep.subr.mxu0 0.0
        %688 = vmatpush1.msra.mxu0 0.0
        %689 = vmatprep.subr.mxu0 0.0
        %690 = vmatpush1.msra.mxu0 0.0
        %691 = vmatprep.subr.mxu0 0.0
        %692 = vmatpush1.msra.mxu0 0.0
        %693 = vmatprep.subr.mxu0 0.0
        %694 = vmatpush1.msra.mxu0 0.0
        %695 = vmatprep.subr.mxu0 0.0
        %696 = vmatpush1.msra.mxu0 0.0
        %697 = vmatprep.subr.mxu0 0.0
        %698 = vmatpush1.msra.mxu0 0.0
        %699 = vmatprep.subr.mxu0 0.0
        %700 = vmatpush1.msra.mxu0 0.0
        %701 = vmatprep.subr.mxu0 0.0
        %702 = vmatpush1.msra.mxu0 0.0
        %703 = vmatprep.subr.mxu0 0.0
        %704 = vmatpush1.msra.mxu0 0.0
        %705 = vmatprep.subr.mxu0 0.0
        %706 = vmatpush1.msra.mxu0 0.0
        %707 = vmatprep.subr.mxu0 0.0
        %708 = vmatpush1.msra.mxu0 0.0
        %709 = vmatprep.subr.mxu0 0.0
        %710 = vmatpush1.msra.mxu0 0.0
        %711 = vmatprep.subr.mxu0 0.0
        %712 = vmatpush1.msra.mxu0 0.0
        %713 = vmatprep.mubr.f32.mxu0 0.0
        %714 = vmatmul.mubr.f32.gmra.mrb[0].mxu0 %v461
        %v715 = vpop.f32.mrb[0].mxu0
        %v716 = vadd.f32 %v648, %v715
        %v717 = vpop.f32.mrb[0].mxu0
        %718 = vmatprep.mubr.f32.mxu0 0.0
        %719 = vmatmul.mubr.f32.gmra.mrb[0].mxu0 %v464
        %v720 = vpop.f32.mrb[0].mxu0
        %v721 = vadd.f32 %v648, %v720
        %v722 = vpop.f32.mrb[0].mxu0
        %723 = vmatprep.mubr.f32.mxu0 0.0
        %724 = vmatmul.mubr.f32.gmra.mrb[0].mxu0 %v467
        %v725 = vpop.f32.mrb[0].mxu0
        %v726 = vadd.f32 %v648, %v725
        %v727 = vpop.f32.mrb[0].mxu0
        %728 = vdwg.mxu0
        %vm729 = vcmask 130048
        %v731 = vsel %vm729, %v536, 0
        %v734 = vsel %vm729, %v541, 0
        %v737 = vsel %vm729, %v546, 0
        %v740 = vsel %vm729, %v626, 0
        %v743 = vsel %vm729, %v631, 0
        %v746 = vsel %vm729, %v636, 0
        %748 = vmatprep.subr.mxu0 0.0
        %749 = vmatpush1.xpose.msra.mxu0 %v740
        %750 = vmatprep.subr.mxu0 0.0
        %751 = vmatpush1.xpose.msra.mxu0 %v743
        %752 = vmatprep.subr.mxu0 0.0
        %753 = vmatpush1.xpose.msra.mxu0 %v746
        %754 = vmatprep.subr.mxu0 0.0
        %755 = vmatpush1.xpose.msra.mxu0 0.0
        %756 = vmatprep.subr.mxu0 0.0
        %757 = vmatpush1.xpose.msra.mxu0 0.0
        %758 = vmatprep.subr.mxu0 0.0
        %759 = vmatpush1.xpose.msra.mxu0 0.0
        %760 = vmatprep.subr.mxu0 0.0
        %761 = vmatpush1.xpose.msra.mxu0 0.0
        %762 = vmatprep.subr.mxu0 0.0
        %763 = vmatpush1.xpose.msra.mxu0 0.0
        %764 = vmatprep.subr.mxu0 0.0
        %765 = vmatpush1.xpose.msra.mxu0 0.0
        %766 = vmatprep.subr.mxu0 0.0
        %767 = vmatpush1.xpose.msra.mxu0 0.0
        %768 = vmatprep.subr.mxu0 0.0
        %769 = vmatpush1.xpose.msra.mxu0 0.0
        %770 = vmatprep.subr.mxu0 0.0
        %771 = vmatpush1.xpose.msra.mxu0 0.0
        %772 = vmatprep.subr.mxu0 0.0
        %773 = vmatpush1.xpose.msra.mxu0 0.0
        %774 = vmatprep.subr.mxu0 0.0
        %775 = vmatpush1.xpose.msra.mxu0 0.0
        %776 = vmatprep.subr.mxu0 0.0
        %777 = vmatpush1.xpose.msra.mxu0 0.0
        %778 = vmatprep.subr.mxu0 0.0
        %779 = vmatpush1.xpose.msra.mxu0 0.0
        %780 = vmatprep.subr.mxu0 0.0
        %781 = vmatpush1.xpose.msra.mxu0 0.0
        %782 = vmatprep.subr.mxu0 0.0
        %783 = vmatpush1.xpose.msra.mxu0 0.0
        %784 = vmatprep.subr.mxu0 0.0
        %785 = vmatpush1.xpose.msra.mxu0 0.0
        %786 = vmatprep.subr.mxu0 0.0
        %787 = vmatpush1.xpose.msra.mxu0 0.0
        %788 = vmatprep.subr.mxu0 0.0
        %789 = vmatpush1.xpose.msra.mxu0 0.0
        %790 = vmatprep.subr.mxu0 0.0
        %791 = vmatpush1.xpose.msra.mxu0 0.0
        %792 = vmatprep.subr.mxu0 0.0
        %793 = vmatpush1.xpose.msra.mxu0 0.0
        %794 = vmatprep.subr.mxu0 0.0
        %795 = vmatpush1.xpose.msra.mxu0 0.0
        %796 = vmatprep.subr.mxu0 0.0
        %797 = vmatpush1.xpose.msra.mxu0 0.0
        %798 = vmatprep.subr.mxu0 0.0
        %799 = vmatpush1.xpose.msra.mxu0 0.0
        %800 = vmatprep.subr.mxu0 0.0
        %801 = vmatpush1.xpose.msra.mxu0 0.0
        %802 = vmatprep.subr.mxu0 0.0
        %803 = vmatpush1.xpose.msra.mxu0 0.0
        %804 = vmatprep.subr.mxu0 0.0
        %805 = vmatpush1.xpose.msra.mxu0 0.0
        %806 = vmatprep.subr.mxu0 0.0
        %807 = vmatpush1.xpose.msra.mxu0 0.0
        %808 = vmatprep.subr.mxu0 0.0
        %809 = vmatpush1.xpose.msra.mxu0 0.0
        %810 = vmatprep.subr.mxu0 0.0
        %811 = vmatpush1.xpose.msra.mxu0 0.0
        %812 = vmatprep.mubr.f32.mxu0 0.0
        %813 = vmatmul.mubr.f32.gmra.mrb[0].mxu0 %v731
        %v814 = vpop.f32.mrb[0].mxu0
        %v815 = vadd.f32 0.0, %v814
        %v816 = vpop.f32.mrb[0].mxu0
        %817 = vmatprep.mubr.f32.mxu0 0.0
        %818 = vmatmul.mubr.f32.gmra.mrb[0].mxu0 %v734
        %v819 = vpop.f32.mrb[0].mxu0
        %v820 = vadd.f32 0.0, %v819
        %v821 = vpop.f32.mrb[0].mxu0
        %822 = vmatprep.mubr.f32.mxu0 0.0
        %823 = vmatmul.mubr.f32.gmra.mrb[0].mxu0 %v737
        %v824 = vpop.f32.mrb[0].mxu0
        %v825 = vadd.f32 0.0, %v824
        %v826 = vpop.f32.mrb[0].mxu0
        %827 = vdwg.mxu0
        %v828 = vmul.f32 %v815, 0.25
        %v829 = vmul.f32 %v820, 0.25
        %v830 = vmul.f32 %v825, 0.25
        %v831 = vsel %vm390, %v828, -1e+30
        %v832 = vsel %vm390, %v829, -1e+30
        %v833 = vsel %vm390, %v830, -1e+30
        %vm834 = vcmask 195584
        %v835 = vsel %vm834, %v831, -inf
        %836 = vmax.xlane.f32.xlu0 %v835
        %v837 = vpop.xlane.xlu0 %836
        %v838 = vsel %vm834, %v832, -inf
        %839 = vmax.xlane.f32.xlu0 %v838
        %v840 = vpop.xlane.xlu0 %839
        %v841 = vsel %vm834, %v833, -inf
        %842 = vmax.xlane.f32.xlu0 %v841
        %v843 = vpop.xlane.xlu0 %842
        %v844 = vsub.f32 %v831, %v837
        %v845 = vsub.f32 %v832, %v840
        %v846 = vsub.f32 %v833, %v843
        %v847 = vmul.f32 %v844, 1.442695
        %v848 = vpow.pop %v847
        %v849 = vmul.f32 %v845, 1.442695
        %v850 = vpow.pop %v849
        %v851 = vmul.f32 %v846, 1.442695
        %v852 = vpow.pop %v851
        %v853 = vsel %vm834, %v848, 0.0
        %854 = vadd.xlane.f32.xlu0 %v853
        %v855 = vpop.xlane.xlu0 %854
        %v856 = vsel %vm834, %v850, 0.0
        %857 = vadd.xlane.f32.xlu0 %v856
        %v858 = vpop.xlane.xlu0 %857
        %v859 = vsel %vm834, %v852, 0.0
        %860 = vadd.xlane.f32.xlu0 %v859
        %v861 = vpop.xlane.xlu0 %860
        %v862 = vrcp.pop %v855
        %v863 = vrcp.pop %v858
        %v864 = vrcp.pop %v861
        %v866 = vsel %vm834, %v848, 0
        %v869 = vsel %vm834, %v850, 0
        %v872 = vsel %vm834, %v852, 0
        %874 = vmatprep.subr.mxu0 0.0
        %875 = vmatpush1.msra.mxu0 %v716
        %876 = vmatprep.subr.mxu0 0.0
        %877 = vmatpush1.msra.mxu0 %v721
        %878 = vmatprep.subr.mxu0 0.0
        %879 = vmatpush1.msra.mxu0 %v726
        %880 = vmatprep.subr.mxu0 0.0
        %881 = vmatpush1.msra.mxu0 0.0
        %882 = vmatprep.subr.mxu0 0.0
        %883 = vmatpush1.msra.mxu0 0.0
        %884 = vmatprep.subr.mxu0 0.0
        %885 = vmatpush1.msra.mxu0 0.0
        %886 = vmatprep.subr.mxu0 0.0
        %887 = vmatpush1.msra.mxu0 0.0
        %888 = vmatprep.subr.mxu0 0.0
        %889 = vmatpush1.msra.mxu0 0.0
        %890 = vmatprep.subr.mxu0 0.0
        %891 = vmatpush1.msra.mxu0 0.0
        %892 = vmatprep.subr.mxu0 0.0
        %893 = vmatpush1.msra.mxu0 0.0
        %894 = vmatprep.subr.mxu0 0.0
        %895 = vmatpush1.msra.mxu0 0.0
        %896 = vmatprep.subr.mxu0 0.0
        %897 = vmatpush1.msra.mxu0 0.0
        %898 = vmatprep.subr.mxu0 0.0
        %899 = vmatpush1.msra.mxu0 0.0
        %900 = vmatprep.subr.mxu0 0.0
        %901 = vmatpush1.msra.mxu0 0.0
        %902 = vmatprep.subr.mxu0 0.0
        %903 = vmatpush1.msra.mxu0 0.0
        %904 = vmatprep.subr.mxu0 0.0
        %905 = vmatpush1.msra.mxu0 0.0
        %906 = vmatprep.subr.mxu0 0.0
        %907 = vmatpush1.msra.mxu0 0.0
        %908 = vmatprep.subr.mxu0 0.0
        %909 = vmatpush1.msra.mxu0 0.0
        %910 = vmatprep.subr.mxu0 0.0
        %911 = vmatpush1.msra.mxu0 0.0
        %912 = vmatprep.subr.mxu0 0.0
        %913 = vmatpush1.msra.mxu0 0.0
        %914 = vmatprep.subr.mxu0 0.0
        %915 = vmatpush1.msra.mxu0 0.0
        %916 = vmatprep.subr.mxu0 0.0
        %917 = vmatpush1.msra.mxu0 0.0
        %918 = vmatprep.subr.mxu0 0.0
        %919 = vmatpush1.msra.mxu0 0.0
        %920 = vmatprep.subr.mxu0 0.0
        %921 = vmatpush1.msra.mxu0 0.0
        %922 = vmatprep.subr.mxu0 0.0
        %923 = vmatpush1.msra.mxu0 0.0
        %924 = vmatprep.subr.mxu0 0.0
        %925 = vmatpush1.msra.mxu0 0.0
        %926 = vmatprep.subr.mxu0 0.0
        %927 = vmatpush1.msra.mxu0 0.0
        %928 = vmatprep.subr.mxu0 0.0
        %929 = vmatpush1.msra.mxu0 0.0
        %930 = vmatprep.subr.mxu0 0.0
        %931 = vmatpush1.msra.mxu0 0.0
        %932 = vmatprep.subr.mxu0 0.0
        %933 = vmatpush1.msra.mxu0 0.0
        %934 = vmatprep.subr.mxu0 0.0
        %935 = vmatpush1.msra.mxu0 0.0
        %936 = vmatprep.subr.mxu0 0.0
        %937 = vmatpush1.msra.mxu0 0.0
        %938 = vmatprep.mubr.f32.mxu0 0.0
        %939 = vmatmul.mubr.f32.gmra.mrb[0].mxu0 %v866
        %v940 = vpop.f32.mrb[0].mxu0
        %v941 = vadd.f32 0.0, %v940
        %v942 = vpop.f32.mrb[0].mxu0
        %943 = vmatprep.mubr.f32.mxu0 0.0
        %944 = vmatmul.mubr.f32.gmra.mrb[0].mxu0 %v869
        %v945 = vpop.f32.mrb[0].mxu0
        %v946 = vadd.f32 0.0, %v945
        %v947 = vpop.f32.mrb[0].mxu0
        %948 = vmatprep.mubr.f32.mxu0 0.0
        %949 = vmatmul.mubr.f32.gmra.mrb[0].mxu0 %v872
        %v950 = vpop.f32.mrb[0].mxu0
        %v951 = vadd.f32 0.0, %v950
        %v952 = vpop.f32.mrb[0].mxu0
        %953 = vdwg.mxu0
        %v954 = vmul.f32 %v941, %v862
        %v955 = vmul.f32 %v946, %v863
        %v956 = vmul.f32 %v951, %v864
        %v957 = vld [vmem:[%s3] sm:$0xff]
        %v958 = vld [vmem:[%s3 + $0x8] sm:$0xff]
        %s959 = scalar_lea.vmem %s2, 40
        %v960 = vld [vmem:[%s959] sm:$0xff]
        %v961 = vld [vmem:[%s959 + $0x8] sm:$0xff]
        %v962 = vld [vmem:[%s959 + $0x10] sm:$0xff]
        %v963 = vld [vmem:[%s959 + $0x18] sm:$0xff]
        %v964 = vld [vmem:[%s959 + $0x20] sm:$0x1]
        %v965 = vlaneseq
        %v966 = vshrl.u32 %v965, 7
        %v967 = vsub.s32 0, %v966
        %v968 = vrot.slane %v964, %v967
        %969 = vmatprep.subr.mxu0 0.0
        %970 = vmatpush1.msra.mxu0 %v960
        %971 = vmatprep.subr.mxu0 0.0
        %972 = vmatpush1.msra.mxu0 %v961
        %973 = vmatprep.subr.mxu0 0.0
        %974 = vmatpush1.msra.mxu0 %v962
        %975 = vmatprep.subr.mxu0 0.0
        %976 = vmatpush1.msra.mxu0 %v963
        %977 = vmatprep.subr.mxu0 0.0
        %978 = vmatpush1.msra.mxu0 0.0
        %979 = vmatprep.subr.mxu0 0.0
        %980 = vmatpush1.msra.mxu0 0.0
        %981 = vmatprep.subr.mxu0 0.0
        %982 = vmatpush1.msra.mxu0 0.0
        %983 = vmatprep.subr.mxu0 0.0
        %984 = vmatpush1.msra.mxu0 0.0
        %985 = vmatprep.subr.mxu0 0.0
        %986 = vmatpush1.msra.mxu0 0.0
        %987 = vmatprep.subr.mxu0 0.0
        %988 = vmatpush1.msra.mxu0 0.0
        %989 = vmatprep.subr.mxu0 0.0
        %990 = vmatpush1.msra.mxu0 0.0
        %991 = vmatprep.subr.mxu0 0.0
        %992 = vmatpush1.msra.mxu0 0.0
        %993 = vmatprep.subr.mxu0 0.0
        %994 = vmatpush1.msra.mxu0 0.0
        %995 = vmatprep.subr.mxu0 0.0
        %996 = vmatpush1.msra.mxu0 0.0
        %997 = vmatprep.subr.mxu0 0.0
        %998 = vmatpush1.msra.mxu0 0.0
        %999 = vmatprep.subr.mxu0 0.0
        %1000 = vmatpush1.msra.mxu0 0.0
        %1001 = vmatprep.subr.mxu0 0.0
        %1002 = vmatpush1.msra.mxu0 0.0
        %1003 = vmatprep.subr.mxu0 0.0
        %1004 = vmatpush1.msra.mxu0 0.0
        %1005 = vmatprep.subr.mxu0 0.0
        %1006 = vmatpush1.msra.mxu0 0.0
        %1007 = vmatprep.subr.mxu0 0.0
        %1008 = vmatpush1.msra.mxu0 0.0
        %1009 = vmatprep.subr.mxu0 0.0
        %1010 = vmatpush1.msra.mxu0 0.0
        %1011 = vmatprep.subr.mxu0 0.0
        %1012 = vmatpush1.msra.mxu0 0.0
        %1013 = vmatprep.subr.mxu0 0.0
        %1014 = vmatpush1.msra.mxu0 0.0
        %1015 = vmatprep.subr.mxu0 0.0
        %1016 = vmatpush1.msra.mxu0 0.0
        %1017 = vmatprep.subr.mxu0 0.0
        %1018 = vmatpush1.msra.mxu0 0.0
        %1019 = vmatprep.subr.mxu0 0.0
        %1020 = vmatpush1.msra.mxu0 0.0
        %1021 = vmatprep.subr.mxu0 0.0
        %1022 = vmatpush1.msra.mxu0 0.0
        %1023 = vmatprep.subr.mxu0 0.0
        %1024 = vmatpush1.msra.mxu0 0.0
        %1025 = vmatprep.subr.mxu0 0.0
        %1026 = vmatpush1.msra.mxu0 0.0
        %1027 = vmatprep.subr.mxu0 0.0
        %1028 = vmatpush1.msra.mxu0 0.0
        %1029 = vmatprep.subr.mxu0 0.0
        %1030 = vmatpush1.msra.mxu0 0.0
        %1031 = vmatprep.subr.mxu0 0.0
        %1032 = vmatpush1.msra.mxu0 0.0
        %1033 = vmatprep.mubr.f32.mxu0 0.0
        %1034 = vmatmul.mubr.f32.gmra.mrb[0].mxu0 %v461
        %v1035 = vpop.f32.mrb[0].mxu0
        %v1036 = vadd.f32 %v968, %v1035
        %v1037 = vpop.f32.mrb[0].mxu0
        %1038 = vmatprep.mubr.f32.mxu0 0.0
        %1039 = vmatmul.mubr.f32.gmra.mrb[0].mxu0 %v464
        %v1040 = vpop.f32.mrb[0].mxu0
        %v1041 = vadd.f32 %v968, %v1040
        %v1042 = vpop.f32.mrb[0].mxu0
        %1043 = vmatprep.mubr.f32.mxu0 0.0
        %1044 = vmatmul.mubr.f32.gmra.mrb[0].mxu0 %v467
        %v1045 = vpop.f32.mrb[0].mxu0
        %v1046 = vadd.f32 %v968, %v1045
        %v1047 = vpop.f32.mrb[0].mxu0
        %1048 = vdwg.mxu0
        %s1049 = scalar_lea.vmem %s2, 120
        %v1050 = vld [vmem:[%s1049] sm:$0xff]
        %v1051 = vld [vmem:[%s1049 + $0x8] sm:$0xff]
        %v1052 = vld [vmem:[%s1049 + $0x10] sm:$0xff]
        %v1053 = vld [vmem:[%s1049 + $0x18] sm:$0xff]
        %v1054 = vld [vmem:[%s1049 + $0x20] sm:$0x1]
        %v1055 = vlaneseq
        %v1056 = vshrl.u32 %v1055, 7
        %v1057 = vsub.s32 0, %v1056
        %v1058 = vrot.slane %v1054, %v1057
        %1059 = vmatprep.subr.mxu0 0.0
        %1060 = vmatpush1.msra.mxu0 %v1050
        %1061 = vmatprep.subr.mxu0 0.0
        %1062 = vmatpush1.msra.mxu0 %v1051
        %1063 = vmatprep.subr.mxu0 0.0
        %1064 = vmatpush1.msra.mxu0 %v1052
        %1065 = vmatprep.subr.mxu0 0.0
        %1066 = vmatpush1.msra.mxu0 %v1053
        %1067 = vmatprep.subr.mxu0 0.0
        %1068 = vmatpush1.msra.mxu0 0.0
        %1069 = vmatprep.subr.mxu0 0.0
        %1070 = vmatpush1.msra.mxu0 0.0
        %1071 = vmatprep.subr.mxu0 0.0
        %1072 = vmatpush1.msra.mxu0 0.0
        %1073 = vmatprep.subr.mxu0 0.0
        %1074 = vmatpush1.msra.mxu0 0.0
        %1075 = vmatprep.subr.mxu0 0.0
        %1076 = vmatpush1.msra.mxu0 0.0
        %1077 = vmatprep.subr.mxu0 0.0
        %1078 = vmatpush1.msra.mxu0 0.0
        %1079 = vmatprep.subr.mxu0 0.0
        %1080 = vmatpush1.msra.mxu0 0.0
        %1081 = vmatprep.subr.mxu0 0.0
        %1082 = vmatpush1.msra.mxu0 0.0
        %1083 = vmatprep.subr.mxu0 0.0
        %1084 = vmatpush1.msra.mxu0 0.0
        %1085 = vmatprep.subr.mxu0 0.0
        %1086 = vmatpush1.msra.mxu0 0.0
        %1087 = vmatprep.subr.mxu0 0.0
        %1088 = vmatpush1.msra.mxu0 0.0
        %1089 = vmatprep.subr.mxu0 0.0
        %1090 = vmatpush1.msra.mxu0 0.0
        %1091 = vmatprep.subr.mxu0 0.0
        %1092 = vmatpush1.msra.mxu0 0.0
        %1093 = vmatprep.subr.mxu0 0.0
        %1094 = vmatpush1.msra.mxu0 0.0
        %1095 = vmatprep.subr.mxu0 0.0
        %1096 = vmatpush1.msra.mxu0 0.0
        %1097 = vmatprep.subr.mxu0 0.0
        %1098 = vmatpush1.msra.mxu0 0.0
        %1099 = vmatprep.subr.mxu0 0.0
        %1100 = vmatpush1.msra.mxu0 0.0
        %1101 = vmatprep.subr.mxu0 0.0
        %1102 = vmatpush1.msra.mxu0 0.0
        %1103 = vmatprep.subr.mxu0 0.0
        %1104 = vmatpush1.msra.mxu0 0.0
        %1105 = vmatprep.subr.mxu0 0.0
        %1106 = vmatpush1.msra.mxu0 0.0
        %1107 = vmatprep.subr.mxu0 0.0
        %1108 = vmatpush1.msra.mxu0 0.0
        %1109 = vmatprep.subr.mxu0 0.0
        %1110 = vmatpush1.msra.mxu0 0.0
        %1111 = vmatprep.subr.mxu0 0.0
        %1112 = vmatpush1.msra.mxu0 0.0
        %1113 = vmatprep.subr.mxu0 0.0
        %1114 = vmatpush1.msra.mxu0 0.0
        %1115 = vmatprep.subr.mxu0 0.0
        %1116 = vmatpush1.msra.mxu0 0.0
        %1117 = vmatprep.subr.mxu0 0.0
        %1118 = vmatpush1.msra.mxu0 0.0
        %1119 = vmatprep.subr.mxu0 0.0
        %1120 = vmatpush1.msra.mxu0 0.0
        %1121 = vmatprep.subr.mxu0 0.0
        %1122 = vmatpush1.msra.mxu0 0.0
        %1123 = vmatprep.mubr.f32.mxu0 0.0
        %1124 = vmatmul.mubr.f32.gmra.mrb[0].mxu0 %v461
        %v1125 = vpop.f32.mrb[0].mxu0
        %v1126 = vadd.f32 %v1058, %v1125
        %v1127 = vpop.f32.mrb[0].mxu0
        %1128 = vmatprep.mubr.f32.mxu0 0.0
        %1129 = vmatmul.mubr.f32.gmra.mrb[0].mxu0 %v464
        %v1130 = vpop.f32.mrb[0].mxu0
        %v1131 = vadd.f32 %v1058, %v1130
        %v1132 = vpop.f32.mrb[0].mxu0
        %1133 = vmatprep.mubr.f32.mxu0 0.0
        %1134 = vmatmul.mubr.f32.gmra.mrb[0].mxu0 %v467
        %v1135 = vpop.f32.mrb[0].mxu0
        %v1136 = vadd.f32 %v1058, %v1135
        %v1137 = vpop.f32.mrb[0].mxu0
        %1138 = vdwg.mxu0
        %s1139 = scalar_lea.vmem %s2, 200
        %v1140 = vld [vmem:[%s1139] sm:$0xff]
        %v1141 = vld [vmem:[%s1139 + $0x8] sm:$0xff]
        %v1142 = vld [vmem:[%s1139 + $0x10] sm:$0xff]
        %v1143 = vld [vmem:[%s1139 + $0x18] sm:$0xff]
        %v1144 = vld [vmem:[%s1139 + $0x20] sm:$0x1]
        %v1145 = vlaneseq
        %v1146 = vshrl.u32 %v1145, 7
        %v1147 = vsub.s32 0, %v1146
        %v1148 = vrot.slane %v1144, %v1147
        %1149 = vmatprep.subr.mxu0 0.0
        %1150 = vmatpush1.msra.mxu0 %v1140
        %1151 = vmatprep.subr.mxu0 0.0
        %1152 = vmatpush1.msra.mxu0 %v1141
        %1153 = vmatprep.subr.mxu0 0.0
        %1154 = vmatpush1.msra.mxu0 %v1142
        %1155 = vmatprep.subr.mxu0 0.0
        %1156 = vmatpush1.msra.mxu0 %v1143
        %1157 = vmatprep.subr.mxu0 0.0
        %1158 = vmatpush1.msra.mxu0 0.0
        %1159 = vmatprep.subr.mxu0 0.0
        %1160 = vmatpush1.msra.mxu0 0.0
        %1161 = vmatprep.subr.mxu0 0.0
        %1162 = vmatpush1.msra.mxu0 0.0
        %1163 = vmatprep.subr.mxu0 0.0
        %1164 = vmatpush1.msra.mxu0 0.0
        %1165 = vmatprep.subr.mxu0 0.0
        %1166 = vmatpush1.msra.mxu0 0.0
        %1167 = vmatprep.subr.mxu0 0.0
        %1168 = vmatpush1.msra.mxu0 0.0
        %1169 = vmatprep.subr.mxu0 0.0
        %1170 = vmatpush1.msra.mxu0 0.0
        %1171 = vmatprep.subr.mxu0 0.0
        %1172 = vmatpush1.msra.mxu0 0.0
        %1173 = vmatprep.subr.mxu0 0.0
        %1174 = vmatpush1.msra.mxu0 0.0
        %1175 = vmatprep.subr.mxu0 0.0
        %1176 = vmatpush1.msra.mxu0 0.0
        %1177 = vmatprep.subr.mxu0 0.0
        %1178 = vmatpush1.msra.mxu0 0.0
        %1179 = vmatprep.subr.mxu0 0.0
        %1180 = vmatpush1.msra.mxu0 0.0
        %1181 = vmatprep.subr.mxu0 0.0
        %1182 = vmatpush1.msra.mxu0 0.0
        %1183 = vmatprep.subr.mxu0 0.0
        %1184 = vmatpush1.msra.mxu0 0.0
        %1185 = vmatprep.subr.mxu0 0.0
        %1186 = vmatpush1.msra.mxu0 0.0
        %1187 = vmatprep.subr.mxu0 0.0
        %1188 = vmatpush1.msra.mxu0 0.0
        %1189 = vmatprep.subr.mxu0 0.0
        %1190 = vmatpush1.msra.mxu0 0.0
        %1191 = vmatprep.subr.mxu0 0.0
        %1192 = vmatpush1.msra.mxu0 0.0
        %1193 = vmatprep.subr.mxu0 0.0
        %1194 = vmatpush1.msra.mxu0 0.0
        %1195 = vmatprep.subr.mxu0 0.0
        %1196 = vmatpush1.msra.mxu0 0.0
        %1197 = vmatprep.subr.mxu0 0.0
        %1198 = vmatpush1.msra.mxu0 0.0
        %1199 = vmatprep.subr.mxu0 0.0
        %1200 = vmatpush1.msra.mxu0 0.0
        %1201 = vmatprep.subr.mxu0 0.0
        %1202 = vmatpush1.msra.mxu0 0.0
        %1203 = vmatprep.subr.mxu0 0.0
        %1204 = vmatpush1.msra.mxu0 0.0
        %1205 = vmatprep.subr.mxu0 0.0
        %1206 = vmatpush1.msra.mxu0 0.0
        %1207 = vmatprep.subr.mxu0 0.0
        %1208 = vmatpush1.msra.mxu0 0.0
        %1209 = vmatprep.subr.mxu0 0.0
        %1210 = vmatpush1.msra.mxu0 0.0
        %1211 = vmatprep.subr.mxu0 0.0
        %1212 = vmatpush1.msra.mxu0 0.0
        %1213 = vmatprep.mubr.f32.mxu0 0.0
        %1214 = vmatmul.mubr.f32.gmra.mrb[0].mxu0 %v461
        %v1215 = vpop.f32.mrb[0].mxu0
        %v1216 = vadd.f32 %v1148, %v1215
        %v1217 = vpop.f32.mrb[0].mxu0
        %1218 = vmatprep.mubr.f32.mxu0 0.0
        %1219 = vmatmul.mubr.f32.gmra.mrb[0].mxu0 %v464
        %v1220 = vpop.f32.mrb[0].mxu0
        %v1221 = vadd.f32 %v1148, %v1220
        %v1222 = vpop.f32.mrb[0].mxu0
        %1223 = vmatprep.mubr.f32.mxu0 0.0
        %1224 = vmatmul.mubr.f32.gmra.mrb[0].mxu0 %v467
        %v1225 = vpop.f32.mrb[0].mxu0
        %v1226 = vadd.f32 %v1148, %v1225
        %v1227 = vpop.f32.mrb[0].mxu0
        %1228 = vdwg.mxu0
        %v1230 = vsel %vm729, %v1036, 0
        %v1233 = vsel %vm729, %v1041, 0
        %v1236 = vsel %vm729, %v1046, 0
        %v1239 = vsel %vm729, %v1126, 0
        %v1242 = vsel %vm729, %v1131, 0
        %v1245 = vsel %vm729, %v1136, 0
        %1247 = vmatprep.subr.mxu0 0.0
        %1248 = vmatpush1.xpose.msra.mxu0 %v1239
        %1249 = vmatprep.subr.mxu0 0.0
        %1250 = vmatpush1.xpose.msra.mxu0 %v1242
        %1251 = vmatprep.subr.mxu0 0.0
        %1252 = vmatpush1.xpose.msra.mxu0 %v1245
        %1253 = vmatprep.subr.mxu0 0.0
        %1254 = vmatpush1.xpose.msra.mxu0 0.0
        %1255 = vmatprep.subr.mxu0 0.0
        %1256 = vmatpush1.xpose.msra.mxu0 0.0
        %1257 = vmatprep.subr.mxu0 0.0
        %1258 = vmatpush1.xpose.msra.mxu0 0.0
        %1259 = vmatprep.subr.mxu0 0.0
        %1260 = vmatpush1.xpose.msra.mxu0 0.0
        %1261 = vmatprep.subr.mxu0 0.0
        %1262 = vmatpush1.xpose.msra.mxu0 0.0
        %1263 = vmatprep.subr.mxu0 0.0
        %1264 = vmatpush1.xpose.msra.mxu0 0.0
        %1265 = vmatprep.subr.mxu0 0.0
        %1266 = vmatpush1.xpose.msra.mxu0 0.0
        %1267 = vmatprep.subr.mxu0 0.0
        %1268 = vmatpush1.xpose.msra.mxu0 0.0
        %1269 = vmatprep.subr.mxu0 0.0
        %1270 = vmatpush1.xpose.msra.mxu0 0.0
        %1271 = vmatprep.subr.mxu0 0.0
        %1272 = vmatpush1.xpose.msra.mxu0 0.0
        %1273 = vmatprep.subr.mxu0 0.0
        %1274 = vmatpush1.xpose.msra.mxu0 0.0
        %1275 = vmatprep.subr.mxu0 0.0
        %1276 = vmatpush1.xpose.msra.mxu0 0.0
        %1277 = vmatprep.subr.mxu0 0.0
        %1278 = vmatpush1.xpose.msra.mxu0 0.0
        %1279 = vmatprep.subr.mxu0 0.0
        %1280 = vmatpush1.xpose.msra.mxu0 0.0
        %1281 = vmatprep.subr.mxu0 0.0
        %1282 = vmatpush1.xpose.msra.mxu0 0.0
        %1283 = vmatprep.subr.mxu0 0.0
        %1284 = vmatpush1.xpose.msra.mxu0 0.0
        %1285 = vmatprep.subr.mxu0 0.0
        %1286 = vmatpush1.xpose.msra.mxu0 0.0
        %1287 = vmatprep.subr.mxu0 0.0
        %1288 = vmatpush1.xpose.msra.mxu0 0.0
        %1289 = vmatprep.subr.mxu0 0.0
        %1290 = vmatpush1.xpose.msra.mxu0 0.0
        %1291 = vmatprep.subr.mxu0 0.0
        %1292 = vmatpush1.xpose.msra.mxu0 0.0
        %1293 = vmatprep.subr.mxu0 0.0
        %1294 = vmatpush1.xpose.msra.mxu0 0.0
        %1295 = vmatprep.subr.mxu0 0.0
        %1296 = vmatpush1.xpose.msra.mxu0 0.0
        %1297 = vmatprep.subr.mxu0 0.0
        %1298 = vmatpush1.xpose.msra.mxu0 0.0
        %1299 = vmatprep.subr.mxu0 0.0
        %1300 = vmatpush1.xpose.msra.mxu0 0.0
        %1301 = vmatprep.subr.mxu0 0.0
        %1302 = vmatpush1.xpose.msra.mxu0 0.0
        %1303 = vmatprep.subr.mxu0 0.0
        %1304 = vmatpush1.xpose.msra.mxu0 0.0
        %1305 = vmatprep.subr.mxu0 0.0
        %1306 = vmatpush1.xpose.msra.mxu0 0.0
        %1307 = vmatprep.subr.mxu0 0.0
        %1308 = vmatpush1.xpose.msra.mxu0 0.0
        %1309 = vmatprep.subr.mxu0 0.0
        %1310 = vmatpush1.xpose.msra.mxu0 0.0
        %1311 = vmatprep.mubr.f32.mxu0 0.0
        %1312 = vmatmul.mubr.f32.gmra.mrb[0].mxu0 %v1230
        %v1313 = vpop.f32.mrb[0].mxu0
        %v1314 = vadd.f32 0.0, %v1313
        %v1315 = vpop.f32.mrb[0].mxu0
        %1316 = vmatprep.mubr.f32.mxu0 0.0
        %1317 = vmatmul.mubr.f32.gmra.mrb[0].mxu0 %v1233
        %v1318 = vpop.f32.mrb[0].mxu0
        %v1319 = vadd.f32 0.0, %v1318
        %v1320 = vpop.f32.mrb[0].mxu0
        %1321 = vmatprep.mubr.f32.mxu0 0.0
        %1322 = vmatmul.mubr.f32.gmra.mrb[0].mxu0 %v1236
        %v1323 = vpop.f32.mrb[0].mxu0
        %v1324 = vadd.f32 0.0, %v1323
        %v1325 = vpop.f32.mrb[0].mxu0
        %1326 = vdwg.mxu0
        %v1327 = vmul.f32 %v1314, 0.25
        %v1328 = vmul.f32 %v1319, 0.25
        %v1329 = vmul.f32 %v1324, 0.25
        %v1330 = vsel %vm390, %v1327, -1e+30
        %v1331 = vsel %vm390, %v1328, -1e+30
        %v1332 = vsel %vm390, %v1329, -1e+30
        %v1333 = vsel %vm834, %v1330, -inf
        %1334 = vmax.xlane.f32.xlu0 %v1333
        %v1335 = vpop.xlane.xlu0 %1334
        %v1336 = vsel %vm834, %v1331, -inf
        %1337 = vmax.xlane.f32.xlu0 %v1336
        %v1338 = vpop.xlane.xlu0 %1337
        %v1339 = vsel %vm834, %v1332, -inf
        %1340 = vmax.xlane.f32.xlu0 %v1339
        %v1341 = vpop.xlane.xlu0 %1340
        %v1342 = vsub.f32 %v1330, %v1335
        %v1343 = vsub.f32 %v1331, %v1338
        %v1344 = vsub.f32 %v1332, %v1341
        %v1345 = vmul.f32 %v1342, 1.442695
        %v1346 = vpow.pop %v1345
        %v1347 = vmul.f32 %v1343, 1.442695
        %v1348 = vpow.pop %v1347
        %v1349 = vmul.f32 %v1344, 1.442695
        %v1350 = vpow.pop %v1349
        %v1351 = vsel %vm834, %v1346, 0.0
        %1352 = vadd.xlane.f32.xlu0 %v1351
        %v1353 = vpop.xlane.xlu0 %1352
        %v1354 = vsel %vm834, %v1348, 0.0
        %1355 = vadd.xlane.f32.xlu0 %v1354
        %v1356 = vpop.xlane.xlu0 %1355
        %v1357 = vsel %vm834, %v1350, 0.0
        %1358 = vadd.xlane.f32.xlu0 %v1357
        %v1359 = vpop.xlane.xlu0 %1358
        %v1360 = vrcp.pop %v1353
        %v1361 = vrcp.pop %v1356
        %v1362 = vrcp.pop %v1359
        %v1364 = vsel %vm834, %v1346, 0
        %v1367 = vsel %vm834, %v1348, 0
        %v1370 = vsel %vm834, %v1350, 0
        %1372 = vmatprep.subr.mxu0 0.0
        %1373 = vmatpush1.msra.mxu0 %v1216
        %1374 = vmatprep.subr.mxu0 0.0
        %1375 = vmatpush1.msra.mxu0 %v1221
        %1376 = vmatprep.subr.mxu0 0.0
        %1377 = vmatpush1.msra.mxu0 %v1226
        %1378 = vmatprep.subr.mxu0 0.0
        %1379 = vmatpush1.msra.mxu0 0.0
        %1380 = vmatprep.subr.mxu0 0.0
        %1381 = vmatpush1.msra.mxu0 0.0
        %1382 = vmatprep.subr.mxu0 0.0
        %1383 = vmatpush1.msra.mxu0 0.0
        %1384 = vmatprep.subr.mxu0 0.0
        %1385 = vmatpush1.msra.mxu0 0.0
        %1386 = vmatprep.subr.mxu0 0.0
        %1387 = vmatpush1.msra.mxu0 0.0
        %1388 = vmatprep.subr.mxu0 0.0
        %1389 = vmatpush1.msra.mxu0 0.0
        %1390 = vmatprep.subr.mxu0 0.0
        %1391 = vmatpush1.msra.mxu0 0.0
        %1392 = vmatprep.subr.mxu0 0.0
        %1393 = vmatpush1.msra.mxu0 0.0
        %1394 = vmatprep.subr.mxu0 0.0
        %1395 = vmatpush1.msra.mxu0 0.0
        %1396 = vmatprep.subr.mxu0 0.0
        %1397 = vmatpush1.msra.mxu0 0.0
        %1398 = vmatprep.subr.mxu0 0.0
        %1399 = vmatpush1.msra.mxu0 0.0
        %1400 = vmatprep.subr.mxu0 0.0
        %1401 = vmatpush1.msra.mxu0 0.0
        %1402 = vmatprep.subr.mxu0 0.0
        %1403 = vmatpush1.msra.mxu0 0.0
        %1404 = vmatprep.subr.mxu0 0.0
        %1405 = vmatpush1.msra.mxu0 0.0
        %1406 = vmatprep.subr.mxu0 0.0
        %1407 = vmatpush1.msra.mxu0 0.0
        %1408 = vmatprep.subr.mxu0 0.0
        %1409 = vmatpush1.msra.mxu0 0.0
        %1410 = vmatprep.subr.mxu0 0.0
        %1411 = vmatpush1.msra.mxu0 0.0
        %1412 = vmatprep.subr.mxu0 0.0
        %1413 = vmatpush1.msra.mxu0 0.0
        %1414 = vmatprep.subr.mxu0 0.0
        %1415 = vmatpush1.msra.mxu0 0.0
        %1416 = vmatprep.subr.mxu0 0.0
        %1417 = vmatpush1.msra.mxu0 0.0
        %1418 = vmatprep.subr.mxu0 0.0
        %1419 = vmatpush1.msra.mxu0 0.0
        %1420 = vmatprep.subr.mxu0 0.0
        %1421 = vmatpush1.msra.mxu0 0.0
        %1422 = vmatprep.subr.mxu0 0.0
        %1423 = vmatpush1.msra.mxu0 0.0
        %1424 = vmatprep.subr.mxu0 0.0
        %1425 = vmatpush1.msra.mxu0 0.0
        %1426 = vmatprep.subr.mxu0 0.0
        %1427 = vmatpush1.msra.mxu0 0.0
        %1428 = vmatprep.subr.mxu0 0.0
        %1429 = vmatpush1.msra.mxu0 0.0
        %1430 = vmatprep.subr.mxu0 0.0
        %1431 = vmatpush1.msra.mxu0 0.0
        %1432 = vmatprep.subr.mxu0 0.0
        %1433 = vmatpush1.msra.mxu0 0.0
        %1434 = vmatprep.subr.mxu0 0.0
        %1435 = vmatpush1.msra.mxu0 0.0
        %1436 = vmatprep.mubr.f32.mxu0 0.0
        %1437 = vmatmul.mubr.f32.gmra.mrb[0].mxu0 %v1364
        %v1438 = vpop.f32.mrb[0].mxu0
        %v1439 = vadd.f32 0.0, %v1438
        %v1440 = vpop.f32.mrb[0].mxu0
        %1441 = vmatprep.mubr.f32.mxu0 0.0
        %1442 = vmatmul.mubr.f32.gmra.mrb[0].mxu0 %v1367
        %v1443 = vpop.f32.mrb[0].mxu0
        %v1444 = vadd.f32 0.0, %v1443
        %v1445 = vpop.f32.mrb[0].mxu0
        %1446 = vmatprep.mubr.f32.mxu0 0.0
        %1447 = vmatmul.mubr.f32.gmra.mrb[0].mxu0 %v1370
        %v1448 = vpop.f32.mrb[0].mxu0
        %v1449 = vadd.f32 0.0, %v1448
        %v1450 = vpop.f32.mrb[0].mxu0
        %1451 = vdwg.mxu0
        %v1452 = vmul.f32 %v1439, %v1360
        %v1453 = vmul.f32 %v1444, %v1361
        %v1454 = vmul.f32 %v1449, %v1362
        %v1455 = vld [vmem:[%s3 + $0x10] sm:$0xff]
        %v1456 = vld [vmem:[%s3 + $0x18] sm:$0xff]
        %v1458 = vsel %vm729, %v1452, 0
        %v1461 = vsel %vm729, %v1453, 0
        %v1464 = vsel %vm729, %v1454, 0
        %1466 = vmatprep.subr.mxu0 0.0
        %1467 = vmatpush1.msra.mxu0 %v1455
        %1468 = vmatprep.subr.mxu0 0.0
        %1469 = vmatpush1.msra.mxu0 %v1456
        %1470 = vmatprep.subr.mxu0 0.0
        %1471 = vmatpush1.msra.mxu0 0.0
        %1472 = vmatprep.subr.mxu0 0.0
        %1473 = vmatpush1.msra.mxu0 0.0
        %1474 = vmatprep.subr.mxu0 0.0
        %1475 = vmatpush1.msra.mxu0 0.0
        %1476 = vmatprep.subr.mxu0 0.0
        %1477 = vmatpush1.msra.mxu0 0.0
        %1478 = vmatprep.subr.mxu0 0.0
        %1479 = vmatpush1.msra.mxu0 0.0
        %1480 = vmatprep.subr.mxu0 0.0
        %1481 = vmatpush1.msra.mxu0 0.0
        %1482 = vmatprep.subr.mxu0 0.0
        %1483 = vmatpush1.msra.mxu0 0.0
        %1484 = vmatprep.subr.mxu0 0.0
        %1485 = vmatpush1.msra.mxu0 0.0
        %1486 = vmatprep.subr.mxu0 0.0
        %1487 = vmatpush1.msra.mxu0 0.0
        %1488 = vmatprep.subr.mxu0 0.0
        %1489 = vmatpush1.msra.mxu0 0.0
        %1490 = vmatprep.subr.mxu0 0.0
        %1491 = vmatpush1.msra.mxu0 0.0
        %1492 = vmatprep.subr.mxu0 0.0
        %1493 = vmatpush1.msra.mxu0 0.0
        %1494 = vmatprep.subr.mxu0 0.0
        %1495 = vmatpush1.msra.mxu0 0.0
        %1496 = vmatprep.subr.mxu0 0.0
        %1497 = vmatpush1.msra.mxu0 0.0
        %1498 = vmatprep.subr.mxu0 0.0
        %1499 = vmatpush1.msra.mxu0 0.0
        %1500 = vmatprep.subr.mxu0 0.0
        %1501 = vmatpush1.msra.mxu0 0.0
        %1502 = vmatprep.subr.mxu0 0.0
        %1503 = vmatpush1.msra.mxu0 0.0
        %1504 = vmatprep.subr.mxu0 0.0
        %1505 = vmatpush1.msra.mxu0 0.0
        %1506 = vmatprep.subr.mxu0 0.0
        %1507 = vmatpush1.msra.mxu0 0.0
        %1508 = vmatprep.subr.mxu0 0.0
        %1509 = vmatpush1.msra.mxu0 0.0
        %1510 = vmatprep.subr.mxu0 0.0
        %1511 = vmatpush1.msra.mxu0 0.0
        %1512 = vmatprep.subr.mxu0 0.0
        %1513 = vmatpush1.msra.mxu0 0.0
        %1514 = vmatprep.subr.mxu0 0.0
        %1515 = vmatpush1.msra.mxu0 0.0
        %1516 = vmatprep.subr.mxu0 0.0
        %1517 = vmatpush1.msra.mxu0 0.0
        %1518 = vmatprep.subr.mxu0 0.0
        %1519 = vmatpush1.msra.mxu0 0.0
        %1520 = vmatprep.subr.mxu0 0.0
        %1521 = vmatpush1.msra.mxu0 0.0
        %1522 = vmatprep.subr.mxu0 0.0
        %1523 = vmatpush1.msra.mxu0 0.0
        %1524 = vmatprep.subr.mxu0 0.0
        %1525 = vmatpush1.msra.mxu0 0.0
        %1526 = vmatprep.subr.mxu0 0.0
        %1527 = vmatpush1.msra.mxu0 0.0
        %1528 = vmatprep.subr.mxu0 0.0
        %1529 = vmatpush1.msra.mxu0 0.0
        %1530 = vmatprep.mubr.f32.mxu0 0.0
        %1531 = vmatmul.mubr.f32.gmra.mrb[0].mxu0 %v1458
        %v1532 = vpop.f32.mrb[0].mxu0
        %v1533 = vadd.f32 0.0, %v1532
        %v1534 = vpop.f32.mrb[0].mxu0
        %1535 = vmatprep.mubr.f32.mxu0 0.0
        %1536 = vmatmul.mubr.f32.gmra.mrb[0].mxu0 %v1461
        %v1537 = vpop.f32.mrb[0].mxu0
        %v1538 = vadd.f32 0.0, %v1537
        %v1539 = vpop.f32.mrb[0].mxu0
        %1540 = vmatprep.mubr.f32.mxu0 0.0
        %1541 = vmatmul.mubr.f32.gmra.mrb[0].mxu0 %v1464
        %v1542 = vpop.f32.mrb[0].mxu0
        %v1543 = vadd.f32 0.0, %v1542
        %v1544 = vpop.f32.mrb[0].mxu0
        %1545 = vdwg.mxu0
        %v1547 = vsel %vm729, %v954, 0
        %v1550 = vsel %vm729, %v955, 0
        %v1553 = vsel %vm729, %v956, 0
        %1555 = vmatprep.subr.mxu0 0.0
        %1556 = vmatpush1.msra.mxu0 %v957
        %1557 = vmatprep.subr.mxu0 0.0
        %1558 = vmatpush1.msra.mxu0 %v958
        %1559 = vmatprep.subr.mxu0 0.0
        %1560 = vmatpush1.msra.mxu0 0.0
        %1561 = vmatprep.subr.mxu0 0.0
        %1562 = vmatpush1.msra.mxu0 0.0
        %1563 = vmatprep.subr.mxu0 0.0
        %1564 = vmatpush1.msra.mxu0 0.0
        %1565 = vmatprep.subr.mxu0 0.0
        %1566 = vmatpush1.msra.mxu0 0.0
        %1567 = vmatprep.subr.mxu0 0.0
        %1568 = vmatpush1.msra.mxu0 0.0
        %1569 = vmatprep.subr.mxu0 0.0
        %1570 = vmatpush1.msra.mxu0 0.0
        %1571 = vmatprep.subr.mxu0 0.0
        %1572 = vmatpush1.msra.mxu0 0.0
        %1573 = vmatprep.subr.mxu0 0.0
        %1574 = vmatpush1.msra.mxu0 0.0
        %1575 = vmatprep.subr.mxu0 0.0
        %1576 = vmatpush1.msra.mxu0 0.0
        %1577 = vmatprep.subr.mxu0 0.0
        %1578 = vmatpush1.msra.mxu0 0.0
        %1579 = vmatprep.subr.mxu0 0.0
        %1580 = vmatpush1.msra.mxu0 0.0
        %1581 = vmatprep.subr.mxu0 0.0
        %1582 = vmatpush1.msra.mxu0 0.0
        %1583 = vmatprep.subr.mxu0 0.0
        %1584 = vmatpush1.msra.mxu0 0.0
        %1585 = vmatprep.subr.mxu0 0.0
        %1586 = vmatpush1.msra.mxu0 0.0
        %1587 = vmatprep.subr.mxu0 0.0
        %1588 = vmatpush1.msra.mxu0 0.0
        %1589 = vmatprep.subr.mxu0 0.0
        %1590 = vmatpush1.msra.mxu0 0.0
        %1591 = vmatprep.subr.mxu0 0.0
        %1592 = vmatpush1.msra.mxu0 0.0
        %1593 = vmatprep.subr.mxu0 0.0
        %1594 = vmatpush1.msra.mxu0 0.0
        %1595 = vmatprep.subr.mxu0 0.0
        %1596 = vmatpush1.msra.mxu0 0.0
        %1597 = vmatprep.subr.mxu0 0.0
        %1598 = vmatpush1.msra.mxu0 0.0
        %1599 = vmatprep.subr.mxu0 0.0
        %1600 = vmatpush1.msra.mxu0 0.0
        %1601 = vmatprep.subr.mxu0 0.0
        %1602 = vmatpush1.msra.mxu0 0.0
        %1603 = vmatprep.subr.mxu0 0.0
        %1604 = vmatpush1.msra.mxu0 0.0
        %1605 = vmatprep.subr.mxu0 0.0
        %1606 = vmatpush1.msra.mxu0 0.0
        %1607 = vmatprep.subr.mxu0 0.0
        %1608 = vmatpush1.msra.mxu0 0.0
        %1609 = vmatprep.subr.mxu0 0.0
        %1610 = vmatpush1.msra.mxu0 0.0
        %1611 = vmatprep.subr.mxu0 0.0
        %1612 = vmatpush1.msra.mxu0 0.0
        %1613 = vmatprep.subr.mxu0 0.0
        %1614 = vmatpush1.msra.mxu0 0.0
        %1615 = vmatprep.subr.mxu0 0.0
        %1616 = vmatpush1.msra.mxu0 0.0
        %1617 = vmatprep.subr.mxu0 0.0
        %1618 = vmatpush1.msra.mxu0 0.0
        %1619 = vmatprep.mubr.f32.mxu0 0.0
        %1620 = vmatmul.mubr.f32.gmra.mrb[0].mxu0 %v1547
        %v1621 = vpop.f32.mrb[0].mxu0
        %v1622 = vadd.f32 %v1533, %v1621
        %v1623 = vpop.f32.mrb[0].mxu0
        %1624 = vmatprep.mubr.f32.mxu0 0.0
        %1625 = vmatmul.mubr.f32.gmra.mrb[0].mxu0 %v1550
        %v1626 = vpop.f32.mrb[0].mxu0
        %v1627 = vadd.f32 %v1538, %v1626
        %v1628 = vpop.f32.mrb[0].mxu0
        %1629 = vmatprep.mubr.f32.mxu0 0.0
        %1630 = vmatmul.mubr.f32.gmra.mrb[0].mxu0 %v1553
        %v1631 = vpop.f32.mrb[0].mxu0
        %v1632 = vadd.f32 %v1543, %v1631
        %v1633 = vpop.f32.mrb[0].mxu0
        %1634 = vdwg.mxu0
        %v1635 = vadd.f32 %v375, %v1622
        %v1636 = vadd.f32 %v380, %v1627
        %v1637 = vadd.f32 %v385, %v1632
        %v1638 = vld [vmem:[%s3 + $0x64] sm:$0x1]
        %v1639 = vlaneseq
        %v1640 = vshrl.u32 %v1639, 7
        %v1641 = vsub.s32 0, %v1640
        %v1642 = vrot.slane %v1638, %v1641
        %v1643 = vadd.f32 %v1635, %v1642
        %v1644 = vadd.f32 %v1636, %v1642
        %v1645 = vadd.f32 %v1637, %v1642
        %s1646 = scalar_lea.vmem %s268, 24 [#allocation2]
        %1647 = vst.msk [vmem:[%s1646] sm:$0xff] %vm391, %v1643
        %1648 = vst.msk [vmem:[%s1646 + $0x8] sm:$0xff] %vm391, %v1644
        %1649 = vst.msk [vmem:[%s1646 + $0x10] sm:$0xff] %vm391, %v1645
        %v1650 = vld [vmem:[%s3 + $0x62] sm:$0x1]
        %v1651 = vld [vmem:[%s3 + $0x63] sm:$0x1]
        %v1652 = vsel %vm391, %v1643, 0.0
        %1653 = vadd.xlane.f32.xlu0 %v1652
        %v1654 = vpop.xlane.xlu0 %1653
        %v1655 = vsel %vm391, %v1644, 0.0
        %1656 = vadd.xlane.f32.xlu0 %v1655
        %v1657 = vpop.xlane.xlu0 %1656
        %v1658 = vsel %vm391, %v1645, 0.0
        %1659 = vadd.xlane.f32.xlu0 %v1658
        %v1660 = vpop.xlane.xlu0 %1659
        %v1661 = vmul.f32 %v1654, %v406
        %v1662 = vmul.f32 %v1657, %v406
        %v1663 = vmul.f32 %v1660, %v406
        %v1664 = vsub.f32 %v1643, %v1661
        %v1665 = vsub.f32 %v1644, %v1662
        %v1666 = vsub.f32 %v1645, %v1663
        %v1667 = vmul.f32 %v1664, %v1664
        %v1668 = vmul.f32 %v1665, %v1665
        %v1669 = vmul.f32 %v1666, %v1666
        %v1670 = vsel %vm391, %v1667, 0.0
        %1671 = vadd.xlane.f32.xlu0 %v1670
        %v1672 = vpop.xlane.xlu0 %1671
        %v1673 = vsel %vm391, %v1668, 0.0
        %1674 = vadd.xlane.f32.xlu0 %v1673
        %v1675 = vpop.xlane.xlu0 %1674
        %v1676 = vsel %vm391, %v1669, 0.0
        %1677 = vadd.xlane.f32.xlu0 %v1676
        %v1678 = vpop.xlane.xlu0 %1677
        %v1679 = vmul.f32 %v1672, %v406
        %v1680 = vmul.f32 %v1675, %v406
        %v1681 = vmul.f32 %v1678, %v406
        %v1682 = vadd.f32 %v1679, 1e-06
        %v1683 = vadd.f32 %v1680, 1e-06
        %v1684 = vadd.f32 %v1681, 1e-06
        %v1685 = vrsqrt.pop %v1682
        %v1686 = vrsqrt.pop %v1683
        %v1687 = vrsqrt.pop %v1684
        %v1688 = vmul.f32 %v1664, %v1685
        %v1689 = vmul.f32 %v1665, %v1686
        %v1690 = vmul.f32 %v1666, %v1687
        %v1691 = vlaneseq
        %v1692 = vshrl.u32 %v1691, 7
        %v1693 = vsub.s32 0, %v1692
        %v1694 = vrot.slane %v1650, %v1693
        %v1695 = vmul.f32 %v1688, %v1694
        %v1696 = vmul.f32 %v1689, %v1694
        %v1697 = vmul.f32 %v1690, %v1694
        %v1698 = vlaneseq
        %v1699 = vshrl.u32 %v1698, 7
        %v1700 = vsub.s32 0, %v1699
        %v1701 = vrot.slane %v1651, %v1700
        %v1702 = vadd.f32 %v1695, %v1701
        %v1703 = vadd.f32 %v1696, %v1701
        %v1704 = vadd.f32 %v1697, %v1701
        %v1705 = vld [vmem:[%s4] sm:$0xff]
        %v1706 = vld [vmem:[%s4 + $0x8] sm:$0xff]
        %v1707 = vld [vmem:[%s4 + $0x10] sm:$0xff]
        %v1708 = vld [vmem:[%s4 + $0x18] sm:$0xff]
        %v1709 = vld [vmem:[%s4 + $0x20] sm:$0x1]
        %v1710 = vlaneseq
        %v1711 = vshrl.u32 %v1710, 7
        %v1712 = vsub.s32 0, %v1711
        %v1713 = vrot.slane %v1709, %v1712
        %v1715 = vsel %vm391, %v1702, 0
        %v1718 = vsel %vm391, %v1703, 0
        %v1721 = vsel %vm391, %v1704, 0
        %1723 = vmatprep.subr.mxu0 0.0
        %1724 = vmatpush1.msra.mxu0 %v1705
        %1725 = vmatprep.subr.mxu0 0.0
        %1726 = vmatpush1.msra.mxu0 %v1706
        %1727 = vmatprep.subr.mxu0 0.0
        %1728 = vmatpush1.msra.mxu0 %v1707
        %1729 = vmatprep.subr.mxu0 0.0
        %1730 = vmatpush1.msra.mxu0 %v1708
        %1731 = vmatprep.subr.mxu0 0.0
        %1732 = vmatpush1.msra.mxu0 0.0
        %1733 = vmatprep.subr.mxu0 0.0
        %1734 = vmatpush1.msra.mxu0 0.0
        %1735 = vmatprep.subr.mxu0 0.0
        %1736 = vmatpush1.msra.mxu0 0.0
        %1737 = vmatprep.subr.mxu0 0.0
        %1738 = vmatpush1.msra.mxu0 0.0
        %1739 = vmatprep.subr.mxu0 0.0
        %1740 = vmatpush1.msra.mxu0 0.0
        %1741 = vmatprep.subr.mxu0 0.0
        %1742 = vmatpush1.msra.mxu0 0.0
        %1743 = vmatprep.subr.mxu0 0.0
        %1744 = vmatpush1.msra.mxu0 0.0
        %1745 = vmatprep.subr.mxu0 0.0
        %1746 = vmatpush1.msra.mxu0 0.0
        %1747 = vmatprep.subr.mxu0 0.0
        %1748 = vmatpush1.msra.mxu0 0.0
        %1749 = vmatprep.subr.mxu0 0.0
        %1750 = vmatpush1.msra.mxu0 0.0
        %1751 = vmatprep.subr.mxu0 0.0
        %1752 = vmatpush1.msra.mxu0 0.0
        %1753 = vmatprep.subr.mxu0 0.0
        %1754 = vmatpush1.msra.mxu0 0.0
        %1755 = vmatprep.subr.mxu0 0.0
        %1756 = vmatpush1.msra.mxu0 0.0
        %1757 = vmatprep.subr.mxu0 0.0
        %1758 = vmatpush1.msra.mxu0 0.0
        %1759 = vmatprep.subr.mxu0 0.0
        %1760 = vmatpush1.msra.mxu0 0.0
        %1761 = vmatprep.subr.mxu0 0.0
        %1762 = vmatpush1.msra.mxu0 0.0
        %1763 = vmatprep.subr.mxu0 0.0
        %1764 = vmatpush1.msra.mxu0 0.0
        %1765 = vmatprep.subr.mxu0 0.0
        %1766 = vmatpush1.msra.mxu0 0.0
        %1767 = vmatprep.subr.mxu0 0.0
        %1768 = vmatpush1.msra.mxu0 0.0
        %1769 = vmatprep.subr.mxu0 0.0
        %1770 = vmatpush1.msra.mxu0 0.0
        %1771 = vmatprep.subr.mxu0 0.0
        %1772 = vmatpush1.msra.mxu0 0.0
        %1773 = vmatprep.subr.mxu0 0.0
        %1774 = vmatpush1.msra.mxu0 0.0
        %1775 = vmatprep.subr.mxu0 0.0
        %1776 = vmatpush1.msra.mxu0 0.0
        %1777 = vmatprep.subr.mxu0 0.0
        %1778 = vmatpush1.msra.mxu0 0.0
        %1779 = vmatprep.subr.mxu0 0.0
        %1780 = vmatpush1.msra.mxu0 0.0
        %1781 = vmatprep.subr.mxu0 0.0
        %1782 = vmatpush1.msra.mxu0 0.0
        %1783 = vmatprep.subr.mxu0 0.0
        %1784 = vmatpush1.msra.mxu0 0.0
        %1785 = vmatprep.subr.mxu0 0.0
        %1786 = vmatpush1.msra.mxu0 0.0
        %1787 = vmatprep.mubr.f32.mxu0 0.0
        %1788 = vmatmul.mubr.f32.gmra.mrb[0].mxu0 %v1715
        %v1789 = vpop.f32.mrb[0].mxu0
        %v1790 = vadd.f32 %v1713, %v1789
        %v1791 = vpop.f32.mrb[0].mxu0
        %1792 = vmatprep.mubr.f32.mxu0 0.0
        %1793 = vmatmul.mubr.f32.gmra.mrb[0].mxu0 %v1718
        %v1794 = vpop.f32.mrb[0].mxu0
        %v1795 = vadd.f32 %v1713, %v1794
        %v1796 = vpop.f32.mrb[0].mxu0
        %1797 = vmatprep.mubr.f32.mxu0 0.0
        %1798 = vmatmul.mubr.f32.gmra.mrb[0].mxu0 %v1721
        %v1799 = vpop.f32.mrb[0].mxu0
        %v1800 = vadd.f32 %v1713, %v1799
        %v1801 = vpop.f32.mrb[0].mxu0
        %1802 = vdwg.mxu0
        %v1803 = vmul.f32 %v1790, %v1790
        %v1804 = vmul.f32 %v1795, %v1795
        %v1805 = vmul.f32 %v1800, %v1800
        %v1806 = vmul.f32 %v1790, %v1803
        %v1807 = vmul.f32 %v1795, %v1804
        %v1808 = vmul.f32 %v1800, %v1805
        %v1809 = vmul.f32 %v1806, 0.044715
        %v1810 = vmul.f32 %v1807, 0.044715
        %v1811 = vmul.f32 %v1808, 0.044715
        %v1812 = vadd.f32 %v1790, %v1809
        %v1813 = vadd.f32 %v1795, %v1810
        %v1814 = vadd.f32 %v1800, %v1811
        %v1815 = vmul.f32 %v1812, 0.7978846
        %v1816 = vmul.f32 %v1813, 0.7978846
        %v1817 = vmul.f32 %v1814, 0.7978846
        %v1818 = vtanh.pop %v1815
        %v1819 = vtanh.pop %v1816
        %v1820 = vtanh.pop %v1817
        %v1821 = vadd.f32 %v1818, 1.0
        %v1822 = vadd.f32 %v1819, 1.0
        %v1823 = vadd.f32 %v1820, 1.0
        %v1824 = vmul.f32 %v1821, 0.5
        %v1825 = vmul.f32 %v1822, 0.5
        %v1826 = vmul.f32 %v1823, 0.5
        %v1827 = vmul.f32 %v1790, %v1824
        %v1828 = vmul.f32 %v1795, %v1825
        %v1829 = vmul.f32 %v1800, %v1826
        %v1830 = vld [vmem:[%s3 + $0x20] sm:$0xff]
        %v1831 = vld [vmem:[%s3 + $0x28] sm:$0xff]
        %v1832 = vld [vmem:[%s3 + $0x30] sm:$0xff]
        %v1833 = vld [vmem:[%s3 + $0x38] sm:$0xff]
        %v1834 = vld [vmem:[%s3 + $0x40] sm:$0xff]
        %v1835 = vld [vmem:[%s3 + $0x48] sm:$0xff]
        %v1836 = vld [vmem:[%s3 + $0x50] sm:$0xff]
        %v1837 = vld [vmem:[%s3 + $0x58] sm:$0xff]
        %v1838 = vld [vmem:[%s3 + $0x65] sm:$0x1]
        %v1839 = vlaneseq
        %v1840 = vshrl.u32 %v1839, 7
        %v1841 = vsub.s32 0, %v1840
        %v1842 = vrot.slane %v1838, %v1841
        %v1844 = vsel %vm298, %v1827, 0
        %v1847 = vsel %vm298, %v1828, 0
        %v1850 = vsel %vm298, %v1829, 0
        %1852 = vmatprep.subr.mxu0 0.0
        %1853 = vmatpush1.msra.mxu0 %v1830
        %1854 = vmatprep.subr.mxu0 0.0
        %1855 = vmatpush1.msra.mxu0 %v1831
        %1856 = vmatprep.subr.mxu0 0.0
        %1857 = vmatpush1.msra.mxu0 %v1832
        %1858 = vmatprep.subr.mxu0 0.0
        %1859 = vmatpush1.msra.mxu0 %v1833
        %1860 = vmatprep.subr.mxu0 0.0
        %1861 = vmatpush1.msra.mxu0 %v1834
        %1862 = vmatprep.subr.mxu0 0.0
        %1863 = vmatpush1.msra.mxu0 %v1835
        %1864 = vmatprep.subr.mxu0 0.0
        %1865 = vmatpush1.msra.mxu0 %v1836
        %1866 = vmatprep.subr.mxu0 0.0
        %1867 = vmatpush1.msra.mxu0 %v1837
        %1868 = vmatprep.subr.mxu0 0.0
        %1869 = vmatpush1.msra.mxu0 0.0
        %1870 = vmatprep.subr.mxu0 0.0
        %1871 = vmatpush1.msra.mxu0 0.0
        %1872 = vmatprep.subr.mxu0 0.0
        %1873 = vmatpush1.msra.mxu0 0.0
        %1874 = vmatprep.subr.mxu0 0.0
        %1875 = vmatpush1.msra.mxu0 0.0
        %1876 = vmatprep.subr.mxu0 0.0
        %1877 = vmatpush1.msra.mxu0 0.0
        %1878 = vmatprep.subr.mxu0 0.0
        %1879 = vmatpush1.msra.mxu0 0.0
        %1880 = vmatprep.subr.mxu0 0.0
        %1881 = vmatpush1.msra.mxu0 0.0
        %1882 = vmatprep.subr.mxu0 0.0
        %1883 = vmatpush1.msra.mxu0 0.0
        %1884 = vmatprep.subr.mxu0 0.0
        %1885 = vmatpush1.msra.mxu0 0.0
        %1886 = vmatprep.subr.mxu0 0.0
        %1887 = vmatpush1.msra.mxu0 0.0
        %1888 = vmatprep.subr.mxu0 0.0
        %1889 = vmatpush1.msra.mxu0 0.0
        %1890 = vmatprep.subr.mxu0 0.0
        %1891 = vmatpush1.msra.mxu0 0.0
        %1892 = vmatprep.subr.mxu0 0.0
        %1893 = vmatpush1.msra.mxu0 0.0
        %1894 = vmatprep.subr.mxu0 0.0
        %1895 = vmatpush1.msra.mxu0 0.0
        %1896 = vmatprep.subr.mxu0 0.0
        %1897 = vmatpush1.msra.mxu0 0.0
        %1898 = vmatprep.subr.mxu0 0.0
        %1899 = vmatpush1.msra.mxu0 0.0
        %1900 = vmatprep.subr.mxu0 0.0
        %1901 = vmatpush1.msra.mxu0 0.0
        %1902 = vmatprep.subr.mxu0 0.0
        %1903 = vmatpush1.msra.mxu0 0.0
        %1904 = vmatprep.subr.mxu0 0.0
        %1905 = vmatpush1.msra.mxu0 0.0
        %1906 = vmatprep.subr.mxu0 0.0
        %1907 = vmatpush1.msra.mxu0 0.0
        %1908 = vmatprep.subr.mxu0 0.0
        %1909 = vmatpush1.msra.mxu0 0.0
        %1910 = vmatprep.subr.mxu0 0.0
        %1911 = vmatpush1.msra.mxu0 0.0
        %1912 = vmatprep.subr.mxu0 0.0
        %1913 = vmatpush1.msra.mxu0 0.0
        %1914 = vmatprep.subr.mxu0 0.0
        %1915 = vmatpush1.msra.mxu0 0.0
        %1916 = vmatprep.mubr.f32.mxu0 0.0
        %1917 = vmatmul.mubr.f32.gmra.mrb[0].mxu0 %v1844
        %v1918 = vpop.f32.mrb[0].mxu0
        %v1919 = vadd.f32 %v1842, %v1918
        %v1920 = vpop.f32.mrb[0].mxu0
        %1921 = vmatprep.mubr.f32.mxu0 0.0
        %1922 = vmatmul.mubr.f32.gmra.mrb[0].mxu0 %v1847
        %v1923 = vpop.f32.mrb[0].mxu0
        %v1924 = vadd.f32 %v1842, %v1923
        %v1925 = vpop.f32.mrb[0].mxu0
        %1926 = vmatprep.mubr.f32.mxu0 0.0
        %1927 = vmatmul.mubr.f32.gmra.mrb[0].mxu0 %v1850
        %v1928 = vpop.f32.mrb[0].mxu0
        %v1929 = vadd.f32 %v1842, %v1928
        %v1930 = vpop.f32.mrb[0].mxu0
        %1931 = vdwg.mxu0
        %v1932 = vadd.f32 %v1643, %v1919
        %v1933 = vadd.f32 %v1644, %v1924
        %v1934 = vadd.f32 %v1645, %v1929
        %s1935 = scalar_lea.vmem %s268, 48 [#allocation2]
        %1936 = vst.msk [vmem:[%s1935] sm:$0xff] %vm391, %v1932
        %1937 = vst.msk [vmem:[%s1935 + $0x8] sm:$0xff] %vm391, %v1933
        %1938 = vst.msk [vmem:[%s1935 + $0x10] sm:$0xff] %vm391, %v1934
        %s1939 = scalar_lea.vmem %s3, 104
        %v1940 = vld [vmem:[%s1939 + $0x60] sm:$0x1]
        %v1941 = vld [vmem:[%s1939 + $0x61] sm:$0x1]
        %v1942 = vsel %vm391, %v1932, 0.0
        %1943 = vadd.xlane.f32.xlu0 %v1942
        %v1944 = vpop.xlane.xlu0 %1943
        %v1945 = vsel %vm391, %v1933, 0.0
        %1946 = vadd.xlane.f32.xlu0 %v1945
        %v1947 = vpop.xlane.xlu0 %1946
        %v1948 = vsel %vm391, %v1934, 0.0
        %1949 = vadd.xlane.f32.xlu0 %v1948
        %v1950 = vpop.xlane.xlu0 %1949
        %v1951 = vmul.f32 %v1944, %v406
        %v1952 = vmul.f32 %v1947, %v406
        %v1953 = vmul.f32 %v1950, %v406
        %v1954 = vsub.f32 %v1932, %v1951
        %v1955 = vsub.f32 %v1933, %v1952
        %v1956 = vsub.f32 %v1934, %v1953
        %v1957 = vmul.f32 %v1954, %v1954
        %v1958 = vmul.f32 %v1955, %v1955
        %v1959 = vmul.f32 %v1956, %v1956
        %v1960 = vsel %vm391, %v1957, 0.0
        %1961 = vadd.xlane.f32.xlu0 %v1960
        %v1962 = vpop.xlane.xlu0 %1961
        %v1963 = vsel %vm391, %v1958, 0.0
        %1964 = vadd.xlane.f32.xlu0 %v1963
        %v1965 = vpop.xlane.xlu0 %1964
        %v1966 = vsel %vm391, %v1959, 0.0
        %1967 = vadd.xlane.f32.xlu0 %v1966
        %v1968 = vpop.xlane.xlu0 %1967
        %v1969 = vmul.f32 %v1962, %v406
        %v1970 = vmul.f32 %v1965, %v406
        %v1971 = vmul.f32 %v1968, %v406
        %v1972 = vadd.f32 %v1969, 1e-06
        %v1973 = vadd.f32 %v1970, 1e-06
        %v1974 = vadd.f32 %v1971, 1e-06
        %v1975 = vrsqrt.pop %v1972
        %v1976 = vrsqrt.pop %v1973
        %v1977 = vrsqrt.pop %v1974
        %v1978 = vmul.f32 %v1954, %v1975
        %v1979 = vmul.f32 %v1955, %v1976
        %v1980 = vmul.f32 %v1956, %v1977
        %v1981 = vlaneseq
        %v1982 = vshrl.u32 %v1981, 7
        %v1983 = vsub.s32 0, %v1982
        %v1984 = vrot.slane %v1940, %v1983
        %v1985 = vmul.f32 %v1978, %v1984
        %v1986 = vmul.f32 %v1979, %v1984
        %v1987 = vmul.f32 %v1980, %v1984
        %v1988 = vlaneseq
        %v1989 = vshrl.u32 %v1988, 7
        %v1990 = vsub.s32 0, %v1989
        %v1991 = vrot.slane %v1941, %v1990
        %v1992 = vadd.f32 %v1985, %v1991
        %v1993 = vadd.f32 %v1986, %v1991
        %v1994 = vadd.f32 %v1987, %v1991
        %s1995 = scalar_lea.vmem %s2, 240
        %v1996 = vld [vmem:[%s1995] sm:$0xff]
        %v1997 = vld [vmem:[%s1995 + $0x8] sm:$0xff]
        %v1998 = vld [vmem:[%s1995 + $0x10] sm:$0xff]
        %v1999 = vld [vmem:[%s1995 + $0x18] sm:$0xff]
        %v2000 = vld [vmem:[%s1995 + $0x20] sm:$0x1]
        %v2001 = vlaneseq
        %v2002 = vshrl.u32 %v2001, 7
        %v2003 = vsub.s32 0, %v2002
        %v2004 = vrot.slane %v2000, %v2003
        %v2006 = vsel %vm391, %v1992, 0
        %v2009 = vsel %vm391, %v1993, 0
        %v2012 = vsel %vm391, %v1994, 0
        %2014 = vmatprep.subr.mxu0 0.0
        %2015 = vmatpush1.msra.mxu0 %v1996
        %2016 = vmatprep.subr.mxu0 0.0
        %2017 = vmatpush1.msra.mxu0 %v1997
        %2018 = vmatprep.subr.mxu0 0.0
        %2019 = vmatpush1.msra.mxu0 %v1998
        %2020 = vmatprep.subr.mxu0 0.0
        %2021 = vmatpush1.msra.mxu0 %v1999
        %2022 = vmatprep.subr.mxu0 0.0
        %2023 = vmatpush1.msra.mxu0 0.0
        %2024 = vmatprep.subr.mxu0 0.0
        %2025 = vmatpush1.msra.mxu0 0.0
        %2026 = vmatprep.subr.mxu0 0.0
        %2027 = vmatpush1.msra.mxu0 0.0
        %2028 = vmatprep.subr.mxu0 0.0
        %2029 = vmatpush1.msra.mxu0 0.0
        %2030 = vmatprep.subr.mxu0 0.0
        %2031 = vmatpush1.msra.mxu0 0.0
        %2032 = vmatprep.subr.mxu0 0.0
        %2033 = vmatpush1.msra.mxu0 0.0
        %2034 = vmatprep.subr.mxu0 0.0
        %2035 = vmatpush1.msra.mxu0 0.0
        %2036 = vmatprep.subr.mxu0 0.0
        %2037 = vmatpush1.msra.mxu0 0.0
        %2038 = vmatprep.subr.mxu0 0.0
        %2039 = vmatpush1.msra.mxu0 0.0
        %2040 = vmatprep.subr.mxu0 0.0
        %2041 = vmatpush1.msra.mxu0 0.0
        %2042 = vmatprep.subr.mxu0 0.0
        %2043 = vmatpush1.msra.mxu0 0.0
        %2044 = vmatprep.subr.mxu0 0.0
        %2045 = vmatpush1.msra.mxu0 0.0
        %2046 = vmatprep.subr.mxu0 0.0
        %2047 = vmatpush1.msra.mxu0 0.0
        %2048 = vmatprep.subr.mxu0 0.0
        %2049 = vmatpush1.msra.mxu0 0.0
        %2050 = vmatprep.subr.mxu0 0.0
        %2051 = vmatpush1.msra.mxu0 0.0
        %2052 = vmatprep.subr.mxu0 0.0
        %2053 = vmatpush1.msra.mxu0 0.0
        %2054 = vmatprep.subr.mxu0 0.0
        %2055 = vmatpush1.msra.mxu0 0.0
        %2056 = vmatprep.subr.mxu0 0.0
        %2057 = vmatpush1.msra.mxu0 0.0
        %2058 = vmatprep.subr.mxu0 0.0
        %2059 = vmatpush1.msra.mxu0 0.0
        %2060 = vmatprep.subr.mxu0 0.0
        %2061 = vmatpush1.msra.mxu0 0.0
        %2062 = vmatprep.subr.mxu0 0.0
        %2063 = vmatpush1.msra.mxu0 0.0
        %2064 = vmatprep.subr.mxu0 0.0
        %2065 = vmatpush1.msra.mxu0 0.0
        %2066 = vmatprep.subr.mxu0 0.0
        %2067 = vmatpush1.msra.mxu0 0.0
        %2068 = vmatprep.subr.mxu0 0.0
        %2069 = vmatpush1.msra.mxu0 0.0
        %2070 = vmatprep.subr.mxu0 0.0
        %2071 = vmatpush1.msra.mxu0 0.0
        %2072 = vmatprep.subr.mxu0 0.0
        %2073 = vmatpush1.msra.mxu0 0.0
        %2074 = vmatprep.subr.mxu0 0.0
        %2075 = vmatpush1.msra.mxu0 0.0
        %2076 = vmatprep.subr.mxu0 0.0
        %2077 = vmatpush1.msra.mxu0 0.0
        %2078 = vmatprep.mubr.f32.mxu0 0.0
        %2079 = vmatmul.mubr.f32.gmra.mrb[0].mxu0 %v2006
        %v2080 = vpop.f32.mrb[0].mxu0
        %v2081 = vadd.f32 %v2004, %v2080
        %v2082 = vpop.f32.mrb[0].mxu0
        %2083 = vmatprep.mubr.f32.mxu0 0.0
        %2084 = vmatmul.mubr.f32.gmra.mrb[0].mxu0 %v2009
        %v2085 = vpop.f32.mrb[0].mxu0
        %v2086 = vadd.f32 %v2004, %v2085
        %v2087 = vpop.f32.mrb[0].mxu0
        %2088 = vmatprep.mubr.f32.mxu0 0.0
        %2089 = vmatmul.mubr.f32.gmra.mrb[0].mxu0 %v2012
        %v2090 = vpop.f32.mrb[0].mxu0
        %v2091 = vadd.f32 %v2004, %v2090
        %v2092 = vpop.f32.mrb[0].mxu0
        %2093 = vdwg.mxu0
        %s2094 = scalar_lea.vmem %s2, 320
        %v2095 = vld [vmem:[%s2094] sm:$0xff]
        %v2096 = vld [vmem:[%s2094 + $0x8] sm:$0xff]
        %v2097 = vld [vmem:[%s2094 + $0x10] sm:$0xff]
        %v2098 = vld [vmem:[%s2094 + $0x18] sm:$0xff]
        %v2099 = vld [vmem:[%s2094 + $0x20] sm:$0x1]
        %v2100 = vlaneseq
        %v2101 = vshrl.u32 %v2100, 7
        %v2102 = vsub.s32 0, %v2101
        %v2103 = vrot.slane %v2099, %v2102
        %2104 = vmatprep.subr.mxu0 0.0
        %2105 = vmatpush1.msra.mxu0 %v2095
        %2106 = vmatprep.subr.mxu0 0.0
        %2107 = vmatpush1.msra.mxu0 %v2096
        %2108 = vmatprep.subr.mxu0 0.0
        %2109 = vmatpush1.msra.mxu0 %v2097
        %2110 = vmatprep.subr.mxu0 0.0
        %2111 = vmatpush1.msra.mxu0 %v2098
        %2112 = vmatprep.subr.mxu0 0.0
        %2113 = vmatpush1.msra.mxu0 0.0
        %2114 = vmatprep.subr.mxu0 0.0
        %2115 = vmatpush1.msra.mxu0 0.0
        %2116 = vmatprep.subr.mxu0 0.0
        %2117 = vmatpush1.msra.mxu0 0.0
        %2118 = vmatprep.subr.mxu0 0.0
        %2119 = vmatpush1.msra.mxu0 0.0
        %2120 = vmatprep.subr.mxu0 0.0
        %2121 = vmatpush1.msra.mxu0 0.0
        %2122 = vmatprep.subr.mxu0 0.0
        %2123 = vmatpush1.msra.mxu0 0.0
        %2124 = vmatprep.subr.mxu0 0.0
        %2125 = vmatpush1.msra.mxu0 0.0
        %2126 = vmatprep.subr.mxu0 0.0
        %2127 = vmatpush1.msra.mxu0 0.0
        %2128 = vmatprep.subr.mxu0 0.0
        %2129 = vmatpush1.msra.mxu0 0.0
        %2130 = vmatprep.subr.mxu0 0.0
        %2131 = vmatpush1.msra.mxu0 0.0
        %2132 = vmatprep.subr.mxu0 0.0
        %2133 = vmatpush1.msra.mxu0 0.0
        %2134 = vmatprep.subr.mxu0 0.0
        %2135 = vmatpush1.msra.mxu0 0.0
        %2136 = vmatprep.subr.mxu0 0.0
        %2137 = vmatpush1.msra.mxu0 0.0
        %2138 = vmatprep.subr.mxu0 0.0
        %2139 = vmatpush1.msra.mxu0 0.0
        %2140 = vmatprep.subr.mxu0 0.0
        %2141 = vmatpush1.msra.mxu0 0.0
        %2142 = vmatprep.subr.mxu0 0.0
        %2143 = vmatpush1.msra.mxu0 0.0
        %2144 = vmatprep.subr.mxu0 0.0
        %2145 = vmatpush1.msra.mxu0 0.0
        %2146 = vmatprep.subr.mxu0 0.0
        %2147 = vmatpush1.msra.mxu0 0.0
        %2148 = vmatprep.subr.mxu0 0.0
        %2149 = vmatpush1.msra.mxu0 0.0
        %2150 = vmatprep.subr.mxu0 0.0
        %2151 = vmatpush1.msra.mxu0 0.0
        %2152 = vmatprep.subr.mxu0 0.0
        %2153 = vmatpush1.msra.mxu0 0.0
        %2154 = vmatprep.subr.mxu0 0.0
        %2155 = vmatpush1.msra.mxu0 0.0
        %2156 = vmatprep.subr.mxu0 0.0
        %2157 = vmatpush1.msra.mxu0 0.0
        %2158 = vmatprep.subr.mxu0 0.0
        %2159 = vmatpush1.msra.mxu0 0.0
        %2160 = vmatprep.subr.mxu0 0.0
        %2161 = vmatpush1.msra.mxu0 0.0
        %2162 = vmatprep.subr.mxu0 0.0
        %2163 = vmatpush1.msra.mxu0 0.0
        %2164 = vmatprep.subr.mxu0 0.0
        %2165 = vmatpush1.msra.mxu0 0.0
        %2166 = vmatprep.subr.mxu0 0.0
        %2167 = vmatpush1.msra.mxu0 0.0
        %2168 = vmatprep.mubr.f32.mxu0 0.0
        %2169 = vmatmul.mubr.f32.gmra.mrb[0].mxu0 %v2006
        %v2170 = vpop.f32.mrb[0].mxu0
        %v2171 = vadd.f32 %v2103, %v2170
        %v2172 = vpop.f32.mrb[0].mxu0
        %2173 = vmatprep.mubr.f32.mxu0 0.0
        %2174 = vmatmul.mubr.f32.gmra.mrb[0].mxu0 %v2009
        %v2175 = vpop.f32.mrb[0].mxu0
        %v2176 = vadd.f32 %v2103, %v2175
        %v2177 = vpop.f32.mrb[0].mxu0
        %2178 = vmatprep.mubr.f32.mxu0 0.0
        %2179 = vmatmul.mubr.f32.gmra.mrb[0].mxu0 %v2012
        %v2180 = vpop.f32.mrb[0].mxu0
        %v2181 = vadd.f32 %v2103, %v2180
        %v2182 = vpop.f32.mrb[0].mxu0
        %2183 = vdwg.mxu0
        %s2184 = scalar_lea.vmem %s2, 400
        %v2185 = vld [vmem:[%s2184] sm:$0xff]
        %v2186 = vld [vmem:[%s2184 + $0x8] sm:$0xff]
        %v2187 = vld [vmem:[%s2184 + $0x10] sm:$0xff]
        %v2188 = vld [vmem:[%s2184 + $0x18] sm:$0xff]
        %v2189 = vld [vmem:[%s2184 + $0x20] sm:$0x1]
        %v2190 = vlaneseq
        %v2191 = vshrl.u32 %v2190, 7
        %v2192 = vsub.s32 0, %v2191
        %v2193 = vrot.slane %v2189, %v2192
        %2194 = vmatprep.subr.mxu0 0.0
        %2195 = vmatpush1.msra.mxu0 %v2185
        %2196 = vmatprep.subr.mxu0 0.0
        %2197 = vmatpush1.msra.mxu0 %v2186
        %2198 = vmatprep.subr.mxu0 0.0
        %2199 = vmatpush1.msra.mxu0 %v2187
        %2200 = vmatprep.subr.mxu0 0.0
        %2201 = vmatpush1.msra.mxu0 %v2188
        %2202 = vmatprep.subr.mxu0 0.0
        %2203 = vmatpush1.msra.mxu0 0.0
        %2204 = vmatprep.subr.mxu0 0.0
        %2205 = vmatpush1.msra.mxu0 0.0
        %2206 = vmatprep.subr.mxu0 0.0
        %2207 = vmatpush1.msra.mxu0 0.0
        %2208 = vmatprep.subr.mxu0 0.0
        %2209 = vmatpush1.msra.mxu0 0.0
        %2210 = vmatprep.subr.mxu0 0.0
        %2211 = vmatpush1.msra.mxu0 0.0
        %2212 = vmatprep.subr.mxu0 0.0
        %2213 = vmatpush1.msra.mxu0 0.0
        %2214 = vmatprep.subr.mxu0 0.0
        %2215 = vmatpush1.msra.mxu0 0.0
        %2216 = vmatprep.subr.mxu0 0.0
        %2217 = vmatpush1.msra.mxu0 0.0
        %2218 = vmatprep.subr.mxu0 0.0
        %2219 = vmatpush1.msra.mxu0 0.0
        %2220 = vmatprep.subr.mxu0 0.0
        %2221 = vmatpush1.msra.mxu0 0.0
        %2222 = vmatprep.subr.mxu0 0.0
        %2223 = vmatpush1.msra.mxu0 0.0
        %2224 = vmatprep.subr.mxu0 0.0
        %2225 = vmatpush1.msra.mxu0 0.0
        %2226 = vmatprep.subr.mxu0 0.0
        %2227 = vmatpush1.msra.mxu0 0.0
        %2228 = vmatprep.subr.mxu0 0.0
        %2229 = vmatpush1.msra.mxu0 0.0
        %2230 = vmatprep.subr.mxu0 0.0
        %2231 = vmatpush1.msra.mxu0 0.0
        %2232 = vmatprep.subr.mxu0 0.0
        %2233 = vmatpush1.msra.mxu0 0.0
        %2234 = vmatprep.subr.mxu0 0.0
        %2235 = vmatpush1.msra.mxu0 0.0
        %2236 = vmatprep.subr.mxu0 0.0
        %2237 = vmatpush1.msra.mxu0 0.0
        %2238 = vmatprep.subr.mxu0 0.0
        %2239 = vmatpush1.msra.mxu0 0.0
        %2240 = vmatprep.subr.mxu0 0.0
        %2241 = vmatpush1.msra.mxu0 0.0
        %2242 = vmatprep.subr.mxu0 0.0
        %2243 = vmatpush1.msra.mxu0 0.0
        %2244 = vmatprep.subr.mxu0 0.0
        %2245 = vmatpush1.msra.mxu0 0.0
        %2246 = vmatprep.subr.mxu0 0.0
        %2247 = vmatpush1.msra.mxu0 0.0
        %2248 = vmatprep.subr.mxu0 0.0
        %2249 = vmatpush1.msra.mxu0 0.0
        %2250 = vmatprep.subr.mxu0 0.0
        %2251 = vmatpush1.msra.mxu0 0.0
        %2252 = vmatprep.subr.mxu0 0.0
        %2253 = vmatpush1.msra.mxu0 0.0
        %2254 = vmatprep.subr.mxu0 0.0
        %2255 = vmatpush1.msra.mxu0 0.0
        %2256 = vmatprep.subr.mxu0 0.0
        %2257 = vmatpush1.msra.mxu0 0.0
        %2258 = vmatprep.mubr.f32.mxu0 0.0
        %2259 = vmatmul.mubr.f32.gmra.mrb[0].mxu0 %v2006
        %v2260 = vpop.f32.mrb[0].mxu0
        %v2261 = vadd.f32 %v2193, %v2260
        %v2262 = vpop.f32.mrb[0].mxu0
        %2263 = vmatprep.mubr.f32.mxu0 0.0
        %2264 = vmatmul.mubr.f32.gmra.mrb[0].mxu0 %v2009
        %v2265 = vpop.f32.mrb[0].mxu0
        %v2266 = vadd.f32 %v2193, %v2265
        %v2267 = vpop.f32.mrb[0].mxu0
        %2268 = vmatprep.mubr.f32.mxu0 0.0
        %2269 = vmatmul.mubr.f32.gmra.mrb[0].mxu0 %v2012
        %v2270 = vpop.f32.mrb[0].mxu0
        %v2271 = vadd.f32 %v2193, %v2270
        %v2272 = vpop.f32.mrb[0].mxu0
        %2273 = vdwg.mxu0
        %v2275 = vsel %vm729, %v2081, 0
        %v2278 = vsel %vm729, %v2086, 0
        %v2281 = vsel %vm729, %v2091, 0
        %v2284 = vsel %vm729, %v2171, 0
        %v2287 = vsel %vm729, %v2176, 0
        %v2290 = vsel %vm729, %v2181, 0
        %2292 = vmatprep.subr.mxu0 0.0
        %2293 = vmatpush1.xpose.msra.mxu0 %v2284
        %2294 = vmatprep.subr.mxu0 0.0
        %2295 = vmatpush1.xpose.msra.mxu0 %v2287
        %2296 = vmatprep.subr.mxu0 0.0
        %2297 = vmatpush1.xpose.msra.mxu0 %v2290
        %2298 = vmatprep.subr.mxu0 0.0
        %2299 = vmatpush1.xpose.msra.mxu0 0.0
        %2300 = vmatprep.subr.mxu0 0.0
        %2301 = vmatpush1.xpose.msra.mxu0 0.0
        %2302 = vmatprep.subr.mxu0 0.0
        %2303 = vmatpush1.xpose.msra.mxu0 0.0
        %2304 = vmatprep.subr.mxu0 0.0
        %2305 = vmatpush1.xpose.msra.mxu0 0.0
        %2306 = vmatprep.subr.mxu0 0.0
        %2307 = vmatpush1.xpose.msra.mxu0 0.0
        %2308 = vmatprep.subr.mxu0 0.0
        %2309 = vmatpush1.xpose.msra.mxu0 0.0
        %2310 = vmatprep.subr.mxu0 0.0
        %2311 = vmatpush1.xpose.msra.mxu0 0.0
        %2312 = vmatprep.subr.mxu0 0.0
        %2313 = vmatpush1.xpose.msra.mxu0 0.0
        %2314 = vmatprep.subr.mxu0 0.0
        %2315 = vmatpush1.xpose.msra.mxu0 0.0
        %2316 = vmatprep.subr.mxu0 0.0
        %2317 = vmatpush1.xpose.msra.mxu0 0.0
        %2318 = vmatprep.subr.mxu0 0.0
        %2319 = vmatpush1.xpose.msra.mxu0 0.0
        %2320 = vmatprep.subr.mxu0 0.0
        %2321 = vmatpush1.xpose.msra.mxu0 0.0
        %2322 = vmatprep.subr.mxu0 0.0
        %2323 = vmatpush1.xpose.msra.mxu0 0.0
        %2324 = vmatprep.subr.mxu0 0.0
        %2325 = vmatpush1.xpose.msra.mxu0 0.0
        %2326 = vmatprep.subr.mxu0 0.0
        %2327 = vmatpush1.xpose.msra.mxu0 0.0
        %2328 = vmatprep.subr.mxu0 0.0
        %2329 = vmatpush1.xpose.msra.mxu0 0.0
        %2330 = vmatprep.subr.mxu0 0.0
        %2331 = vmatpush1.xpose.msra.mxu0 0.0
        %2332 = vmatprep.subr.mxu0 0.0
        %2333 = vmatpush1.xpose.msra.mxu0 0.0
        %2334 = vmatprep.subr.mxu0 0.0
        %2335 = vmatpush1.xpose.msra.mxu0 0.0
        %2336 = vmatprep.subr.mxu0 0.0
        %2337 = vmatpush1.xpose.msra.mxu0 0.0
        %2338 = vmatprep.subr.mxu0 0.0
        %2339 = vmatpush1.xpose.msra.mxu0 0.0
        %2340 = vmatprep.subr.mxu0 0.0
        %2341 = vmatpush1.xpose.msra.mxu0 0.0
        %2342 = vmatprep.subr.mxu0 0.0
        %2343 = vmatpush1.xpose.msra.mxu0 0.0
        %2344 = vmatprep.subr.mxu0 0.0
        %2345 = vmatpush1.xpose.msra.mxu0 0.0
        %2346 = vmatprep.subr.mxu0 0.0
        %2347 = vmatpush1.xpose.msra.mxu0 0.0
        %2348 = vmatprep.subr.mxu0 0.0
        %2349 = vmatpush1.xpose.msra.mxu0 0.0
        %2350 = vmatprep.subr.mxu0 0.0
        %2351 = vmatpush1.xpose.msra.mxu0 0.0
        %2352 = vmatprep.subr.mxu0 0.0
        %2353 = vmatpush1.xpose.msra.mxu0 0.0
        %2354 = vmatprep.subr.mxu0 0.0
        %2355 = vmatpush1.xpose.msra.mxu0 0.0
        %2356 = vmatprep.mubr.f32.mxu0 0.0
        %2357 = vmatmul.mubr.f32.gmra.mrb[0].mxu0 %v2275
        %v2358 = vpop.f32.mrb[0].mxu0
        %v2359 = vadd.f32 0.0, %v2358
        %v2360 = vpop.f32.mrb[0].mxu0
        %2361 = vmatprep.mubr.f32.mxu0 0.0
        %2362 = vmatmul.mubr.f32.gmra.mrb[0].mxu0 %v2278
        %v2363 = vpop.f32.mrb[0].mxu0
        %v2364 = vadd.f32 0.0, %v2363
        %v2365 = vpop.f32.mrb[0].mxu0
        %2366 = vmatprep.mubr.f32.mxu0 0.0
        %2367 = vmatmul.mubr.f32.gmra.mrb[0].mxu0 %v2281
        %v2368 = vpop.f32.mrb[0].mxu0
        %v2369 = vadd.f32 0.0, %v2368
        %v2370 = vpop.f32.mrb[0].mxu0
        %2371 = vdwg.mxu0
        %v2372 = vmul.f32 %v2359, 0.25
        %v2373 = vmul.f32 %v2364, 0.25
        %v2374 = vmul.f32 %v2369, 0.25
        %v2375 = vsel %vm390, %v2372, -1e+30
        %v2376 = vsel %vm390, %v2373, -1e+30
        %v2377 = vsel %vm390, %v2374, -1e+30
        %v2378 = vsel %vm834, %v2375, -inf
        %2379 = vmax.xlane.f32.xlu0 %v2378
        %v2380 = vpop.xlane.xlu0 %2379
        %v2381 = vsel %vm834, %v2376, -inf
        %2382 = vmax.xlane.f32.xlu0 %v2381
        %v2383 = vpop.xlane.xlu0 %2382
        %v2384 = vsel %vm834, %v2377, -inf
        %2385 = vmax.xlane.f32.xlu0 %v2384
        %v2386 = vpop.xlane.xlu0 %2385
        %v2387 = vsub.f32 %v2375, %v2380
        %v2388 = vsub.f32 %v2376, %v2383
        %v2389 = vsub.f32 %v2377, %v2386
        %v2390 = vmul.f32 %v2387, 1.442695
        %v2391 = vpow.pop %v2390
        %v2392 = vmul.f32 %v2388, 1.442695
        %v2393 = vpow.pop %v2392
        %v2394 = vmul.f32 %v2389, 1.442695
        %v2395 = vpow.pop %v2394
        %v2396 = vsel %vm834, %v2391, 0.0
        %2397 = vadd.xlane.f32.xlu0 %v2396
        %v2398 = vpop.xlane.xlu0 %2397
        %v2399 = vsel %vm834, %v2393, 0.0
        %2400 = vadd.xlane.f32.xlu0 %v2399
        %v2401 = vpop.xlane.xlu0 %2400
        %v2402 = vsel %vm834, %v2395, 0.0
        %2403 = vadd.xlane.f32.xlu0 %v2402
        %v2404 = vpop.xlane.xlu0 %2403
        %v2405 = vrcp.pop %v2398
        %v2406 = vrcp.pop %v2401
        %v2407 = vrcp.pop %v2404
        %v2409 = vsel %vm834, %v2391, 0
        %v2412 = vsel %vm834, %v2393, 0
        %v2415 = vsel %vm834, %v2395, 0
        %2417 = vmatprep.subr.mxu0 0.0
        %2418 = vmatpush1.msra.mxu0 %v2261
        %2419 = vmatprep.subr.mxu0 0.0
        %2420 = vmatpush1.msra.mxu0 %v2266
        %2421 = vmatprep.subr.mxu0 0.0
        %2422 = vmatpush1.msra.mxu0 %v2271
        %2423 = vmatprep.subr.mxu0 0.0
        %2424 = vmatpush1.msra.mxu0 0.0
        %2425 = vmatprep.subr.mxu0 0.0
        %2426 = vmatpush1.msra.mxu0 0.0
        %2427 = vmatprep.subr.mxu0 0.0
        %2428 = vmatpush1.msra.mxu0 0.0
        %2429 = vmatprep.subr.mxu0 0.0
        %2430 = vmatpush1.msra.mxu0 0.0
        %2431 = vmatprep.subr.mxu0 0.0
        %2432 = vmatpush1.msra.mxu0 0.0
        %2433 = vmatprep.subr.mxu0 0.0
        %2434 = vmatpush1.msra.mxu0 0.0
        %2435 = vmatprep.subr.mxu0 0.0
        %2436 = vmatpush1.msra.mxu0 0.0
        %2437 = vmatprep.subr.mxu0 0.0
        %2438 = vmatpush1.msra.mxu0 0.0
        %2439 = vmatprep.subr.mxu0 0.0
        %2440 = vmatpush1.msra.mxu0 0.0
        %2441 = vmatprep.subr.mxu0 0.0
        %2442 = vmatpush1.msra.mxu0 0.0
        %2443 = vmatprep.subr.mxu0 0.0
        %2444 = vmatpush1.msra.mxu0 0.0
        %2445 = vmatprep.subr.mxu0 0.0
        %2446 = vmatpush1.msra.mxu0 0.0
        %2447 = vmatprep.subr.mxu0 0.0
        %2448 = vmatpush1.msra.mxu0 0.0
        %2449 = vmatprep.subr.mxu0 0.0
        %2450 = vmatpush1.msra.mxu0 0.0
        %2451 = vmatprep.subr.mxu0 0.0
        %2452 = vmatpush1.msra.mxu0 0.0
        %2453 = vmatprep.subr.mxu0 0.0
        %2454 = vmatpush1.msra.mxu0 0.0
        %2455 = vmatprep.subr.mxu0 0.0
        %2456 = vmatpush1.msra.mxu0 0.0
        %2457 = vmatprep.subr.mxu0 0.0
        %2458 = vmatpush1.msra.mxu0 0.0
        %2459 = vmatprep.subr.mxu0 0.0
        %2460 = vmatpush1.msra.mxu0 0.0
        %2461 = vmatprep.subr.mxu0 0.0
        %2462 = vmatpush1.msra.mxu0 0.0
        %2463 = vmatprep.subr.mxu0 0.0
        %2464 = vmatpush1.msra.mxu0 0.0
        %2465 = vmatprep.subr.mxu0 0.0
        %2466 = vmatpush1.msra.mxu0 0.0
        %2467 = vmatprep.subr.mxu0 0.0
        %2468 = vmatpush1.msra.mxu0 0.0
        %2469 = vmatprep.subr.mxu0 0.0
        %2470 = vmatpush1.msra.mxu0 0.0
        %2471 = vmatprep.subr.mxu0 0.0
        %2472 = vmatpush1.msra.mxu0 0.0
        %2473 = vmatprep.subr.mxu0 0.0
        %2474 = vmatpush1.msra.mxu0 0.0
        %2475 = vmatprep.subr.mxu0 0.0
        %2476 = vmatpush1.msra.mxu0 0.0
        %2477 = vmatprep.subr.mxu0 0.0
        %2478 = vmatpush1.msra.mxu0 0.0
        %2479 = vmatprep.subr.mxu0 0.0
        %2480 = vmatpush1.msra.mxu0 0.0
        %2481 = vmatprep.mubr.f32.mxu0 0.0
        %2482 = vmatmul.mubr.f32.gmra.mrb[0].mxu0 %v2409
        %v2483 = vpop.f32.mrb[0].mxu0
        %v2484 = vadd.f32 0.0, %v2483
        %v2485 = vpop.f32.mrb[0].mxu0
        %2486 = vmatprep.mubr.f32.mxu0 0.0
        %2487 = vmatmul.mubr.f32.gmra.mrb[0].mxu0 %v2412
        %v2488 = vpop.f32.mrb[0].mxu0
        %v2489 = vadd.f32 0.0, %v2488
        %v2490 = vpop.f32.mrb[0].mxu0
        %2491 = vmatprep.mubr.f32.mxu0 0.0
        %2492 = vmatmul.mubr.f32.gmra.mrb[0].mxu0 %v2415
        %v2493 = vpop.f32.mrb[0].mxu0
        %v2494 = vadd.f32 0.0, %v2493
        %v2495 = vpop.f32.mrb[0].mxu0
        %2496 = vdwg.mxu0
        %v2497 = vmul.f32 %v2484, %v2405
        %v2498 = vmul.f32 %v2489, %v2406
        %v2499 = vmul.f32 %v2494, %v2407
        %v2500 = vld [vmem:[%s1939] sm:$0xff]
        %v2501 = vld [vmem:[%s1939 + $0x8] sm:$0xff]
        %s2502 = scalar_lea.vmem %s2, 280
        %v2503 = vld [vmem:[%s2502] sm:$0xff]
        %v2504 = vld [vmem:[%s2502 + $0x8] sm:$0xff]
        %v2505 = vld [vmem:[%s2502 + $0x10] sm:$0xff]
        %v2506 = vld [vmem:[%s2502 + $0x18] sm:$0xff]
        %v2507 = vld [vmem:[%s2502 + $0x20] sm:$0x1]
        %v2508 = vlaneseq
        %v2509 = vshrl.u32 %v2508, 7
        %v2510 = vsub.s32 0, %v2509
        %v2511 = vrot.slane %v2507, %v2510
        %2512 = vmatprep.subr.mxu0 0.0
        %2513 = vmatpush1.msra.mxu0 %v2503
        %2514 = vmatprep.subr.mxu0 0.0
        %2515 = vmatpush1.msra.mxu0 %v2504
        %2516 = vmatprep.subr.mxu0 0.0
        %2517 = vmatpush1.msra.mxu0 %v2505
        %2518 = vmatprep.subr.mxu0 0.0
        %2519 = vmatpush1.msra.mxu0 %v2506
        %2520 = vmatprep.subr.mxu0 0.0
        %2521 = vmatpush1.msra.mxu0 0.0
        %2522 = vmatprep.subr.mxu0 0.0
        %2523 = vmatpush1.msra.mxu0 0.0
        %2524 = vmatprep.subr.mxu0 0.0
        %2525 = vmatpush1.msra.mxu0 0.0
        %2526 = vmatprep.subr.mxu0 0.0
        %2527 = vmatpush1.msra.mxu0 0.0
        %2528 = vmatprep.subr.mxu0 0.0
        %2529 = vmatpush1.msra.mxu0 0.0
        %2530 = vmatprep.subr.mxu0 0.0
        %2531 = vmatpush1.msra.mxu0 0.0
        %2532 = vmatprep.subr.mxu0 0.0
        %2533 = vmatpush1.msra.mxu0 0.0
        %2534 = vmatprep.subr.mxu0 0.0
        %2535 = vmatpush1.msra.mxu0 0.0
        %2536 = vmatprep.subr.mxu0 0.0
        %2537 = vmatpush1.msra.mxu0 0.0
        %2538 = vmatprep.subr.mxu0 0.0
        %2539 = vmatpush1.msra.mxu0 0.0
        %2540 = vmatprep.subr.mxu0 0.0
        %2541 = vmatpush1.msra.mxu0 0.0
        %2542 = vmatprep.subr.mxu0 0.0
        %2543 = vmatpush1.msra.mxu0 0.0
        %2544 = vmatprep.subr.mxu0 0.0
        %2545 = vmatpush1.msra.mxu0 0.0
        %2546 = vmatprep.subr.mxu0 0.0
        %2547 = vmatpush1.msra.mxu0 0.0
        %2548 = vmatprep.subr.mxu0 0.0
        %2549 = vmatpush1.msra.mxu0 0.0
        %2550 = vmatprep.subr.mxu0 0.0
        %2551 = vmatpush1.msra.mxu0 0.0
        %2552 = vmatprep.subr.mxu0 0.0
        %2553 = vmatpush1.msra.mxu0 0.0
        %2554 = vmatprep.subr.mxu0 0.0
        %2555 = vmatpush1.msra.mxu0 0.0
        %2556 = vmatprep.subr.mxu0 0.0
        %2557 = vmatpush1.msra.mxu0 0.0
        %2558 = vmatprep.subr.mxu0 0.0
        %2559 = vmatpush1.msra.mxu0 0.0
        %2560 = vmatprep.subr.mxu0 0.0
        %2561 = vmatpush1.msra.mxu0 0.0
        %2562 = vmatprep.subr.mxu0 0.0
        %2563 = vmatpush1.msra.mxu0 0.0
        %2564 = vmatprep.subr.mxu0 0.0
        %2565 = vmatpush1.msra.mxu0 0.0
        %2566 = vmatprep.subr.mxu0 0.0
        %2567 = vmatpush1.msra.mxu0 0.0
        %2568 = vmatprep.subr.mxu0 0.0
        %2569 = vmatpush1.msra.mxu0 0.0
        %2570 = vmatprep.subr.mxu0 0.0
        %2571 = vmatpush1.msra.mxu0 0.0
        %2572 = vmatprep.subr.mxu0 0.0
        %2573 = vmatpush1.msra.mxu0 0.0
        %2574 = vmatprep.subr.mxu0 0.0
        %2575 = vmatpush1.msra.mxu0 0.0
        %2576 = vmatprep.mubr.f32.mxu0 0.0
        %2577 = vmatmul.mubr.f32.gmra.mrb[0].mxu0 %v2006
        %v2578 = vpop.f32.mrb[0].mxu0
        %v2579 = vadd.f32 %v2511, %v2578
        %v2580 = vpop.f32.mrb[0].mxu0
        %2581 = vmatprep.mubr.f32.mxu0 0.0
        %2582 = vmatmul.mubr.f32.gmra.mrb[0].mxu0 %v2009
        %v2583 = vpop.f32.mrb[0].mxu0
        %v2584 = vadd.f32 %v2511, %v2583
        %v2585 = vpop.f32.mrb[0].mxu0
        %2586 = vmatprep.mubr.f32.mxu0 0.0
        %2587 = vmatmul.mubr.f32.gmra.mrb[0].mxu0 %v2012
        %v2588 = vpop.f32.mrb[0].mxu0
        %v2589 = vadd.f32 %v2511, %v2588
        %v2590 = vpop.f32.mrb[0].mxu0
        %2591 = vdwg.mxu0
        %s2592 = scalar_lea.vmem %s2, 360
        %v2593 = vld [vmem:[%s2592] sm:$0xff]
        %v2594 = vld [vmem:[%s2592 + $0x8] sm:$0xff]
        %v2595 = vld [vmem:[%s2592 + $0x10] sm:$0xff]
        %v2596 = vld [vmem:[%s2592 + $0x18] sm:$0xff]
        %v2597 = vld [vmem:[%s2592 + $0x20] sm:$0x1]
        %v2598 = vlaneseq
        %v2599 = vshrl.u32 %v2598, 7
        %v2600 = vsub.s32 0, %v2599
        %v2601 = vrot.slane %v2597, %v2600
        %2602 = vmatprep.subr.mxu0 0.0
        %2603 = vmatpush1.msra.mxu0 %v2593
        %2604 = vmatprep.subr.mxu0 0.0
        %2605 = vmatpush1.msra.mxu0 %v2594
        %2606 = vmatprep.subr.mxu0 0.0
        %2607 = vmatpush1.msra.mxu0 %v2595
        %2608 = vmatprep.subr.mxu0 0.0
        %2609 = vmatpush1.msra.mxu0 %v2596
        %2610 = vmatprep.subr.mxu0 0.0
        %2611 = vmatpush1.msra.mxu0 0.0
        %2612 = vmatprep.subr.mxu0 0.0
        %2613 = vmatpush1.msra.mxu0 0.0
        %2614 = vmatprep.subr.mxu0 0.0
        %2615 = vmatpush1.msra.mxu0 0.0
        %2616 = vmatprep.subr.mxu0 0.0
        %2617 = vmatpush1.msra.mxu0 0.0
        %2618 = vmatprep.subr.mxu0 0.0
        %2619 = vmatpush1.msra.mxu0 0.0
        %2620 = vmatprep.subr.mxu0 0.0
        %2621 = vmatpush1.msra.mxu0 0.0
        %2622 = vmatprep.subr.mxu0 0.0
        %2623 = vmatpush1.msra.mxu0 0.0
        %2624 = vmatprep.subr.mxu0 0.0
        %2625 = vmatpush1.msra.mxu0 0.0
        %2626 = vmatprep.subr.mxu0 0.0
        %2627 = vmatpush1.msra.mxu0 0.0
        %2628 = vmatprep.subr.mxu0 0.0
        %2629 = vmatpush1.msra.mxu0 0.0
        %2630 = vmatprep.subr.mxu0 0.0
        %2631 = vmatpush1.msra.mxu0 0.0
        %2632 = vmatprep.subr.mxu0 0.0
        %2633 = vmatpush1.msra.mxu0 0.0
        %2634 = vmatprep.subr.mxu0 0.0
        %2635 = vmatpush1.msra.mxu0 0.0
        %2636 = vmatprep.subr.mxu0 0.0
        %2637 = vmatpush1.msra.mxu0 0.0
        %2638 = vmatprep.subr.mxu0 0.0
        %2639 = vmatpush1.msra.mxu0 0.0
        %2640 = vmatprep.subr.mxu0 0.0
        %2641 = vmatpush1.msra.mxu0 0.0
        %2642 = vmatprep.subr.mxu0 0.0
        %2643 = vmatpush1.msra.mxu0 0.0
        %2644 = vmatprep.subr.mxu0 0.0
        %2645 = vmatpush1.msra.mxu0 0.0
        %2646 = vmatprep.subr.mxu0 0.0
        %2647 = vmatpush1.msra.mxu0 0.0
        %2648 = vmatprep.subr.mxu0 0.0
        %2649 = vmatpush1.msra.mxu0 0.0
        %2650 = vmatprep.subr.mxu0 0.0
        %2651 = vmatpush1.msra.mxu0 0.0
        %2652 = vmatprep.subr.mxu0 0.0
        %2653 = vmatpush1.msra.mxu0 0.0
        %2654 = vmatprep.subr.mxu0 0.0
        %2655 = vmatpush1.msra.mxu0 0.0
        %2656 = vmatprep.subr.mxu0 0.0
        %2657 = vmatpush1.msra.mxu0 0.0
        %2658 = vmatprep.subr.mxu0 0.0
        %2659 = vmatpush1.msra.mxu0 0.0
        %2660 = vmatprep.subr.mxu0 0.0
        %2661 = vmatpush1.msra.mxu0 0.0
        %2662 = vmatprep.subr.mxu0 0.0
        %2663 = vmatpush1.msra.mxu0 0.0
        %2664 = vmatprep.subr.mxu0 0.0
        %2665 = vmatpush1.msra.mxu0 0.0
        %2666 = vmatprep.mubr.f32.mxu0 0.0
        %2667 = vmatmul.mubr.f32.gmra.mrb[0].mxu0 %v2006
        %v2668 = vpop.f32.mrb[0].mxu0
        %v2669 = vadd.f32 %v2601, %v2668
        %v2670 = vpop.f32.mrb[0].mxu0
        %2671 = vmatprep.mubr.f32.mxu0 0.0
        %2672 = vmatmul.mubr.f32.gmra.mrb[0].mxu0 %v2009
        %v2673 = vpop.f32.mrb[0].mxu0
        %v2674 = vadd.f32 %v2601, %v2673
        %v2675 = vpop.f32.mrb[0].mxu0
        %2676 = vmatprep.mubr.f32.mxu0 0.0
        %2677 = vmatmul.mubr.f32.gmra.mrb[0].mxu0 %v2012
        %v2678 = vpop.f32.mrb[0].mxu0
        %v2679 = vadd.f32 %v2601, %v2678
        %v2680 = vpop.f32.mrb[0].mxu0
        %2681 = vdwg.mxu0
        %s2682 = scalar_lea.vmem %s2, 440
        %v2683 = vld [vmem:[%s2682] sm:$0xff]
        %v2684 = vld [vmem:[%s2682 + $0x8] sm:$0xff]
        %v2685 = vld [vmem:[%s2682 + $0x10] sm:$0xff]
        %v2686 = vld [vmem:[%s2682 + $0x18] sm:$0xff]
        %v2687 = vld [vmem:[%s2682 + $0x20] sm:$0x1]
        %v2688 = vlaneseq
        %v2689 = vshrl.u32 %v2688, 7
        %v2690 = vsub.s32 0, %v2689
        %v2691 = vrot.slane %v2687, %v2690
        %2692 = vmatprep.subr.mxu0 0.0
        %2693 = vmatpush1.msra.mxu0 %v2683
        %2694 = vmatprep.subr.mxu0 0.0
        %2695 = vmatpush1.msra.mxu0 %v2684
        %2696 = vmatprep.subr.mxu0 0.0
        %2697 = vmatpush1.msra.mxu0 %v2685
        %2698 = vmatprep.subr.mxu0 0.0
        %2699 = vmatpush1.msra.mxu0 %v2686
        %2700 = vmatprep.subr.mxu0 0.0
        %2701 = vmatpush1.msra.mxu0 0.0
        %2702 = vmatprep.subr.mxu0 0.0
        %2703 = vmatpush1.msra.mxu0 0.0
        %2704 = vmatprep.subr.mxu0 0.0
        %2705 = vmatpush1.msra.mxu0 0.0
        %2706 = vmatprep.subr.mxu0 0.0
        %2707 = vmatpush1.msra.mxu0 0.0
        %2708 = vmatprep.subr.mxu0 0.0
        %2709 = vmatpush1.msra.mxu0 0.0
        %2710 = vmatprep.subr.mxu0 0.0
        %2711 = vmatpush1.msra.mxu0 0.0
        %2712 = vmatprep.subr.mxu0 0.0
        %2713 = vmatpush1.msra.mxu0 0.0
        %2714 = vmatprep.subr.mxu0 0.0
        %2715 = vmatpush1.msra.mxu0 0.0
        %2716 = vmatprep.subr.mxu0 0.0
        %2717 = vmatpush1.msra.mxu0 0.0
        %2718 = vmatprep.subr.mxu0 0.0
        %2719 = vmatpush1.msra.mxu0 0.0
        %2720 = vmatprep.subr.mxu0 0.0
        %2721 = vmatpush1.msra.mxu0 0.0
        %2722 = vmatprep.subr.mxu0 0.0
        %2723 = vmatpush1.msra.mxu0 0.0
        %2724 = vmatprep.subr.mxu0 0.0
        %2725 = vmatpush1.msra.mxu0 0.0
        %2726 = vmatprep.subr.mxu0 0.0
        %2727 = vmatpush1.msra.mxu0 0.0
        %2728 = vmatprep.subr.mxu0 0.0
        %2729 = vmatpush1.msra.mxu0 0.0
        %2730 = vmatprep.subr.mxu0 0.0
        %2731 = vmatpush1.msra.mxu0 0.0
        %2732 = vmatprep.subr.mxu0 0.0
        %2733 = vmatpush1.msra.mxu0 0.0
        %2734 = vmatprep.subr.mxu0 0.0
        %2735 = vmatpush1.msra.mxu0 0.0
        %2736 = vmatprep.subr.mxu0 0.0
        %2737 = vmatpush1.msra.mxu0 0.0
        %2738 = vmatprep.subr.mxu0 0.0
        %2739 = vmatpush1.msra.mxu0 0.0
        %2740 = vmatprep.subr.mxu0 0.0
        %2741 = vmatpush1.msra.mxu0 0.0
        %2742 = vmatprep.subr.mxu0 0.0
        %2743 = vmatpush1.msra.mxu0 0.0
        %2744 = vmatprep.subr.mxu0 0.0
        %2745 = vmatpush1.msra.mxu0 0.0
        %2746 = vmatprep.subr.mxu0 0.0
        %2747 = vmatpush1.msra.mxu0 0.0
        %2748 = vmatprep.subr.mxu0 0.0
        %2749 = vmatpush1.msra.mxu0 0.0
        %2750 = vmatprep.subr.mxu0 0.0
        %2751 = vmatpush1.msra.mxu0 0.0
        %2752 = vmatprep.subr.mxu0 0.0
        %2753 = vmatpush1.msra.mxu0 0.0
        %2754 = vmatprep.subr.mxu0 0.0
        %2755 = vmatpush1.msra.mxu0 0.0
        %2756 = vmatprep.mubr.f32.mxu0 0.0
        %2757 = vmatmul.mubr.f32.gmra.mrb[0].mxu0 %v2006
        %v2758 = vpop.f32.mrb[0].mxu0
        %v2759 = vadd.f32 %v2691, %v2758
        %v2760 = vpop.f32.mrb[0].mxu0
        %2761 = vmatprep.mubr.f32.mxu0 0.0
        %2762 = vmatmul.mubr.f32.gmra.mrb[0].mxu0 %v2009
        %v2763 = vpop.f32.mrb[0].mxu0
        %v2764 = vadd.f32 %v2691, %v2763
        %v2765 = vpop.f32.mrb[0].mxu0
        %2766 = vmatprep.mubr.f32.mxu0 0.0
        %2767 = vmatmul.mubr.f32.gmra.mrb[0].mxu0 %v2012
        %v2768 = vpop.f32.mrb[0].mxu0
        %v2769 = vadd.f32 %v2691, %v2768
        %v2770 = vpop.f32.mrb[0].mxu0
        %2771 = vdwg.mxu0
        %v2773 = vsel %vm729, %v2579, 0
        %v2776 = vsel %vm729, %v2584, 0
        %v2779 = vsel %vm729, %v2589, 0
        %v2782 = vsel %vm729, %v2669, 0
        %v2785 = vsel %vm729, %v2674, 0
        %v2788 = vsel %vm729, %v2679, 0
        %2790 = vmatprep.subr.mxu0 0.0
        %2791 = vmatpush1.xpose.msra.mxu0 %v2782
        %2792 = vmatprep.subr.mxu0 0.0
        %2793 = vmatpush1.xpose.msra.mxu0 %v2785
        %2794 = vmatprep.subr.mxu0 0.0
        %2795 = vmatpush1.xpose.msra.mxu0 %v2788
        %2796 = vmatprep.subr.mxu0 0.0
        %2797 = vmatpush1.xpose.msra.mxu0 0.0
        %2798 = vmatprep.subr.mxu0 0.0
        %2799 = vmatpush1.xpose.msra.mxu0 0.0
        %2800 = vmatprep.subr.mxu0 0.0
        %2801 = vmatpush1.xpose.msra.mxu0 0.0
        %2802 = vmatprep.subr.mxu0 0.0
        %2803 = vmatpush1.xpose.msra.mxu0 0.0
        %2804 = vmatprep.subr.mxu0 0.0
        %2805 = vmatpush1.xpose.msra.mxu0 0.0
        %2806 = vmatprep.subr.mxu0 0.0
        %2807 = vmatpush1.xpose.msra.mxu0 0.0
        %2808 = vmatprep.subr.mxu0 0.0
        %2809 = vmatpush1.xpose.msra.mxu0 0.0
        %2810 = vmatprep.subr.mxu0 0.0
        %2811 = vmatpush1.xpose.msra.mxu0 0.0
        %2812 = vmatprep.subr.mxu0 0.0
        %2813 = vmatpush1.xpose.msra.mxu0 0.0
        %2814 = vmatprep.subr.mxu0 0.0
        %2815 = vmatpush1.xpose.msra.mxu0 0.0
        %2816 = vmatprep.subr.mxu0 0.0
        %2817 = vmatpush1.xpose.msra.mxu0 0.0
        %2818 = vmatprep.subr.mxu0 0.0
        %2819 = vmatpush1.xpose.msra.mxu0 0.0
        %2820 = vmatprep.subr.mxu0 0.0
        %2821 = vmatpush1.xpose.msra.mxu0 0.0
        %2822 = vmatprep.subr.mxu0 0.0
        %2823 = vmatpush1.xpose.msra.mxu0 0.0
        %2824 = vmatprep.subr.mxu0 0.0
        %2825 = vmatpush1.xpose.msra.mxu0 0.0
        %2826 = vmatprep.subr.mxu0 0.0
        %2827 = vmatpush1.xpose.msra.mxu0 0.0
        %2828 = vmatprep.subr.mxu0 0.0
        %2829 = vmatpush1.xpose.msra.mxu0 0.0
        %2830 = vmatprep.subr.mxu0 0.0
        %2831 = vmatpush1.xpose.msra.mxu0 0.0
        %2832 = vmatprep.subr.mxu0 0.0
        %2833 = vmatpush1.xpose.msra.mxu0 0.0
        %2834 = vmatprep.subr.mxu0 0.0
        %2835 = vmatpush1.xpose.msra.mxu0 0.0
        %2836 = vmatprep.subr.mxu0 0.0
        %2837 = vmatpush1.xpose.msra.mxu0 0.0
        %2838 = vmatprep.subr.mxu0 0.0
        %2839 = vmatpush1.xpose.msra.mxu0 0.0
        %2840 = vmatprep.subr.mxu0 0.0
        %2841 = vmatpush1.xpose.msra.mxu0 0.0
        %2842 = vmatprep.subr.mxu0 0.0
        %2843 = vmatpush1.xpose.msra.mxu0 0.0
        %2844 = vmatprep.subr.mxu0 0.0
        %2845 = vmatpush1.xpose.msra.mxu0 0.0
        %2846 = vmatprep.subr.mxu0 0.0
        %2847 = vmatpush1.xpose.msra.mxu0 0.0
        %2848 = vmatprep.subr.mxu0 0.0
        %2849 = vmatpush1.xpose.msra.mxu0 0.0
        %2850 = vmatprep.subr.mxu0 0.0
        %2851 = vmatpush1.xpose.msra.mxu0 0.0
        %2852 = vmatprep.subr.mxu0 0.0
        %2853 = vmatpush1.xpose.msra.mxu0 0.0
        %2854 = vmatprep.mubr.f32.mxu0 0.0
        %2855 = vmatmul.mubr.f32.gmra.mrb[0].mxu0 %v2773
        %v2856 = vpop.f32.mrb[0].mxu0
        %v2857 = vadd.f32 0.0, %v2856
        %v2858 = vpop.f32.mrb[0].mxu0
        %2859 = vmatprep.mubr.f32.mxu0 0.0
        %2860 = vmatmul.mubr.f32.gmra.mrb[0].mxu0 %v2776
        %v2861 = vpop.f32.mrb[0].mxu0
        %v2862 = vadd.f32 0.0, %v2861
        %v2863 = vpop.f32.mrb[0].mxu0
        %2864 = vmatprep.mubr.f32.mxu0 0.0
        %2865 = vmatmul.mubr.f32.gmra.mrb[0].mxu0 %v2779
        %v2866 = vpop.f32.mrb[0].mxu0
        %v2867 = vadd.f32 0.0, %v2866
        %v2868 = vpop.f32.mrb[0].mxu0
        %2869 = vdwg.mxu0
        %v2870 = vmul.f32 %v2857, 0.25
        %v2871 = vmul.f32 %v2862, 0.25
        %v2872 = vmul.f32 %v2867, 0.25
        %v2873 = vsel %vm390, %v2870, -1e+30
        %v2874 = vsel %vm390, %v2871, -1e+30
        %v2875 = vsel %vm390, %v2872, -1e+30
        %v2876 = vsel %vm834, %v2873, -inf
        %2877 = vmax.xlane.f32.xlu0 %v2876
        %v2878 = vpop.xlane.xlu0 %2877
        %v2879 = vsel %vm834, %v2874, -inf
        %2880 = vmax.xlane.f32.xlu0 %v2879
        %v2881 = vpop.xlane.xlu0 %2880
        %v2882 = vsel %vm834, %v2875, -inf
        %2883 = vmax.xlane.f32.xlu0 %v2882
        %v2884 = vpop.xlane.xlu0 %2883
        %v2885 = vsub.f32 %v2873, %v2878
        %v2886 = vsub.f32 %v2874, %v2881
        %v2887 = vsub.f32 %v2875, %v2884
        %v2888 = vmul.f32 %v2885, 1.442695
        %v2889 = vpow.pop %v2888
        %v2890 = vmul.f32 %v2886, 1.442695
        %v2891 = vpow.pop %v2890
        %v2892 = vmul.f32 %v2887, 1.442695
        %v2893 = vpow.pop %v2892
        %v2894 = vsel %vm834, %v2889, 0.0
        %2895 = vadd.xlane.f32.xlu0 %v2894
        %v2896 = vpop.xlane.xlu0 %2895
        %v2897 = vsel %vm834, %v2891, 0.0
        %2898 = vadd.xlane.f32.xlu0 %v2897
        %v2899 = vpop.xlane.xlu0 %2898
        %v2900 = vsel %vm834, %v2893, 0.0
        %2901 = vadd.xlane.f32.xlu0 %v2900
        %v2902 = vpop.xlane.xlu0 %2901
        %v2903 = vrcp.pop %v2896
        %v2904 = vrcp.pop %v2899
        %v2905 = vrcp.pop %v2902
        %v2907 = vsel %vm834, %v2889, 0
        %v2910 = vsel %vm834, %v2891, 0
        %v2913 = vsel %vm834, %v2893, 0
        %2915 = vmatprep.subr.mxu0 0.0
        %2916 = vmatpush1.msra.mxu0 %v2759
        %2917 = vmatprep.subr.mxu0 0.0
        %2918 = vmatpush1.msra.mxu0 %v2764
        %2919 = vmatprep.subr.mxu0 0.0
        %2920 = vmatpush1.msra.mxu0 %v2769
        %2921 = vmatprep.subr.mxu0 0.0
        %2922 = vmatpush1.msra.mxu0 0.0
        %2923 = vmatprep.subr.mxu0 0.0
        %2924 = vmatpush1.msra.mxu0 0.0
        %2925 = vmatprep.subr.mxu0 0.0
        %2926 = vmatpush1.msra.mxu0 0.0
        %2927 = vmatprep.subr.mxu0 0.0
        %2928 = vmatpush1.msra.mxu0 0.0
        %2929 = vmatprep.subr.mxu0 0.0
        %2930 = vmatpush1.msra.mxu0 0.0
        %2931 = vmatprep.subr.mxu0 0.0
        %2932 = vmatpush1.msra.mxu0 0.0
        %2933 = vmatprep.subr.mxu0 0.0
        %2934 = vmatpush1.msra.mxu0 0.0
        %2935 = vmatprep.subr.mxu0 0.0
        %2936 = vmatpush1.msra.mxu0 0.0
        %2937 = vmatprep.subr.mxu0 0.0
        %2938 = vmatpush1.msra.mxu0 0.0
        %2939 = vmatprep.subr.mxu0 0.0
        %2940 = vmatpush1.msra.mxu0 0.0
        %2941 = vmatprep.subr.mxu0 0.0
        %2942 = vmatpush1.msra.mxu0 0.0
        %2943 = vmatprep.subr.mxu0 0.0
        %2944 = vmatpush1.msra.mxu0 0.0
        %2945 = vmatprep.subr.mxu0 0.0
        %2946 = vmatpush1.msra.mxu0 0.0
        %2947 = vmatprep.subr.mxu0 0.0
        %2948 = vmatpush1.msra.mxu0 0.0
        %2949 = vmatprep.subr.mxu0 0.0
        %2950 = vmatpush1.msra.mxu0 0.0
        %2951 = vmatprep.subr.mxu0 0.0
        %2952 = vmatpush1.msra.mxu0 0.0
        %2953 = vmatprep.subr.mxu0 0.0
        %2954 = vmatpush1.msra.mxu0 0.0
        %2955 = vmatprep.subr.mxu0 0.0
        %2956 = vmatpush1.msra.mxu0 0.0
        %2957 = vmatprep.subr.mxu0 0.0
        %2958 = vmatpush1.msra.mxu0 0.0
        %2959 = vmatprep.subr.mxu0 0.0
        %2960 = vmatpush1.msra.mxu0 0.0
        %2961 = vmatprep.subr.mxu0 0.0
        %2962 = vmatpush1.msra.mxu0 0.0
        %2963 = vmatprep.subr.mxu0 0.0
        %2964 = vmatpush1.msra.mxu0 0.0
        %2965 = vmatprep.subr.mxu0 0.0
        %2966 = vmatpush1.msra.mxu0 0.0
        %2967 = vmatprep.subr.mxu0 0.0
        %2968 = vmatpush1.msra.mxu0 0.0
        %2969 = vmatprep.subr.mxu0 0.0
        %2970 = vmatpush1.msra.mxu0 0.0
        %2971 = vmatprep.subr.mxu0 0.0
        %2972 = vmatpush1.msra.mxu0 0.0
        %2973 = vmatprep.subr.mxu0 0.0
        %2974 = vmatpush1.msra.mxu0 0.0
        %2975 = vmatprep.subr.mxu0 0.0
        %2976 = vmatpush1.msra.mxu0 0.0
        %2977 = vmatprep.subr.mxu0 0.0
        %2978 = vmatpush1.msra.mxu0 0.0
        %2979 = vmatprep.mubr.f32.mxu0 0.0
        %2980 = vmatmul.mubr.f32.gmra.mrb[0].mxu0 %v2907
        %v2981 = vpop.f32.mrb[0].mxu0
        %v2982 = vadd.f32 0.0, %v2981
        %v2983 = vpop.f32.mrb[0].mxu0
        %2984 = vmatprep.mubr.f32.mxu0 0.0
        %2985 = vmatmul.mubr.f32.gmra.mrb[0].mxu0 %v2910
        %v2986 = vpop.f32.mrb[0].mxu0
        %v2987 = vadd.f32 0.0, %v2986
        %v2988 = vpop.f32.mrb[0].mxu0
        %2989 = vmatprep.mubr.f32.mxu0 0.0
        %2990 = vmatmul.mubr.f32.gmra.mrb[0].mxu0 %v2913
        %v2991 = vpop.f32.mrb[0].mxu0
        %v2992 = vadd.f32 0.0, %v2991
        %v2993 = vpop.f32.mrb[0].mxu0
        %2994 = vdwg.mxu0
        %v2995 = vmul.f32 %v2982, %v2903
        %v2996 = vmul.f32 %v2987, %v2904
        %v2997 = vmul.f32 %v2992, %v2905
        %v2998 = vld [vmem:[%s1939 + $0x10] sm:$0xff]
        %v2999 = vld [vmem:[%s1939 + $0x18] sm:$0xff]
        %v3001 = vsel %vm729, %v2995, 0
        %v3004 = vsel %vm729, %v2996, 0
        %v3007 = vsel %vm729, %v2997, 0
        %3009 = vmatprep.subr.mxu0 0.0
        %3010 = vmatpush1.msra.mxu0 %v2998
        %3011 = vmatprep.subr.mxu0 0.0
        %3012 = vmatpush1.msra.mxu0 %v2999
        %3013 = vmatprep.subr.mxu0 0.0
        %3014 = vmatpush1.msra.mxu0 0.0
        %3015 = vmatprep.subr.mxu0 0.0
        %3016 = vmatpush1.msra.mxu0 0.0
        %3017 = vmatprep.subr.mxu0 0.0
        %3018 = vmatpush1.msra.mxu0 0.0
        %3019 = vmatprep.subr.mxu0 0.0
        %3020 = vmatpush1.msra.mxu0 0.0
        %3021 = vmatprep.subr.mxu0 0.0
        %3022 = vmatpush1.msra.mxu0 0.0
        %3023 = vmatprep.subr.mxu0 0.0
        %3024 = vmatpush1.msra.mxu0 0.0
        %3025 = vmatprep.subr.mxu0 0.0
        %3026 = vmatpush1.msra.mxu0 0.0
        %3027 = vmatprep.subr.mxu0 0.0
        %3028 = vmatpush1.msra.mxu0 0.0
        %3029 = vmatprep.subr.mxu0 0.0
        %3030 = vmatpush1.msra.mxu0 0.0
        %3031 = vmatprep.subr.mxu0 0.0
        %3032 = vmatpush1.msra.mxu0 0.0
        %3033 = vmatprep.subr.mxu0 0.0
        %3034 = vmatpush1.msra.mxu0 0.0
        %3035 = vmatprep.subr.mxu0 0.0
        %3036 = vmatpush1.msra.mxu0 0.0
        %3037 = vmatprep.subr.mxu0 0.0
        %3038 = vmatpush1.msra.mxu0 0.0
        %3039 = vmatprep.subr.mxu0 0.0
        %3040 = vmatpush1.msra.mxu0 0.0
        %3041 = vmatprep.subr.mxu0 0.0
        %3042 = vmatpush1.msra.mxu0 0.0
        %3043 = vmatprep.subr.mxu0 0.0
        %3044 = vmatpush1.msra.mxu0 0.0
        %3045 = vmatprep.subr.mxu0 0.0
        %3046 = vmatpush1.msra.mxu0 0.0
        %3047 = vmatprep.subr.mxu0 0.0
        %3048 = vmatpush1.msra.mxu0 0.0
        %3049 = vmatprep.subr.mxu0 0.0
        %3050 = vmatpush1.msra.mxu0 0.0
        %3051 = vmatprep.subr.mxu0 0.0
        %3052 = vmatpush1.msra.mxu0 0.0
        %3053 = vmatprep.subr.mxu0 0.0
        %3054 = vmatpush1.msra.mxu0 0.0
        %3055 = vmatprep.subr.mxu0 0.0
        %3056 = vmatpush1.msra.mxu0 0.0
        %3057 = vmatprep.subr.mxu0 0.0
        %3058 = vmatpush1.msra.mxu0 0.0
        %3059 = vmatprep.subr.mxu0 0.0
        %3060 = vmatpush1.msra.mxu0 0.0
        %3061 = vmatprep.subr.mxu0 0.0
        %3062 = vmatpush1.msra.mxu0 0.0
        %3063 = vmatprep.subr.mxu0 0.0
        %3064 = vmatpush1.msra.mxu0 0.0
        %3065 = vmatprep.subr.mxu0 0.0
        %3066 = vmatpush1.msra.mxu0 0.0
        %3067 = vmatprep.subr.mxu0 0.0
        %3068 = vmatpush1.msra.mxu0 0.0
        %3069 = vmatprep.subr.mxu0 0.0
        %3070 = vmatpush1.msra.mxu0 0.0
        %3071 = vmatprep.subr.mxu0 0.0
        %3072 = vmatpush1.msra.mxu0 0.0
        %3073 = vmatprep.mubr.f32.mxu0 0.0
        %3074 = vmatmul.mubr.f32.gmra.mrb[0].mxu0 %v3001
        %v3075 = vpop.f32.mrb[0].mxu0
        %v3076 = vadd.f32 0.0, %v3075
        %v3077 = vpop.f32.mrb[0].mxu0
        %3078 = vmatprep.mubr.f32.mxu0 0.0
        %3079 = vmatmul.mubr.f32.gmra.mrb[0].mxu0 %v3004
        %v3080 = vpop.f32.mrb[0].mxu0
        %v3081 = vadd.f32 0.0, %v3080
        %v3082 = vpop.f32.mrb[0].mxu0
        %3083 = vmatprep.mubr.f32.mxu0 0.0
        %3084 = vmatmul.mubr.f32.gmra.mrb[0].mxu0 %v3007
        %v3085 = vpop.f32.mrb[0].mxu0
        %v3086 = vadd.f32 0.0, %v3085
        %v3087 = vpop.f32.mrb[0].mxu0
        %3088 = vdwg.mxu0
        %v3090 = vsel %vm729, %v2497, 0
        %v3093 = vsel %vm729, %v2498, 0
        %v3096 = vsel %vm729, %v2499, 0
        %3098 = vmatprep.subr.mxu0 0.0
        %3099 = vmatpush1.msra.mxu0 %v2500
        %3100 = vmatprep.subr.mxu0 0.0
        %3101 = vmatpush1.msra.mxu0 %v2501
        %3102 = vmatprep.subr.mxu0 0.0
        %3103 = vmatpush1.msra.mxu0 0.0
        %3104 = vmatprep.subr.mxu0 0.0
        %3105 = vmatpush1.msra.mxu0 0.0
        %3106 = vmatprep.subr.mxu0 0.0
        %3107 = vmatpush1.msra.mxu0 0.0
        %3108 = vmatprep.subr.mxu0 0.0
        %3109 = vmatpush1.msra.mxu0 0.0
        %3110 = vmatprep.subr.mxu0 0.0
        %3111 = vmatpush1.msra.mxu0 0.0
        %3112 = vmatprep.subr.mxu0 0.0
        %3113 = vmatpush1.msra.mxu0 0.0
        %3114 = vmatprep.subr.mxu0 0.0
        %3115 = vmatpush1.msra.mxu0 0.0
        %3116 = vmatprep.subr.mxu0 0.0
        %3117 = vmatpush1.msra.mxu0 0.0
        %3118 = vmatprep.subr.mxu0 0.0
        %3119 = vmatpush1.msra.mxu0 0.0
        %3120 = vmatprep.subr.mxu0 0.0
        %3121 = vmatpush1.msra.mxu0 0.0
        %3122 = vmatprep.subr.mxu0 0.0
        %3123 = vmatpush1.msra.mxu0 0.0
        %3124 = vmatprep.subr.mxu0 0.0
        %3125 = vmatpush1.msra.mxu0 0.0
        %3126 = vmatprep.subr.mxu0 0.0
        %3127 = vmatpush1.msra.mxu0 0.0
        %3128 = vmatprep.subr.mxu0 0.0
        %3129 = vmatpush1.msra.mxu0 0.0
        %3130 = vmatprep.subr.mxu0 0.0
        %3131 = vmatpush1.msra.mxu0 0.0
        %3132 = vmatprep.subr.mxu0 0.0
        %3133 = vmatpush1.msra.mxu0 0.0
        %3134 = vmatprep.subr.mxu0 0.0
        %3135 = vmatpush1.msra.mxu0 0.0
        %3136 = vmatprep.subr.mxu0 0.0
        %3137 = vmatpush1.msra.mxu0 0.0
        %3138 = vmatprep.subr.mxu0 0.0
        %3139 = vmatpush1.msra.mxu0 0.0
        %3140 = vmatprep.subr.mxu0 0.0
        %3141 = vmatpush1.msra.mxu0 0.0
        %3142 = vmatprep.subr.mxu0 0.0
        %3143 = vmatpush1.msra.mxu0 0.0
        %3144 = vmatprep.subr.mxu0 0.0
        %3145 = vmatpush1.msra.mxu0 0.0
        %3146 = vmatprep.subr.mxu0 0.0
        %3147 = vmatpush1.msra.mxu0 0.0
        %3148 = vmatprep.subr.mxu0 0.0
        %3149 = vmatpush1.msra.mxu0 0.0
        %3150 = vmatprep.subr.mxu0 0.0
        %3151 = vmatpush1.msra.mxu0 0.0
        %3152 = vmatprep.subr.mxu0 0.0
        %3153 = vmatpush1.msra.mxu0 0.0
        %3154 = vmatprep.subr.mxu0 0.0
        %3155 = vmatpush1.msra.mxu0 0.0
        %3156 = vmatprep.subr.mxu0 0.0
        %3157 = vmatpush1.msra.mxu0 0.0
        %3158 = vmatprep.subr.mxu0 0.0
        %3159 = vmatpush1.msra.mxu0 0.0
        %3160 = vmatprep.subr.mxu0 0.0
        %3161 = vmatpush1.msra.mxu0 0.0
        %3162 = vmatprep.mubr.f32.mxu0 0.0
        %3163 = vmatmul.mubr.f32.gmra.mrb[0].mxu0 %v3090
        %v3164 = vpop.f32.mrb[0].mxu0
        %v3165 = vadd.f32 %v3076, %v3164
        %v3166 = vpop.f32.mrb[0].mxu0
        %3167 = vmatprep.mubr.f32.mxu0 0.0
        %3168 = vmatmul.mubr.f32.gmra.mrb[0].mxu0 %v3093
        %v3169 = vpop.f32.mrb[0].mxu0
        %v3170 = vadd.f32 %v3081, %v3169
        %v3171 = vpop.f32.mrb[0].mxu0
        %3172 = vmatprep.mubr.f32.mxu0 0.0
        %3173 = vmatmul.mubr.f32.gmra.mrb[0].mxu0 %v3096
        %v3174 = vpop.f32.mrb[0].mxu0
        %v3175 = vadd.f32 %v3086, %v3174
        %v3176 = vpop.f32.mrb[0].mxu0
        %3177 = vdwg.mxu0
        %v3178 = vadd.f32 %v1932, %v3165
        %v3179 = vadd.f32 %v1933, %v3170
        %v3180 = vadd.f32 %v1934, %v3175
        %v3181 = vld [vmem:[%s1939 + $0x64] sm:$0x1]
        %v3182 = vlaneseq
        %v3183 = vshrl.u32 %v3182, 7
        %v3184 = vsub.s32 0, %v3183
        %v3185 = vrot.slane %v3181, %v3184
        %v3186 = vadd.f32 %v3178, %v3185
        %v3187 = vadd.f32 %v3179, %v3185
        %v3188 = vadd.f32 %v3180, %v3185
        %s3189 = scalar_lea.vmem %s268, 72 [#allocation2]
        %3190 = vst.msk [vmem:[%s3189] sm:$0xff] %vm391, %v3186
        %3191 = vst.msk [vmem:[%s3189 + $0x8] sm:$0xff] %vm391, %v3187
        %3192 = vst.msk [vmem:[%s3189 + $0x10] sm:$0xff] %vm391, %v3188
        %v3193 = vld [vmem:[%s1939 + $0x62] sm:$0x1]
        %v3194 = vld [vmem:[%s1939 + $0x63] sm:$0x1]
        %v3195 = vsel %vm391, %v3186, 0.0
        %3196 = vadd.xlane.f32.xlu0 %v3195
        %v3197 = vpop.xlane.xlu0 %3196
        %v3198 = vsel %vm391, %v3187, 0.0
        %3199 = vadd.xlane.f32.xlu0 %v3198
        %v3200 = vpop.xlane.xlu0 %3199
        %v3201 = vsel %vm391, %v3188, 0.0
        %3202 = vadd.xlane.f32.xlu0 %v3201
        %v3203 = vpop.xlane.xlu0 %3202
        %v3204 = vmul.f32 %v3197, %v406
        %v3205 = vmul.f32 %v3200, %v406
        %v3206 = vmul.f32 %v3203, %v406
        %v3207 = vsub.f32 %v3186, %v3204
        %v3208 = vsub.f32 %v3187, %v3205
        %v3209 = vsub.f32 %v3188, %v3206
        %v3210 = vmul.f32 %v3207, %v3207
        %v3211 = vmul.f32 %v3208, %v3208
        %v3212 = vmul.f32 %v3209, %v3209
        %v3213 = vsel %vm391, %v3210, 0.0
        %3214 = vadd.xlane.f32.xlu0 %v3213
        %v3215 = vpop.xlane.xlu0 %3214
        %v3216 = vsel %vm391, %v3211, 0.0
        %3217 = vadd.xlane.f32.xlu0 %v3216
        %v3218 = vpop.xlane.xlu0 %3217
        %v3219 = vsel %vm391, %v3212, 0.0
        %3220 = vadd.xlane.f32.xlu0 %v3219
        %v3221 = vpop.xlane.xlu0 %3220
        %v3222 = vmul.f32 %v3215, %v406
        %v3223 = vmul.f32 %v3218, %v406
        %v3224 = vmul.f32 %v3221, %v406
        %v3225 = vadd.f32 %v3222, 1e-06
        %v3226 = vadd.f32 %v3223, 1e-06
        %v3227 = vadd.f32 %v3224, 1e-06
        %v3228 = vrsqrt.pop %v3225
        %v3229 = vrsqrt.pop %v3226
        %v3230 = vrsqrt.pop %v3227
        %v3231 = vmul.f32 %v3207, %v3228
        %v3232 = vmul.f32 %v3208, %v3229
        %v3233 = vmul.f32 %v3209, %v3230
        %v3234 = vlaneseq
        %v3235 = vshrl.u32 %v3234, 7
        %v3236 = vsub.s32 0, %v3235
        %v3237 = vrot.slane %v3193, %v3236
        %v3238 = vmul.f32 %v3231, %v3237
        %v3239 = vmul.f32 %v3232, %v3237
        %v3240 = vmul.f32 %v3233, %v3237
        %v3241 = vlaneseq
        %v3242 = vshrl.u32 %v3241, 7
        %v3243 = vsub.s32 0, %v3242
        %v3244 = vrot.slane %v3194, %v3243
        %v3245 = vadd.f32 %v3238, %v3244
        %v3246 = vadd.f32 %v3239, %v3244
        %v3247 = vadd.f32 %v3240, %v3244
        %s3248 = scalar_lea.vmem %s4, 40
        %v3249 = vld [vmem:[%s3248] sm:$0xff]
        %v3250 = vld [vmem:[%s3248 + $0x8] sm:$0xff]
        %v3251 = vld [vmem:[%s3248 + $0x10] sm:$0xff]
        %v3252 = vld [vmem:[%s3248 + $0x18] sm:$0xff]
        %v3253 = vld [vmem:[%s3248 + $0x20] sm:$0x1]
        %v3254 = vlaneseq
        %v3255 = vshrl.u32 %v3254, 7
        %v3256 = vsub.s32 0, %v3255
        %v3257 = vrot.slane %v3253, %v3256
        %v3259 = vsel %vm391, %v3245, 0
        %v3262 = vsel %vm391, %v3246, 0
        %v3265 = vsel %vm391, %v3247, 0
        %3267 = vmatprep.subr.mxu0 0.0
        %3268 = vmatpush1.msra.mxu0 %v3249
        %3269 = vmatprep.subr.mxu0 0.0
        %3270 = vmatpush1.msra.mxu0 %v3250
        %3271 = vmatprep.subr.mxu0 0.0
        %3272 = vmatpush1.msra.mxu0 %v3251
        %3273 = vmatprep.subr.mxu0 0.0
        %3274 = vmatpush1.msra.mxu0 %v3252
        %3275 = vmatprep.subr.mxu0 0.0
        %3276 = vmatpush1.msra.mxu0 0.0
        %3277 = vmatprep.subr.mxu0 0.0
        %3278 = vmatpush1.msra.mxu0 0.0
        %3279 = vmatprep.subr.mxu0 0.0
        %3280 = vmatpush1.msra.mxu0 0.0
        %3281 = vmatprep.subr.mxu0 0.0
        %3282 = vmatpush1.msra.mxu0 0.0
        %3283 = vmatprep.subr.mxu0 0.0
        %3284 = vmatpush1.msra.mxu0 0.0
        %3285 = vmatprep.subr.mxu0 0.0
        %3286 = vmatpush1.msra.mxu0 0.0
        %3287 = vmatprep.subr.mxu0 0.0
        %3288 = vmatpush1.msra.mxu0 0.0
        %3289 = vmatprep.subr.mxu0 0.0
        %3290 = vmatpush1.msra.mxu0 0.0
        %3291 = vmatprep.subr.mxu0 0.0
        %3292 = vmatpush1.msra.mxu0 0.0
        %3293 = vmatprep.subr.mxu0 0.0
        %3294 = vmatpush1.msra.mxu0 0.0
        %3295 = vmatprep.subr.mxu0 0.0
        %3296 = vmatpush1.msra.mxu0 0.0
        %3297 = vmatprep.subr.mxu0 0.0
        %3298 = vmatpush1.msra.mxu0 0.0
        %3299 = vmatprep.subr.mxu0 0.0
        %3300 = vmatpush1.msra.mxu0 0.0
        %3301 = vmatprep.subr.mxu0 0.0
        %3302 = vmatpush1.msra.mxu0 0.0
        %3303 = vmatprep.subr.mxu0 0.0
        %3304 = vmatpush1.msra.mxu0 0.0
        %3305 = vmatprep.subr.mxu0 0.0
        %3306 = vmatpush1.msra.mxu0 0.0
        %3307 = vmatprep.subr.mxu0 0.0
        %3308 = vmatpush1.msra.mxu0 0.0
        %3309 = vmatprep.subr.mxu0 0.0
        %3310 = vmatpush1.msra.mxu0 0.0
        %3311 = vmatprep.subr.mxu0 0.0
        %3312 = vmatpush1.msra.mxu0 0.0
        %3313 = vmatprep.subr.mxu0 0.0
        %3314 = vmatpush1.msra.mxu0 0.0
        %3315 = vmatprep.subr.mxu0 0.0
        %3316 = vmatpush1.msra.mxu0 0.0
        %3317 = vmatprep.subr.mxu0 0.0
        %3318 = vmatpush1.msra.mxu0 0.0
        %3319 = vmatprep.subr.mxu0 0.0
        %3320 = vmatpush1.msra.mxu0 0.0
        %3321 = vmatprep.subr.mxu0 0.0
        %3322 = vmatpush1.msra.mxu0 0.0
        %3323 = vmatprep.subr.mxu0 0.0
        %3324 = vmatpush1.msra.mxu0 0.0
        %3325 = vmatprep.subr.mxu0 0.0
        %3326 = vmatpush1.msra.mxu0 0.0
        %3327 = vmatprep.subr.mxu0 0.0
        %3328 = vmatpush1.msra.mxu0 0.0
        %3329 = vmatprep.subr.mxu0 0.0
        %3330 = vmatpush1.msra.mxu0 0.0
        %3331 = vmatprep.mubr.f32.mxu0 0.0
        %3332 = vmatmul.mubr.f32.gmra.mrb[0].mxu0 %v3259
        %v3333 = vpop.f32.mrb[0].mxu0
        %v3334 = vadd.f32 %v3257, %v3333
        %v3335 = vpop.f32.mrb[0].mxu0
        %3336 = vmatprep.mubr.f32.mxu0 0.0
        %3337 = vmatmul.mubr.f32.gmra.mrb[0].mxu0 %v3262
        %v3338 = vpop.f32.mrb[0].mxu0
        %v3339 = vadd.f32 %v3257, %v3338
        %v3340 = vpop.f32.mrb[0].mxu0
        %3341 = vmatprep.mubr.f32.mxu0 0.0
        %3342 = vmatmul.mubr.f32.gmra.mrb[0].mxu0 %v3265
        %v3343 = vpop.f32.mrb[0].mxu0
        %v3344 = vadd.f32 %v3257, %v3343
        %v3345 = vpop.f32.mrb[0].mxu0
        %3346 = vdwg.mxu0
        %v3347 = vmul.f32 %v3334, %v3334
        %v3348 = vmul.f32 %v3339, %v3339
        %v3349 = vmul.f32 %v3344, %v3344
        %v3350 = vmul.f32 %v3334, %v3347
        %v3351 = vmul.f32 %v3339, %v3348
        %v3352 = vmul.f32 %v3344, %v3349
        %v3353 = vmul.f32 %v3350, 0.044715
        %v3354 = vmul.f32 %v3351, 0.044715
        %v3355 = vmul.f32 %v3352, 0.044715
        %v3356 = vadd.f32 %v3334, %v3353
        %v3357 = vadd.f32 %v3339, %v3354
        %v3358 = vadd.f32 %v3344, %v3355
        %v3359 = vmul.f32 %v3356, 0.7978846
        %v3360 = vmul.f32 %v3357, 0.7978846
        %v3361 = vmul.f32 %v3358, 0.7978846
        %v3362 = vtanh.pop %v3359
        %v3363 = vtanh.pop %v3360
        %v3364 = vtanh.pop %v3361
        %v3365 = vadd.f32 %v3362, 1.0
        %v3366 = vadd.f32 %v3363, 1.0
        %v3367 = vadd.f32 %v3364, 1.0
        %v3368 = vmul.f32 %v3365, 0.5
        %v3369 = vmul.f32 %v3366, 0.5
        %v3370 = vmul.f32 %v3367, 0.5
        %v3371 = vmul.f32 %v3334, %v3368
        %v3372 = vmul.f32 %v3339, %v3369
        %v3373 = vmul.f32 %v3344, %v3370
        %v3374 = vld [vmem:[%s1939 + $0x20] sm:$0xff]
        %v3375 = vld [vmem:[%s1939 + $0x28] sm:$0xff]
        %v3376 = vld [vmem:[%s1939 + $0x30] sm:$0xff]
        %v3377 = vld [vmem:[%s1939 + $0x38] sm:$0xff]
        %v3378 = vld [vmem:[%s1939 + $0x40] sm:$0xff]
        %v3379 = vld [vmem:[%s1939 + $0x48] sm:$0xff]
        %v3380 = vld [vmem:[%s1939 + $0x50] sm:$0xff]
        %v3381 = vld [vmem:[%s1939 + $0x58] sm:$0xff]
        %v3382 = vld [vmem:[%s1939 + $0x65] sm:$0x1]
        %v3383 = vlaneseq
        %v3384 = vshrl.u32 %v3383, 7
        %v3385 = vsub.s32 0, %v3384
        %v3386 = vrot.slane %v3382, %v3385
        %v3388 = vsel %vm298, %v3371, 0
        %v3391 = vsel %vm298, %v3372, 0
        %v3394 = vsel %vm298, %v3373, 0
        %3396 = vmatprep.subr.mxu0 0.0
        %3397 = vmatpush1.msra.mxu0 %v3374
        %3398 = vmatprep.subr.mxu0 0.0
        %3399 = vmatpush1.msra.mxu0 %v3375
        %3400 = vmatprep.subr.mxu0 0.0
        %3401 = vmatpush1.msra.mxu0 %v3376
        %3402 = vmatprep.subr.mxu0 0.0
        %3403 = vmatpush1.msra.mxu0 %v3377
        %3404 = vmatprep.subr.mxu0 0.0
        %3405 = vmatpush1.msra.mxu0 %v3378
        %3406 = vmatprep.subr.mxu0 0.0
        %3407 = vmatpush1.msra.mxu0 %v3379
        %3408 = vmatprep.subr.mxu0 0.0
        %3409 = vmatpush1.msra.mxu0 %v3380
        %3410 = vmatprep.subr.mxu0 0.0
        %3411 = vmatpush1.msra.mxu0 %v3381
        %3412 = vmatprep.subr.mxu0 0.0
        %3413 = vmatpush1.msra.mxu0 0.0
        %3414 = vmatprep.subr.mxu0 0.0
        %3415 = vmatpush1.msra.mxu0 0.0
        %3416 = vmatprep.subr.mxu0 0.0
        %3417 = vmatpush1.msra.mxu0 0.0
        %3418 = vmatprep.subr.mxu0 0.0
        %3419 = vmatpush1.msra.mxu0 0.0
        %3420 = vmatprep.subr.mxu0 0.0
        %3421 = vmatpush1.msra.mxu0 0.0
        %3422 = vmatprep.subr.mxu0 0.0
        %3423 = vmatpush1.msra.mxu0 0.0
        %3424 = vmatprep.subr.mxu0 0.0
        %3425 = vmatpush1.msra.mxu0 0.0
        %3426 = vmatprep.subr.mxu0 0.0
        %3427 = vmatpush1.msra.mxu0 0.0
        %3428 = vmatprep.subr.mxu0 0.0
        %3429 = vmatpush1.msra.mxu0 0.0
        %3430 = vmatprep.subr.mxu0 0.0
        %3431 = vmatpush1.msra.mxu0 0.0
        %3432 = vmatprep.subr.mxu0 0.0
        %3433 = vmatpush1.msra.mxu0 0.0
        %3434 = vmatprep.subr.mxu0 0.0
        %3435 = vmatpush1.msra.mxu0 0.0
        %3436 = vmatprep.subr.mxu0 0.0
        %3437 = vmatpush1.msra.mxu0 0.0
        %3438 = vmatprep.subr.mxu0 0.0
        %3439 = vmatpush1.msra.mxu0 0.0
        %3440 = vmatprep.subr.mxu0 0.0
        %3441 = vmatpush1.msra.mxu0 0.0
        %3442 = vmatprep.subr.mxu0 0.0
        %3443 = vmatpush1.msra.mxu0 0.0
        %3444 = vmatprep.subr.mxu0 0.0
        %3445 = vmatpush1.msra.mxu0 0.0
        %3446 = vmatprep.subr.mxu0 0.0
        %3447 = vmatpush1.msra.mxu0 0.0
        %3448 = vmatprep.subr.mxu0 0.0
        %3449 = vmatpush1.msra.mxu0 0.0
        %3450 = vmatprep.subr.mxu0 0.0
        %3451 = vmatpush1.msra.mxu0 0.0
        %3452 = vmatprep.subr.mxu0 0.0
        %3453 = vmatpush1.msra.mxu0 0.0
        %3454 = vmatprep.subr.mxu0 0.0
        %3455 = vmatpush1.msra.mxu0 0.0
        %3456 = vmatprep.subr.mxu0 0.0
        %3457 = vmatpush1.msra.mxu0 0.0
        %3458 = vmatprep.subr.mxu0 0.0
        %3459 = vmatpush1.msra.mxu0 0.0
        %3460 = vmatprep.mubr.f32.mxu0 0.0
        %3461 = vmatmul.mubr.f32.gmra.mrb[0].mxu0 %v3388
        %v3462 = vpop.f32.mrb[0].mxu0
        %v3463 = vadd.f32 %v3386, %v3462
        %v3464 = vpop.f32.mrb[0].mxu0
        %3465 = vmatprep.mubr.f32.mxu0 0.0
        %3466 = vmatmul.mubr.f32.gmra.mrb[0].mxu0 %v3391
        %v3467 = vpop.f32.mrb[0].mxu0
        %v3468 = vpop.f32.mrb[0].mxu0
        %3469 = vmatprep.mubr.f32.mxu0 0.0
        %3470 = vmatmul.mubr.f32.gmra.mrb[0].mxu0 %v3394
        %v3471 = vpop.f32.mrb[0].mxu0
        %v3472 = vpop.f32.mrb[0].mxu0
        %3473 = vdwg.mxu0
        %v3474 = vadd.f32 %v3186, %v3463
        %v3475 = vld [vmem:[%s1 + $0x58] sm:$0x1]
        %v3476 = vld [vmem:[%s1 + $0x59] sm:$0x1]
        %v3477 = vsel %vm391, %v3474, 0.0
        %3478 = vadd.xlane.f32.xlu0 %v3477
        %v3479 = vpop.xlane.xlu0 %3478
        %v3480 = vmul.f32 %v3479, %v406
        %v3481 = vsub.f32 %v3474, %v3480
        %v3482 = vmul.f32 %v3481, %v3481
        %v3483 = vsel %vm391, %v3482, 0.0
        %3484 = vadd.xlane.f32.xlu0 %v3483
        %v3485 = vpop.xlane.xlu0 %3484
        %v3486 = vmul.f32 %v3485, %v406
        %v3487 = vadd.f32 %v3486, 1e-06
        %v3488 = vrsqrt.pop %v3487
        %v3489 = vmul.f32 %v3481, %v3488
        %v3490 = vlaneseq
        %v3491 = vshrl.u32 %v3490, 7
        %v3492 = vsub.s32 0, %v3491
        %v3493 = vrot.slane %v3475, %v3492
        %v3494 = vmul.f32 %v3489, %v3493
        %v3495 = vlaneseq
        %v3496 = vshrl.u32 %v3495, 7
        %v3497 = vsub.s32 0, %v3496
        %v3498 = vrot.slane %v3476, %v3497
        %v3499 = vadd.f32 %v3494, %v3498
        %v3500 = vld [vmem:[%s5] sm:$0xff]
        %v3501 = vld [vmem:[%s5 + $0x8] sm:$0xff]
        %v3502 = vld [vmem:[%s5 + $0x10] sm:$0xff]
        %v3503 = vld [vmem:[%s5 + $0x18] sm:$0xff]
        %v3504 = vld [vmem:[%s5 + $0x20] sm:$0x1]
        %v3505 = vlaneseq
        %v3506 = vshrl.u32 %v3505, 7
        %v3507 = vsub.s32 0, %v3506
        %v3508 = vrot.slane %v3504, %v3507
        %v3510 = vsel %vm391, %v3499, 0
        %3512 = vmatprep.subr.mxu0 0.0
        %3513 = vmatpush1.msra.mxu0 %v3500
        %3514 = vmatprep.subr.mxu0 0.0
        %3515 = vmatpush1.msra.mxu0 %v3501
        %3516 = vmatprep.subr.mxu0 0.0
        %3517 = vmatpush1.msra.mxu0 %v3502
        %3518 = vmatprep.subr.mxu0 0.0
        %3519 = vmatpush1.msra.mxu0 %v3503
        %3520 = vmatprep.subr.mxu0 0.0
        %3521 = vmatpush1.msra.mxu0 0.0
        %3522 = vmatprep.subr.mxu0 0.0
        %3523 = vmatpush1.msra.mxu0 0.0
        %3524 = vmatprep.subr.mxu0 0.0
        %3525 = vmatpush1.msra.mxu0 0.0
        %3526 = vmatprep.subr.mxu0 0.0
        %3527 = vmatpush1.msra.mxu0 0.0
        %3528 = vmatprep.subr.mxu0 0.0
        %3529 = vmatpush1.msra.mxu0 0.0
        %3530 = vmatprep.subr.mxu0 0.0
        %3531 = vmatpush1.msra.mxu0 0.0
        %3532 = vmatprep.subr.mxu0 0.0
        %3533 = vmatpush1.msra.mxu0 0.0
        %3534 = vmatprep.subr.mxu0 0.0
        %3535 = vmatpush1.msra.mxu0 0.0
        %3536 = vmatprep.subr.mxu0 0.0
        %3537 = vmatpush1.msra.mxu0 0.0
        %3538 = vmatprep.subr.mxu0 0.0
        %3539 = vmatpush1.msra.mxu0 0.0
        %3540 = vmatprep.subr.mxu0 0.0
        %3541 = vmatpush1.msra.mxu0 0.0
        %3542 = vmatprep.subr.mxu0 0.0
        %3543 = vmatpush1.msra.mxu0 0.0
        %3544 = vmatprep.subr.mxu0 0.0
        %3545 = vmatpush1.msra.mxu0 0.0
        %3546 = vmatprep.subr.mxu0 0.0
        %3547 = vmatpush1.msra.mxu0 0.0
        %3548 = vmatprep.subr.mxu0 0.0
        %3549 = vmatpush1.msra.mxu0 0.0
        %3550 = vmatprep.subr.mxu0 0.0
        %3551 = vmatpush1.msra.mxu0 0.0
        %3552 = vmatprep.subr.mxu0 0.0
        %3553 = vmatpush1.msra.mxu0 0.0
        %3554 = vmatprep.subr.mxu0 0.0
        %3555 = vmatpush1.msra.mxu0 0.0
        %3556 = vmatprep.subr.mxu0 0.0
        %3557 = vmatpush1.msra.mxu0 0.0
        %3558 = vmatprep.subr.mxu0 0.0
        %3559 = vmatpush1.msra.mxu0 0.0
        %3560 = vmatprep.subr.mxu0 0.0
        %3561 = vmatpush1.msra.mxu0 0.0
        %3562 = vmatprep.subr.mxu0 0.0
        %3563 = vmatpush1.msra.mxu0 0.0
        %3564 = vmatprep.subr.mxu0 0.0
        %3565 = vmatpush1.msra.mxu0 0.0
        %3566 = vmatprep.subr.mxu0 0.0
        %3567 = vmatpush1.msra.mxu0 0.0
        %3568 = vmatprep.subr.mxu0 0.0
        %3569 = vmatpush1.msra.mxu0 0.0
        %3570 = vmatprep.subr.mxu0 0.0
        %3571 = vmatpush1.msra.mxu0 0.0
        %3572 = vmatprep.subr.mxu0 0.0
        %3573 = vmatpush1.msra.mxu0 0.0
        %3574 = vmatprep.subr.mxu0 0.0
        %3575 = vmatpush1.msra.mxu0 0.0
        %3576 = vmatprep.mubr.f32.mxu0 0.0
        %3577 = vmatmul.mubr.f32.gmra.mrb[0].mxu0 %v3510
        %v3578 = vpop.f32.mrb[0].mxu0
        %v3579 = vadd.f32 %v3508, %v3578
        %v3580 = vpop.f32.mrb[0].mxu0
        %3581 = vdwg.mxu0
        %3582 = vst [vmem:[%s283] sm:$0xff] %v3579
        %s3583 = sand.u32 %s158, 1
        %s3584 = sand.u32 %s158, 1
        %s3585 = smul.addr %s3584, 96
        %s3586 = scalar_lea.vmem [#allocation2], %s3585
        %p3587 = scmp.lt.s32.totalorder %s19, 1
        %s3588 = scalar_select %p3587, %s19, 1
        %s3589 = smul.addr %s3588, 8
        %s3590 = scalar_lea.vmem %s7, %s3589
        // Predicated region
        $region45: #{vit_forward_fused.1} parent=43 // pred_check
          %p3591 = pneg %p168
        $region46: #{vit_forward_fused.1} parent=43 // pred_check_branch
          %3593 = sbr.rel (%p3591) target = $region48
        $region47: #{vit_forward_fused.1} parent=43 // pred_region
          %s3594 = smul.addr %s19, 3
          %s3595 = smul.addr %s3594, 8
          %s3596 = scalar_lea.vmem %s6, %s3595
          // Predicated region
          $region49: #{vit_forward_fused.1} parent=47 // pred_check
            _
          $region50: #{vit_forward_fused.1} parent=47 // pred_check_branch
            %3598 = sbr.rel (0) target = $region52
          $region51: #{vit_forward_fused.1} parent=47 // pred_region
            // Predicated region
            $region53: #{vit_forward_fused.1} parent=51 // pred_check
              _
            $region54: #{vit_forward_fused.1} parent=51 // pred_check_branch
              %3600 = sbr.rel (0) target = $region56
            $region55: #{vit_forward_fused.1} parent=51 // pred_region
              // Predicated region
              $region68: #{vit_forward_fused.1} parent=55 // pred_check
                _
              $region69: #{vit_forward_fused.1} parent=55 // pred_check_branch
                %3637 = sbr.rel (0) target = $region71
              $region70: #{vit_forward_fused.1} parent=55 // pred_region
                loop: start=0, step=1, limit=1
                $region72: #{vit_forward_fused.1} parent=70 // loop_pre_header
                  _
                $region73: #{vit_forward_fused.1} parent=70 // loop_header
                  %s3639 = sphi 0, %s3643
                  %p3640 = scmp.ge.s32.totalorder %s3639, 1
                  %s3644 = sphi %s3586, %s3586
                  %s3645 = sphi %s3596, %s3596
                $region74: #{vit_forward_fused.1} parent=70 // loop_header_branch
                  %3642 = sbr.rel (%p3640) target = $region78
                $region75: #{vit_forward_fused.1} parent=70 // loop_body
                  %v3646 = vld [vmem:[%s3644] sm:$0xff]
                  %3647 = vst [vmem:[%s3645] sm:$0xff] %v3646
                  %v3648 = vld [vmem:[%s3644 + $0x8] sm:$0xff]
                  %3649 = vst [vmem:[%s3645 + $0x8] sm:$0xff] %v3648
                  %v3650 = vld [vmem:[%s3644 + $0x10] sm:$0xff]
                  %3651 = vst [vmem:[%s3645 + $0x10] sm:$0xff] %v3650
                  %v3652 = vld [vmem:[%s3644 + $0x18] sm:$0xff]
                  %3653 = vst [vmem:[%s3645 + $0x30] sm:$0xff] %v3652
                  %v3654 = vld [vmem:[%s3644 + $0x20] sm:$0xff]
                  %3655 = vst [vmem:[%s3645 + $0x38] sm:$0xff] %v3654
                  %v3656 = vld [vmem:[%s3644 + $0x28] sm:$0xff]
                  %3657 = vst [vmem:[%s3645 + $0x40] sm:$0xff] %v3656
                  %v3658 = vld [vmem:[%s3644 + $0x30] sm:$0xff]
                  %3659 = vst [vmem:[%s3645 + $0x60] sm:$0xff] %v3658
                  %v3660 = vld [vmem:[%s3644 + $0x38] sm:$0xff]
                  %3661 = vst [vmem:[%s3645 + $0x68] sm:$0xff] %v3660
                  %v3662 = vld [vmem:[%s3644 + $0x40] sm:$0xff]
                  %3663 = vst [vmem:[%s3645 + $0x70] sm:$0xff] %v3662
                  %v3664 = vld [vmem:[%s3644 + $0x48] sm:$0xff]
                  %3665 = vst [vmem:[%s3645 + $0x90] sm:$0xff] %v3664
                  %v3666 = vld [vmem:[%s3644 + $0x50] sm:$0xff]
                  %3667 = vst [vmem:[%s3645 + $0x98] sm:$0xff] %v3666
                  %v3668 = vld [vmem:[%s3644 + $0x58] sm:$0xff]
                  %3669 = vst [vmem:[%s3645 + $0xa0] sm:$0xff] %v3668
                $region76: #{vit_forward_fused.1} parent=70 // loop_footer
                  %s3643 = sadd.s32 1, %s3639
                $region77: #{vit_forward_fused.1} parent=70 // loop_footer_branch
                  %3638 = sbr.rel target = $region73
                $region78: #{vit_forward_fused.1} parent=70 // loop_exit
                  _
              $region71: #{vit_forward_fused.1} parent=55 // pred_fallthru
                _
              // Predicated region
              $region79: #{vit_forward_fused.1} parent=55 // pred_check
                _
              $region80: #{vit_forward_fused.1} parent=55 // pred_check_branch
                %3671 = sbr.rel target = $region82
              $region81: #{vit_forward_fused.1} parent=55 // pred_region
                _
              $region82: #{vit_forward_fused.1} parent=55 // pred_fallthru
                _
            $region56: #{vit_forward_fused.1} parent=51 // pred_fallthru
              _
            // Predicated region
            $region57: #{vit_forward_fused.1} parent=51 // pred_check
              _
            $region58: #{vit_forward_fused.1} parent=51 // pred_check_branch
              %3602 = sbr.rel target = $region60
            $region59: #{vit_forward_fused.1} parent=51 // pred_region
              loop: start=0, step=1, limit=1
              $region61: #{vit_forward_fused.1} parent=59 // loop_pre_header
                _
              $region62: #{vit_forward_fused.1} parent=59 // loop_header
                %s3605 = sphi 0, %s3609
                %p3606 = scmp.ge.s32.totalorder %s3605, 1
                %s3610 = sphi %s3586, %s3586
                %s3611 = sphi %s3596, %s3596
              $region63: #{vit_forward_fused.1} parent=59 // loop_header_branch
                %3608 = sbr.rel (%p3606) target = $region67
              $region64: #{vit_forward_fused.1} parent=59 // loop_body
                %v3612 = vld [vmem:[%s3610] sm:$0xff]
                %3613 = vst [vmem:[%s3611] sm:$0xff] %v3612
                %v3614 = vld [vmem:[%s3610 + $0x8] sm:$0xff]
                %3615 = vst [vmem:[%s3611 + $0x8] sm:$0xff] %v3614
                %v3616 = vld [vmem:[%s3610 + $0x10] sm:$0xff]
                %3617 = vst [vmem:[%s3611 + $0x10] sm:$0xff] %v3616
                %v3618 = vld [vmem:[%s3610 + $0x18] sm:$0xff]
                %3619 = vst [vmem:[%s3611 + $0x30] sm:$0xff] %v3618
                %v3620 = vld [vmem:[%s3610 + $0x20] sm:$0xff]
                %3621 = vst [vmem:[%s3611 + $0x38] sm:$0xff] %v3620
                %v3622 = vld [vmem:[%s3610 + $0x28] sm:$0xff]
                %3623 = vst [vmem:[%s3611 + $0x40] sm:$0xff] %v3622
                %v3624 = vld [vmem:[%s3610 + $0x30] sm:$0xff]
                %3625 = vst [vmem:[%s3611 + $0x60] sm:$0xff] %v3624
                %v3626 = vld [vmem:[%s3610 + $0x38] sm:$0xff]
                %3627 = vst [vmem:[%s3611 + $0x68] sm:$0xff] %v3626
                %v3628 = vld [vmem:[%s3610 + $0x40] sm:$0xff]
                %3629 = vst [vmem:[%s3611 + $0x70] sm:$0xff] %v3628
                %v3630 = vld [vmem:[%s3610 + $0x48] sm:$0xff]
                %3631 = vst [vmem:[%s3611 + $0x90] sm:$0xff] %v3630
                %v3632 = vld [vmem:[%s3610 + $0x50] sm:$0xff]
                %3633 = vst [vmem:[%s3611 + $0x98] sm:$0xff] %v3632
                %v3634 = vld [vmem:[%s3610 + $0x58] sm:$0xff]
                %3635 = vst [vmem:[%s3611 + $0xa0] sm:$0xff] %v3634
              $region65: #{vit_forward_fused.1} parent=59 // loop_footer
                %s3609 = sadd.s32 1, %s3605
              $region66: #{vit_forward_fused.1} parent=59 // loop_footer_branch
                %3604 = sbr.rel target = $region62
              $region67: #{vit_forward_fused.1} parent=59 // loop_exit
                _
            $region60: #{vit_forward_fused.1} parent=51 // pred_fallthru
              _
          $region52: #{vit_forward_fused.1} parent=47 // pred_fallthru
            _
          %3672 = vnop
        $region48: #{vit_forward_fused.1} parent=43 // pred_fallthru
          _
        // Predicated region
        $region83: #{vit_forward_fused.1} parent=43 // pred_check
          %p3673 = pneg %p194
        $region84: #{vit_forward_fused.1} parent=43 // pred_check_branch
          %3675 = sbr.rel (%p3673) target = $region86
        $region85: #{vit_forward_fused.1} parent=43 // pred_region
          _
        $region86: #{vit_forward_fused.1} parent=43 // pred_fallthru
          _
      $region44: #{vit_forward_fused.1} parent=5 // pred_fallthru
        _
      %p3676 = scmp.le.s32.totalorder 2, %s14
      // Predicated region
      $region87: #{vit_forward_fused.1} parent=5 // pred_check
        %p3677 = pneg %p3676
      $region88: #{vit_forward_fused.1} parent=5 // pred_check_branch
        %3679 = sbr.rel (%p3677) target = $region90
      $region89: #{vit_forward_fused.1} parent=5 // pred_region
        %s3680 = ssub.s32 %s14, 2
        // Predicated region
        $region91: #{vit_forward_fused.1} parent=89 // pred_check
          %p3681 = pneg %p174
        $region92: #{vit_forward_fused.1} parent=89 // pred_check_branch
          %3683 = sbr.rel (%p3681) target = $region94
        $region93: #{vit_forward_fused.1} parent=89 // pred_region
          %s3684 = sand.u32 %s159, 1
          %s3685 = sand.u32 %s159, 1
          %s3686 = smul.addr %s3685, 96
          %s3687 = scalar_lea.vmem [#allocation2], %s3686
        $region94: #{vit_forward_fused.1} parent=89 // pred_fallthru
          _
        // Predicated region
        $region95: #{vit_forward_fused.1} parent=89 // pred_check
          %p3688 = pneg %p200
        $region96: #{vit_forward_fused.1} parent=89 // pred_check_branch
          %3690 = sbr.rel (%p3688) target = $region98
        $region97: #{vit_forward_fused.1} parent=89 // pred_region
          %p3691 = scmp.lt.s32.totalorder %s20, 1
          %s3692 = scalar_select %p3691, %s20, 1
          %s3693 = smul.addr %s3692, 8
          %s3694 = scalar_lea.vmem %s7, %s3693
        $region98: #{vit_forward_fused.1} parent=89 // pred_fallthru
          _
      $region90: #{vit_forward_fused.1} parent=5 // pred_fallthru
        _
    $region6: #{vit_forward_fused.1} parent=1 // loop_footer
      %s18 = sadd.s32 1, %s14
    $region7: #{vit_forward_fused.1} parent=1 // loop_footer_branch
      %13 = sbr.rel target = $region3
    $region8: #{vit_forward_fused.1} parent=1 // loop_exit
      _

</llo_original>
